<compile_context>
chip_gen: v7x
topology: tpu7x:2x2x1
jax: 0.10.0
libtpu: 0.0.40
codegen_flags: <defaults>
</compile_context>

<pallas_src>
import functools
import math

import numpy as np
import jax
import jax.numpy as jnp
from jax import lax
from jax.experimental import pallas as pl
from jax.experimental.pallas import tpu as pltpu

BN_EPS = 1e-5
LANE = 128

_VMEM = pl.BlockSpec(memory_space=pltpu.MemorySpace.VMEM)


def _round_up(n, m):
    return ((n + m - 1) // m) * m


# ------------------------------ fused kernel -------------------------------- #

def _bn_elu(y, g, be):
    """Training-mode BatchNorm (biased batch variance) + ELU(alpha=1), f32."""
    mean = jnp.mean(y, axis=0, keepdims=True)
    var = jnp.mean(jnp.square(y - mean), axis=0, keepdims=True)
    z = g * ((y - mean) * lax.rsqrt(var + BN_EPS)) + be
    return jnp.where(z > 0, z, jnp.exp(jnp.minimum(z, 0.0)) - 1.0)


def _fused_disc_kernel(x_ref, w1_ref, b1_ref, g1_ref, be1_ref,
                       w2_ref, b2_ref, g2_ref, be2_ref,
                       sel_ref, w3t_ref, b3_ref,
                       o_ref,
                       xp1_ref, col1_ref, xp2_ref, col2_ref,
                       *, N, H, W, C, K1, P1, C1, K2, P2, OH1, OW1):
    M1 = N * OH1 * OW1

    # ---------- Layer 1: conv 5x5 (pad 2, stride 1) + bias + BN + ELU ---------
    # im2col built in-kernel: pad the NHWC input into VMEM scratch, then copy
    # K1*K1 static tap slices into the (kh,kw,cin)-ordered column buffer.
    xp1_ref[...] = jnp.zeros_like(xp1_ref)
    xp1_ref[:, P1:P1 + H, P1:P1 + W, :] = x_ref[...]
    col1_ref[...] = jnp.zeros_like(col1_ref)
    for kh in range(K1):
        for kw in range(K1):
            t = kh * K1 + kw
            col1_ref[:, :, :, t * C:(t + 1) * C] = \
                xp1_ref[:, kh:kh + OH1, kw:kw + OW1, :]
    col1 = col1_ref[...].reshape(M1, col1_ref.shape[-1]).astype(jnp.bfloat16)
    y1 = jnp.dot(col1, w1_ref[...],
                 preferred_element_type=jnp.float32) + b1_ref[...]
    a1 = _bn_elu(y1, g1_ref[...], be1_ref[...])              # (M1, 128) f32

    # ---------- Layer 2: conv 3x3 (pad 1, stride 2) + bias + BN + ELU ---------
    # Build the stride-1 window grid from the VMEM-resident layer-1 activation,
    # then apply the precomputed 0/1 selection GEMM to realize stride 2 (keeps
    # everything unit-stride and exact in bf16).
    xp2_ref[...] = jnp.zeros_like(xp2_ref)
    a1_real = a1[:, :C1]                                      # (M1, C1)
    for n in range(N):
        for oh in range(OH1):
            r0 = (n * OH1 + oh) * OW1
            xp2_ref[n, P2 + oh, P2:P2 + OW1, :] = a1_real[r0:r0 + OW1, :]
    col2_ref[...] = jnp.zeros_like(col2_ref)
    for kh in range(K2):
        for kw in range(K2):
            t = kh * K2 + kw
            col2_ref[:, :, :, t * C1:(t + 1) * C1] = \
                xp2_ref[:, kh:kh + OH1, kw:kw + OW1, :]
    col2 = col2_ref[...].reshape(M1, col2_ref.shape[-1]).astype(jnp.bfloat16)
    col2_sel = jnp.dot(sel_ref[...], col2,
                       preferred_element_type=jnp.float32)    # (M2, 128)
    y2 = jnp.dot(col2_sel.astype(jnp.bfloat16), w2_ref[...],
                 preferred_element_type=jnp.float32) + b2_ref[...]
    a2 = _bn_elu(y2, g2_ref[...], be2_ref[...])               # (M2, 128) f32

    # --- Layer 3: conv 4x4 (valid -> 1x1 map) + bias + sigmoid + batch mean ---
    # out[n] = sum over (spatial, channel) of a2 * w3 (w3 zero-padded on lanes),
    # done as an f32 elementwise multiply + reductions (no MXU needed).
    prod = a2 * w3t_ref[...]                                  # (M2, 128) f32
    per_row = jnp.sum(prod, axis=1, keepdims=True)            # (M2, 1)
    rows_per_img = per_row.shape[0] // N
    acc = jnp.zeros((1, 1), jnp.float32)
    for n in range(N):
        yn = jnp.sum(per_row[n * rows_per_img:(n + 1) * rows_per_img, :],
                     axis=0, keepdims=True) + b3_ref[...]
        acc = acc + 1.0 / (1.0 + jnp.exp(-yn))                # sigmoid
    o_ref[...] = acc * (1.0 / N)                              # mean over batch


# --------------------- host-side packing (outside jit) ---------------------- #

def pack_params(params, N, H, W):
    """Pack / pad / bf16-cast weights once, host-side (hoisted from forward)."""
    w1 = np.asarray(params["w1"], np.float32)   # (C1, C, 5, 5)
    w2 = np.asarray(params["w2"], np.float32)   # (C2, C1, 3, 3)
    w3 = np.asarray(params["w3"], np.float32)   # (1, C2, 4, 4)
    C1, C, K1, _ = w1.shape
    C2, _, K2, _ = w2.shape
    _, _, K3, _ = w3.shape
    P1, P2, S2 = K1 // 2, K2 // 2, 2
    OH1 = H + 2 * P1 - K1 + 1
    OW1 = W + 2 * P1 - K1 + 1
    OH2 = (OH1 + 2 * P2 - K2) // S2 + 1
    OW2 = (OW1 + 2 * P2 - K2) // S2 + 1
    if OH2 != K3 or OW2 != K3:
        raise ValueError("final conv must produce a 1x1 map (PyTorch .view(1))")

    ckk1p = _round_up(K1 * K1 * C, LANE)
    ckk2p = _round_up(K2 * K2 * C1, LANE)

    def pack_w(w, ckk_p):                       # (kh, kw, cin) contraction order
        cout, cin, K, _ = w.shape
        m = np.transpose(w, (2, 3, 1, 0)).reshape(K * K * cin, cout)
        out = np.zeros((ckk_p, LANE), np.float32)
        out[:K * K * cin, :cout] = m
        return jnp.asarray(out, jnp.bfloat16)

    def pack_vec(v, fill=0.0):
        out = np.full((1, LANE), fill, np.float32)
        v = np.asarray(v, np.float32)
        out[0, :v.shape[0]] = v
        return jnp.asarray(out)

    # 0/1 matrix selecting the stride-2 output rows from the stride-1 grid.
    M1 = N * OH1 * OW1
    M2 = N * OH2 * OW2
    sel = np.zeros((M2, M1), np.float32)
    i = 0
    for n in range(N):
        for oh2 in range(OH2):
            for ow2 in range(OW2):
                sel[i, n * OH1 * OW1 + (S2 * oh2) * OW1 + (S2 * ow2)] = 1.0
                i += 1

    # Layer-3 weights laid out to match (n, oh2, ow2) rows x channel lanes.
    w3r = np.transpose(w3[0], (1, 2, 0)).reshape(K3 * K3, C2)
    w3t = np.zeros((K3 * K3, LANE), np.float32)
    w3t[:, :C2] = w3r
    w3t = np.tile(w3t, (N, 1))                  # (M2, 128)

    packed = dict(
        w1=pack_w(w1, ckk1p), b1=pack_vec(params["b1"]),
        g1=pack_vec(params["g1"], 1.0), be1=pack_vec(params["be1"]),
        w2=pack_w(w2, ckk2p), b2=pack_vec(params["b2"]),
        g2=pack_vec(params["g2"], 1.0), be2=pack_vec(params["be2"]),
        sel=jnp.asarray(sel, jnp.bfloat16),
        w3t=jnp.asarray(w3t),
        b3=jnp.asarray(np.asarray(params["b3"], np.float32).reshape(1, 1)),
    )
    dims = dict(N=N, H=H, W=W, C=C, K1=K1, P1=P1, C1=C1, K2=K2, P2=P2,
                OH1=OH1, OW1=OW1, CKK1P=ckk1p, CKK2P=ckk2p)
    return packed, dims


def build_forward(dims):
    N, H, W, C = dims["N"], dims["H"], dims["W"], dims["C"]
    K1, P1, C1 = dims["K1"], dims["P1"], dims["C1"]
    K2, P2 = dims["K2"], dims["P2"]
    OH1, OW1 = dims["OH1"], dims["OW1"]

    kernel = functools.partial(
        _fused_disc_kernel, N=N, H=H, W=W, C=C,
        K1=K1, P1=P1, C1=C1, K2=K2, P2=P2, OH1=OH1, OW1=OW1)

    call = pl.pallas_call(
        kernel,
        out_shape=jax.ShapeDtypeStruct((1, 1), jnp.float32),
        in_specs=[_VMEM] * 12,
        out_specs=_VMEM,
        scratch_shapes=[
            pltpu.VMEM((N, H + 2 * P1, W + 2 * P1, C), jnp.float32),     # xp1
            pltpu.VMEM((N, OH1, OW1, dims["CKK1P"]), jnp.float32),       # col1
            pltpu.VMEM((N, OH1 + 2 * P2, OW1 + 2 * P2, C1), jnp.float32),  # xp2
            pltpu.VMEM((N, OH1, OW1, dims["CKK2P"]), jnp.float32),       # col2
        ],
    )

    def forward(x_nchw, packed):
        x = jnp.transpose(x_nchw, (0, 2, 3, 1)).astype(jnp.float32)  # NCHW->NHWC
        out = call(x,
                   packed["w1"], packed["b1"], packed["g1"], packed["be1"],
                   packed["w2"], packed["b2"], packed["g2"], packed["be2"],
                   packed["sel"], packed["w3t"], packed["b3"])
        return out.reshape(1)

    return jax.jit(forward)


# --------------------------- deterministic params --------------------------- #

def init_params(key, channels, base=8):
    ks = jax.random.split(key, 10)

    def cw(k, cout, cin, ksz):                  # Conv2d weight (Cout,Cin,K,K)
        return jax.random.normal(k, (cout, cin, ksz, ksz),
                                 jnp.float32) / math.sqrt(cin * ksz * ksz)

    def vec(k, n, scale=0.1):
        return scale * jax.random.normal(k, (n,), jnp.float32)

    return {
        "w1": cw(ks[0], base, channels, 5), "b1": vec(ks[1], base),
        "g1": 1.0 + vec(ks[2], base), "be1": vec(ks[3], base),
        "w2": cw(ks[4], 2 * base, base, 3), "b2": vec(ks[5], 2 * base),
        "g2": 1.0 + vec(ks[6], 2 * base), "be2": vec(ks[7], 2 * base),
        "w3": cw(ks[8], 1, 2 * base, 4), "b3": vec(ks[9], 1),
    }


# ----------------------------- pure-JAX reference --------------------------- #

def _ref_forward(x_nchw, p):
    x = jnp.transpose(x_nchw, (0, 2, 3, 1)).astype(jnp.float32)

    def conv(x, w_oihw, b, stride, pad):
        w = jnp.transpose(w_oihw, (2, 3, 1, 0))
        y = lax.conv_general_dilated(
            x, w, (stride, stride), [(pad, pad), (pad, pad)],
            dimension_numbers=("NHWC", "HWIO", "NHWC"),
            precision=lax.Precision.HIGHEST)
        return y + b

    def bn_elu(y, g, be):
        m = jnp.mean(y, axis=(0, 1, 2), keepdims=True)
        v = jnp.mean(jnp.square(y - m), axis=(0, 1, 2), keepdims=True)
        z = g * (y - m) * lax.rsqrt(v + BN_EPS) + be
        return jnp.where(z > 0, z, jnp.exp(jnp.minimum(z, 0.0)) - 1.0)

    x = bn_elu(conv(x, p["w1"], p["b1"], 1, 2), p["g1"], p["be1"])
    x = bn_elu(conv(x, p["w2"], p["b2"], 2, 1), p["g2"], p["be2"])
    y = conv(x, p["w3"], p["b3"], 1, 0)         # (N, 1, 1, 1) in NHWC
    s = 1.0 / (1.0 + jnp.exp(-y))
    return jnp.mean(s, axis=0).reshape(1)       # mean over batch -> view(1)


# ----------------------------------- main ------------------------------------ #

if __name__ == "__main__":
    key = jax.random.PRNGKey(0)
    kx, kp = jax.random.split(key)

    # 8x8 input: conv(5,p2,s1)->8x8, conv(3,p1,s2)->4x4, conv(4,valid)->1x1,
    # which is what the PyTorch forward's `.view(1)` requires.
    N, channels, H, W = 2, 4, 8, 8
    x = jax.random.normal(kx, (N, channels, H, W), jnp.float32)
    params = init_params(kp, channels)

    packed, dims = pack_params(params, N, H, W)      # hoisted out of forward
    forward = build_forward(dims)

    out = forward(x, packed)
    out = jax.block_until_ready(out)
    assert out.shape == (1,), out.shape

    ref = _ref_forward(x, params)
    max_err = float(np.max(np.abs(np.asarray(out) - np.asarray(ref))))
    assert max_err < 5e-3, f"mismatch vs reference: {max_err}"

    print("KERNEL_OK")
</pallas_src>

<mosaic_0001>
module attributes {stable_mosaic.version = 11 : i64} {
  func.func @_fused_disc_kernel(%arg0: memref<2x8x8x4xf32, #tpu.memory_space<vmem>>, %arg1: memref<128x128xbf16, #tpu.memory_space<vmem>>, %arg2: memref<1x128xf32, #tpu.memory_space<vmem>>, %arg3: memref<1x128xf32, #tpu.memory_space<vmem>>, %arg4: memref<1x128xf32, #tpu.memory_space<vmem>>, %arg5: memref<128x128xbf16, #tpu.memory_space<vmem>>, %arg6: memref<1x128xf32, #tpu.memory_space<vmem>>, %arg7: memref<1x128xf32, #tpu.memory_space<vmem>>, %arg8: memref<1x128xf32, #tpu.memory_space<vmem>>, %arg9: memref<32x128xbf16, #tpu.memory_space<vmem>>, %arg10: memref<32x128xf32, #tpu.memory_space<vmem>>, %arg11: memref<1x1xf32, #tpu.memory_space<vmem>>, %arg12: memref<1x1xf32, #tpu.memory_space<vmem>>, %arg13: memref<2x12x12x4xf32, #tpu.memory_space<vmem>>, %arg14: memref<2x8x8x128xf32, #tpu.memory_space<vmem>>, %arg15: memref<2x10x10x8xf32, #tpu.memory_space<vmem>>, %arg16: memref<2x8x8x128xf32, #tpu.memory_space<vmem>>) attributes {dimension_semantics = [], scalar_prefetch = 0 : i64, scratch_operands = 4 : i64, tpu.core_type = #tpu.core_type<tc>} {
    %cst = arith.constant 0.000000e+00 : f32
    %0 = vector.broadcast %cst : f32 to vector<2x12x12x4xf32>
    %c0 = arith.constant 0 : index
    %c0_0 = arith.constant 0 : index
    %c0_1 = arith.constant 0 : index
    %c0_2 = arith.constant 0 : index
    %1 = vector.load %arg13[%c0, %c0_0, %c0_1, %c0_2] : memref<2x12x12x4xf32, #tpu.memory_space<vmem>>, vector<2x12x12x4xf32>
    tpu.vector_store %arg13[%c0, %c0_0, %c0_1, %c0_2], %0 {strides = array<i32>} : memref<2x12x12x4xf32, #tpu.memory_space<vmem>>, vector<2x12x12x4xf32>,
    %c0_3 = arith.constant 0 : index
    %c0_4 = arith.constant 0 : index
    %c0_5 = arith.constant 0 : index
    %c0_6 = arith.constant 0 : index
    %2 = vector.load %arg0[%c0_3, %c0_4, %c0_5, %c0_6] : memref<2x8x8x4xf32, #tpu.memory_space<vmem>>, vector<2x8x8x4xf32>
    %c0_7 = arith.constant 0 : index
    %c2 = arith.constant 2 : index
    %c2_8 = arith.constant 2 : index
    %c0_9 = arith.constant 0 : index
    %3 = vector.load %arg13[%c0_7, %c2, %c2_8, %c0_9] : memref<2x12x12x4xf32, #tpu.memory_space<vmem>>, vector<2x8x8x4xf32>
    tpu.vector_store %arg13[%c0_7, %c2, %c2_8, %c0_9], %2 {strides = array<i32>} : memref<2x12x12x4xf32, #tpu.memory_space<vmem>>, vector<2x8x8x4xf32>,
    %cst_10 = arith.constant 0.000000e+00 : f32
    %4 = vector.broadcast %cst_10 : f32 to vector<2x8x8x128xf32>
    %c0_11 = arith.constant 0 : index
    %c0_12 = arith.constant 0 : index
    %c0_13 = arith.constant 0 : index
    %c0_14 = arith.constant 0 : index
    %5 = vector.load %arg14[%c0_11, %c0_12, %c0_13, %c0_14] : memref<2x8x8x128xf32, #tpu.memory_space<vmem>>, vector<2x8x8x128xf32>
    tpu.vector_store %arg14[%c0_11, %c0_12, %c0_13, %c0_14], %4 {strides = array<i32>} : memref<2x8x8x128xf32, #tpu.memory_space<vmem>>, vector<2x8x8x128xf32>,
    %c0_15 = arith.constant 0 : index
    %c0_16 = arith.constant 0 : index
    %c0_17 = arith.constant 0 : index
    %c0_18 = arith.constant 0 : index
    %6 = vector.load %arg13[%c0_15, %c0_16, %c0_17, %c0_18] : memref<2x12x12x4xf32, #tpu.memory_space<vmem>>, vector<2x8x8x4xf32>
    %c0_19 = arith.constant 0 : index
    %c0_20 = arith.constant 0 : index
    %c0_21 = arith.constant 0 : index
    %c0_22 = arith.constant 0 : index
    %7 = vector.load %arg14[%c0_19, %c0_20, %c0_21, %c0_22] : memref<2x8x8x128xf32, #tpu.memory_space<vmem>>, vector<2x8x8x4xf32>
    tpu.vector_store %arg14[%c0_19, %c0_20, %c0_21, %c0_22], %6 {strides = array<i32>} : memref<2x8x8x128xf32, #tpu.memory_space<vmem>>, vector<2x8x8x4xf32>,
    %c0_23 = arith.constant 0 : index
    %c0_24 = arith.constant 0 : index
    %c1 = arith.constant 1 : index
    %c0_25 = arith.constant 0 : index
    %8 = vector.load %arg13[%c0_23, %c0_24, %c1, %c0_25] : memref<2x12x12x4xf32, #tpu.memory_space<vmem>>, vector<2x8x8x4xf32>
    %c0_26 = arith.constant 0 : index
    %c0_27 = arith.constant 0 : index
    %c0_28 = arith.constant 0 : index
    %c4 = arith.constant 4 : index
    %9 = vector.load %arg14[%c0_26, %c0_27, %c0_28, %c4] : memref<2x8x8x128xf32, #tpu.memory_space<vmem>>, vector<2x8x8x4xf32>
    tpu.vector_store %arg14[%c0_26, %c0_27, %c0_28, %c4], %8 {strides = array<i32>} : memref<2x8x8x128xf32, #tpu.memory_space<vmem>>, vector<2x8x8x4xf32>,
    %c0_29 = arith.constant 0 : index
    %c0_30 = arith.constant 0 : index
    %c2_31 = arith.constant 2 : index
    %c0_32 = arith.constant 0 : index
    %10 = vector.load %arg13[%c0_29, %c0_30, %c2_31, %c0_32] : memref<2x12x12x4xf32, #tpu.memory_space<vmem>>, vector<2x8x8x4xf32>
    %c0_33 = arith.constant 0 : index
    %c0_34 = arith.constant 0 : index
    %c0_35 = arith.constant 0 : index
    %c8 = arith.constant 8 : index
    %11 = vector.load %arg14[%c0_33, %c0_34, %c0_35, %c8] : memref<2x8x8x128xf32, #tpu.memory_space<vmem>>, vector<2x8x8x4xf32>
    tpu.vector_store %arg14[%c0_33, %c0_34, %c0_35, %c8], %10 {strides = array<i32>} : memref<2x8x8x128xf32, #tpu.memory_space<vmem>>, vector<2x8x8x4xf32>,
    %c0_36 = arith.constant 0 : index
    %c0_37 = arith.constant 0 : index
    %c3 = arith.constant 3 : index
    %c0_38 = arith.constant 0 : index
    %12 = vector.load %arg13[%c0_36, %c0_37, %c3, %c0_38] : memref<2x12x12x4xf32, #tpu.memory_space<vmem>>, vector<2x8x8x4xf32>
    %c0_39 = arith.constant 0 : index
    %c0_40 = arith.constant 0 : index
    %c0_41 = arith.constant 0 : index
    %c12 = arith.constant 12 : index
    %13 = vector.load %arg14[%c0_39, %c0_40, %c0_41, %c12] : memref<2x8x8x128xf32, #tpu.memory_space<vmem>>, vector<2x8x8x4xf32>
    tpu.vector_store %arg14[%c0_39, %c0_40, %c0_41, %c12], %12 {strides = array<i32>} : memref<2x8x8x128xf32, #tpu.memory_space<vmem>>, vector<2x8x8x4xf32>,
    %c0_42 = arith.constant 0 : index
    %c0_43 = arith.constant 0 : index
    %c4_44 = arith.constant 4 : index
    %c0_45 = arith.constant 0 : index
    %14 = vector.load %arg13[%c0_42, %c0_43, %c4_44, %c0_45] : memref<2x12x12x4xf32, #tpu.memory_space<vmem>>, vector<2x8x8x4xf32>
    %c0_46 = arith.constant 0 : index
    %c0_47 = arith.constant 0 : index
    %c0_48 = arith.constant 0 : index
    %c16 = arith.constant 16 : index
    %15 = vector.load %arg14[%c0_46, %c0_47, %c0_48, %c16] : memref<2x8x8x128xf32, #tpu.memory_space<vmem>>, vector<2x8x8x4xf32>
    tpu.vector_store %arg14[%c0_46, %c0_47, %c0_48, %c16], %14 {strides = array<i32>} : memref<2x8x8x128xf32, #tpu.memory_space<vmem>>, vector<2x8x8x4xf32>,
    %c0_49 = arith.constant 0 : index
    %c1_50 = arith.constant 1 : index
    %c0_51 = arith.constant 0 : index
    %c0_52 = arith.constant 0 : index
    %16 = vector.load %arg13[%c0_49, %c1_50, %c0_51, %c0_52] : memref<2x12x12x4xf32, #tpu.memory_space<vmem>>, vector<2x8x8x4xf32>
    %c0_53 = arith.constant 0 : index
    %c0_54 = arith.constant 0 : index
    %c0_55 = arith.constant 0 : index
    %c20 = arith.constant 20 : index
    %17 = vector.load %arg14[%c0_53, %c0_54, %c0_55, %c20] : memref<2x8x8x128xf32, #tpu.memory_space<vmem>>, vector<2x8x8x4xf32>
    tpu.vector_store %arg14[%c0_53, %c0_54, %c0_55, %c20], %16 {strides = array<i32>} : memref<2x8x8x128xf32, #tpu.memory_space<vmem>>, vector<2x8x8x4xf32>,
    %c0_56 = arith.constant 0 : index
    %c1_57 = arith.constant 1 : index
    %c1_58 = arith.constant 1 : index
    %c0_59 = arith.constant 0 : index
    %18 = vector.load %arg13[%c0_56, %c1_57, %c1_58, %c0_59] : memref<2x12x12x4xf32, #tpu.memory_space<vmem>>, vector<2x8x8x4xf32>
    %c0_60 = arith.constant 0 : index
    %c0_61 = arith.constant 0 : index
    %c0_62 = arith.constant 0 : index
    %c24 = arith.constant 24 : index
    %19 = vector.load %arg14[%c0_60, %c0_61, %c0_62, %c24] : memref<2x8x8x128xf32, #tpu.memory_space<vmem>>, vector<2x8x8x4xf32>
    tpu.vector_store %arg14[%c0_60, %c0_61, %c0_62, %c24], %18 {strides = array<i32>} : memref<2x8x8x128xf32, #tpu.memory_space<vmem>>, vector<2x8x8x4xf32>,
    %c0_63 = arith.constant 0 : index
    %c1_64 = arith.constant 1 : index
    %c2_65 = arith.constant 2 : index
    %c0_66 = arith.constant 0 : index
    %20 = vector.load %arg13[%c0_63, %c1_64, %c2_65, %c0_66] : memref<2x12x12x4xf32, #tpu.memory_space<vmem>>, vector<2x8x8x4xf32>
    %c0_67 = arith.constant 0 : index
    %c0_68 = arith.constant 0 : index
    %c0_69 = arith.constant 0 : index
    %c28 = arith.constant 28 : index
    %21 = vector.load %arg14[%c0_67, %c0_68, %c0_69, %c28] : memref<2x8x8x128xf32, #tpu.memory_space<vmem>>, vector<2x8x8x4xf32>
    tpu.vector_store %arg14[%c0_67, %c0_68, %c0_69, %c28], %20 {strides = array<i32>} : memref<2x8x8x128xf32, #tpu.memory_space<vmem>>, vector<2x8x8x4xf32>,
    %c0_70 = arith.constant 0 : index
    %c1_71 = arith.constant 1 : index
    %c3_72 = arith.constant 3 : index
    %c0_73 = arith.constant 0 : index
    %22 = vector.load %arg13[%c0_70, %c1_71, %c3_72, %c0_73] : memref<2x12x12x4xf32, #tpu.memory_space<vmem>>, vector<2x8x8x4xf32>
    %c0_74 = arith.constant 0 : index
    %c0_75 = arith.constant 0 : index
    %c0_76 = arith.constant 0 : index
    %c32 = arith.constant 32 : index
    %23 = vector.load %arg14[%c0_74, %c0_75, %c0_76, %c32] : memref<2x8x8x128xf32, #tpu.memory_space<vmem>>, vector<2x8x8x4xf32>
    tpu.vector_store %arg14[%c0_74, %c0_75, %c0_76, %c32], %22 {strides = array<i32>} : memref<2x8x8x128xf32, #tpu.memory_space<vmem>>, vector<2x8x8x4xf32>,
    %c0_77 = arith.constant 0 : index
    %c1_78 = arith.constant 1 : index
    %c4_79 = arith.constant 4 : index
    %c0_80 = arith.constant 0 : index
    %24 = vector.load %arg13[%c0_77, %c1_78, %c4_79, %c0_80] : memref<2x12x12x4xf32, #tpu.memory_space<vmem>>, vector<2x8x8x4xf32>
    %c0_81 = arith.constant 0 : index
    %c0_82 = arith.constant 0 : index
    %c0_83 = arith.constant 0 : index
    %c36 = arith.constant 36 : index
    %25 = vector.load %arg14[%c0_81, %c0_82, %c0_83, %c36] : memref<2x8x8x128xf32, #tpu.memory_space<vmem>>, vector<2x8x8x4xf32>
    tpu.vector_store %arg14[%c0_81, %c0_82, %c0_83, %c36], %24 {strides = array<i32>} : memref<2x8x8x128xf32, #tpu.memory_space<vmem>>, vector<2x8x8x4xf32>,
    %c0_84 = arith.constant 0 : index
    %c2_85 = arith.constant 2 : index
    %c0_86 = arith.constant 0 : index
    %c0_87 = arith.constant 0 : index
    %26 = vector.load %arg13[%c0_84, %c2_85, %c0_86, %c0_87] : memref<2x12x12x4xf32, #tpu.memory_space<vmem>>, vector<2x8x8x4xf32>
    %c0_88 = arith.constant 0 : index
    %c0_89 = arith.constant 0 : index
    %c0_90 = arith.constant 0 : index
    %c40 = arith.constant 40 : index
    %27 = vector.load %arg14[%c0_88, %c0_89, %c0_90, %c40] : memref<2x8x8x128xf32, #tpu.memory_space<vmem>>, vector<2x8x8x4xf32>
    tpu.vector_store %arg14[%c0_88, %c0_89, %c0_90, %c40], %26 {strides = array<i32>} : memref<2x8x8x128xf32, #tpu.memory_space<vmem>>, vector<2x8x8x4xf32>,
    %c0_91 = arith.constant 0 : index
    %c2_92 = arith.constant 2 : index
    %c1_93 = arith.constant 1 : index
    %c0_94 = arith.constant 0 : index
    %28 = vector.load %arg13[%c0_91, %c2_92, %c1_93, %c0_94] : memref<2x12x12x4xf32, #tpu.memory_space<vmem>>, vector<2x8x8x4xf32>
    %c0_95 = arith.constant 0 : index
    %c0_96 = arith.constant 0 : index
    %c0_97 = arith.constant 0 : index
    %c44 = arith.constant 44 : index
    %29 = vector.load %arg14[%c0_95, %c0_96, %c0_97, %c44] : memref<2x8x8x128xf32, #tpu.memory_space<vmem>>, vector<2x8x8x4xf32>
    tpu.vector_store %arg14[%c0_95, %c0_96, %c0_97, %c44], %28 {strides = array<i32>} : memref<2x8x8x128xf32, #tpu.memory_space<vmem>>, vector<2x8x8x4xf32>,
    %c0_98 = arith.constant 0 : index
    %c2_99 = arith.constant 2 : index
    %c2_100 = arith.constant 2 : index
    %c0_101 = arith.constant 0 : index
    %30 = vector.load %arg13[%c0_98, %c2_99, %c2_100, %c0_101] : memref<2x12x12x4xf32, #tpu.memory_space<vmem>>, vector<2x8x8x4xf32>
    %c0_102 = arith.constant 0 : index
    %c0_103 = arith.constant 0 : index
    %c0_104 = arith.constant 0 : index
    %c48 = arith.constant 48 : index
    %31 = vector.load %arg14[%c0_102, %c0_103, %c0_104, %c48] : memref<2x8x8x128xf32, #tpu.memory_space<vmem>>, vector<2x8x8x4xf32>
    tpu.vector_store %arg14[%c0_102, %c0_103, %c0_104, %c48], %30 {strides = array<i32>} : memref<2x8x8x128xf32, #tpu.memory_space<vmem>>, vector<2x8x8x4xf32>,
    %c0_105 = arith.constant 0 : index
    %c2_106 = arith.constant 2 : index
    %c3_107 = arith.constant 3 : index
    %c0_108 = arith.constant 0 : index
    %32 = vector.load %arg13[%c0_105, %c2_106, %c3_107, %c0_108] : memref<2x12x12x4xf32, #tpu.memory_space<vmem>>, vector<2x8x8x4xf32>
    %c0_109 = arith.constant 0 : index
    %c0_110 = arith.constant 0 : index
    %c0_111 = arith.constant 0 : index
    %c52 = arith.constant 52 : index
    %33 = vector.load %arg14[%c0_109, %c0_110, %c0_111, %c52] : memref<2x8x8x128xf32, #tpu.memory_space<vmem>>, vector<2x8x8x4xf32>
    tpu.vector_store %arg14[%c0_109, %c0_110, %c0_111, %c52], %32 {strides = array<i32>} : memref<2x8x8x128xf32, #tpu.memory_space<vmem>>, vector<2x8x8x4xf32>,
    %c0_112 = arith.constant 0 : index
    %c2_113 = arith.constant 2 : index
    %c4_114 = arith.constant 4 : index
    %c0_115 = arith.constant 0 : index
    %34 = vector.load %arg13[%c0_112, %c2_113, %c4_114, %c0_115] : memref<2x12x12x4xf32, #tpu.memory_space<vmem>>, vector<2x8x8x4xf32>
    %c0_116 = arith.constant 0 : index
    %c0_117 = arith.constant 0 : index
    %c0_118 = arith.constant 0 : index
    %c56 = arith.constant 56 : index
    %35 = vector.load %arg14[%c0_116, %c0_117, %c0_118, %c56] : memref<2x8x8x128xf32, #tpu.memory_space<vmem>>, vector<2x8x8x4xf32>
    tpu.vector_store %arg14[%c0_116, %c0_117, %c0_118, %c56], %34 {strides = array<i32>} : memref<2x8x8x128xf32, #tpu.memory_space<vmem>>, vector<2x8x8x4xf32>,
    %c0_119 = arith.constant 0 : index
    %c3_120 = arith.constant 3 : index
    %c0_121 = arith.constant 0 : index
    %c0_122 = arith.constant 0 : index
    %36 = vector.load %arg13[%c0_119, %c3_120, %c0_121, %c0_122] : memref<2x12x12x4xf32, #tpu.memory_space<vmem>>, vector<2x8x8x4xf32>
    %c0_123 = arith.constant 0 : index
    %c0_124 = arith.constant 0 : index
    %c0_125 = arith.constant 0 : index
    %c60 = arith.constant 60 : index
    %37 = vector.load %arg14[%c0_123, %c0_124, %c0_125, %c60] : memref<2x8x8x128xf32, #tpu.memory_space<vmem>>, vector<2x8x8x4xf32>
    tpu.vector_store %arg14[%c0_123, %c0_124, %c0_125, %c60], %36 {strides = array<i32>} : memref<2x8x8x128xf32, #tpu.memory_space<vmem>>, vector<2x8x8x4xf32>,
    %c0_126 = arith.constant 0 : index
    %c3_127 = arith.constant 3 : index
    %c1_128 = arith.constant 1 : index
    %c0_129 = arith.constant 0 : index
    %38 = vector.load %arg13[%c0_126, %c3_127, %c1_128, %c0_129] : memref<2x12x12x4xf32, #tpu.memory_space<vmem>>, vector<2x8x8x4xf32>
    %c0_130 = arith.constant 0 : index
    %c0_131 = arith.constant 0 : index
    %c0_132 = arith.constant 0 : index
    %c64 = arith.constant 64 : index
    %39 = vector.load %arg14[%c0_130, %c0_131, %c0_132, %c64] : memref<2x8x8x128xf32, #tpu.memory_space<vmem>>, vector<2x8x8x4xf32>
    tpu.vector_store %arg14[%c0_130, %c0_131, %c0_132, %c64], %38 {strides = array<i32>} : memref<2x8x8x128xf32, #tpu.memory_space<vmem>>, vector<2x8x8x4xf32>,
    %c0_133 = arith.constant 0 : index
    %c3_134 = arith.constant 3 : index
    %c2_135 = arith.constant 2 : index
    %c0_136 = arith.constant 0 : index
    %40 = vector.load %arg13[%c0_133, %c3_134, %c2_135, %c0_136] : memref<2x12x12x4xf32, #tpu.memory_space<vmem>>, vector<2x8x8x4xf32>
    %c0_137 = arith.constant 0 : index
    %c0_138 = arith.constant 0 : index
    %c0_139 = arith.constant 0 : index
    %c68 = arith.constant 68 : index
    %41 = vector.load %arg14[%c0_137, %c0_138, %c0_139, %c68] : memref<2x8x8x128xf32, #tpu.memory_space<vmem>>, vector<2x8x8x4xf32>
    tpu.vector_store %arg14[%c0_137, %c0_138, %c0_139, %c68], %40 {strides = array<i32>} : memref<2x8x8x128xf32, #tpu.memory_space<vmem>>, vector<2x8x8x4xf32>,
    %c0_140 = arith.constant 0 : index
    %c3_141 = arith.constant 3 : index
    %c3_142 = arith.constant 3 : index
    %c0_143 = arith.constant 0 : index
    %42 = vector.load %arg13[%c0_140, %c3_141, %c3_142, %c0_143] : memref<2x12x12x4xf32, #tpu.memory_space<vmem>>, vector<2x8x8x4xf32>
    %c0_144 = arith.constant 0 : index
    %c0_145 = arith.constant 0 : index
    %c0_146 = arith.constant 0 : index
    %c72 = arith.constant 72 : index
    %43 = vector.load %arg14[%c0_144, %c0_145, %c0_146, %c72] : memref<2x8x8x128xf32, #tpu.memory_space<vmem>>, vector<2x8x8x4xf32>
    tpu.vector_store %arg14[%c0_144, %c0_145, %c0_146, %c72], %42 {strides = array<i32>} : memref<2x8x8x128xf32, #tpu.memory_space<vmem>>, vector<2x8x8x4xf32>,
    %c0_147 = arith.constant 0 : index
    %c3_148 = arith.constant 3 : index
    %c4_149 = arith.constant 4 : index
    %c0_150 = arith.constant 0 : index
    %44 = vector.load %arg13[%c0_147, %c3_148, %c4_149, %c0_150] : memref<2x12x12x4xf32, #tpu.memory_space<vmem>>, vector<2x8x8x4xf32>
    %c0_151 = arith.constant 0 : index
    %c0_152 = arith.constant 0 : index
    %c0_153 = arith.constant 0 : index
    %c76 = arith.constant 76 : index
    %45 = vector.load %arg14[%c0_151, %c0_152, %c0_153, %c76] : memref<2x8x8x128xf32, #tpu.memory_space<vmem>>, vector<2x8x8x4xf32>
    tpu.vector_store %arg14[%c0_151, %c0_152, %c0_153, %c76], %44 {strides = array<i32>} : memref<2x8x8x128xf32, #tpu.memory_space<vmem>>, vector<2x8x8x4xf32>,
    %c0_154 = arith.constant 0 : index
    %c4_155 = arith.constant 4 : index
    %c0_156 = arith.constant 0 : index
    %c0_157 = arith.constant 0 : index
    %46 = vector.load %arg13[%c0_154, %c4_155, %c0_156, %c0_157] : memref<2x12x12x4xf32, #tpu.memory_space<vmem>>, vector<2x8x8x4xf32>
    %c0_158 = arith.constant 0 : index
    %c0_159 = arith.constant 0 : index
    %c0_160 = arith.constant 0 : index
    %c80 = arith.constant 80 : index
    %47 = vector.load %arg14[%c0_158, %c0_159, %c0_160, %c80] : memref<2x8x8x128xf32, #tpu.memory_space<vmem>>, vector<2x8x8x4xf32>
    tpu.vector_store %arg14[%c0_158, %c0_159, %c0_160, %c80], %46 {strides = array<i32>} : memref<2x8x8x128xf32, #tpu.memory_space<vmem>>, vector<2x8x8x4xf32>,
    %c0_161 = arith.constant 0 : index
    %c4_162 = arith.constant 4 : index
    %c1_163 = arith.constant 1 : index
    %c0_164 = arith.constant 0 : index
    %48 = vector.load %arg13[%c0_161, %c4_162, %c1_163, %c0_164] : memref<2x12x12x4xf32, #tpu.memory_space<vmem>>, vector<2x8x8x4xf32>
    %c0_165 = arith.constant 0 : index
    %c0_166 = arith.constant 0 : index
    %c0_167 = arith.constant 0 : index
    %c84 = arith.constant 84 : index
    %49 = vector.load %arg14[%c0_165, %c0_166, %c0_167, %c84] : memref<2x8x8x128xf32, #tpu.memory_space<vmem>>, vector<2x8x8x4xf32>
    tpu.vector_store %arg14[%c0_165, %c0_166, %c0_167, %c84], %48 {strides = array<i32>} : memref<2x8x8x128xf32, #tpu.memory_space<vmem>>, vector<2x8x8x4xf32>,
    %c0_168 = arith.constant 0 : index
    %c4_169 = arith.constant 4 : index
    %c2_170 = arith.constant 2 : index
    %c0_171 = arith.constant 0 : index
    %50 = vector.load %arg13[%c0_168, %c4_169, %c2_170, %c0_171] : memref<2x12x12x4xf32, #tpu.memory_space<vmem>>, vector<2x8x8x4xf32>
    %c0_172 = arith.constant 0 : index
    %c0_173 = arith.constant 0 : index
    %c0_174 = arith.constant 0 : index
    %c88 = arith.constant 88 : index
    %51 = vector.load %arg14[%c0_172, %c0_173, %c0_174, %c88] : memref<2x8x8x128xf32, #tpu.memory_space<vmem>>, vector<2x8x8x4xf32>
    tpu.vector_store %arg14[%c0_172, %c0_173, %c0_174, %c88], %50 {strides = array<i32>} : memref<2x8x8x128xf32, #tpu.memory_space<vmem>>, vector<2x8x8x4xf32>,
    %c0_175 = arith.constant 0 : index
    %c4_176 = arith.constant 4 : index
    %c3_177 = arith.constant 3 : index
    %c0_178 = arith.constant 0 : index
    %52 = vector.load %arg13[%c0_175, %c4_176, %c3_177, %c0_178] : memref<2x12x12x4xf32, #tpu.memory_space<vmem>>, vector<2x8x8x4xf32>
    %c0_179 = arith.constant 0 : index
    %c0_180 = arith.constant 0 : index
    %c0_181 = arith.constant 0 : index
    %c92 = arith.constant 92 : index
    %53 = vector.load %arg14[%c0_179, %c0_180, %c0_181, %c92] : memref<2x8x8x128xf32, #tpu.memory_space<vmem>>, vector<2x8x8x4xf32>
    tpu.vector_store %arg14[%c0_179, %c0_180, %c0_181, %c92], %52 {strides = array<i32>} : memref<2x8x8x128xf32, #tpu.memory_space<vmem>>, vector<2x8x8x4xf32>,
    %c0_182 = arith.constant 0 : index
    %c4_183 = arith.constant 4 : index
    %c4_184 = arith.constant 4 : index
    %c0_185 = arith.constant 0 : index
    %54 = vector.load %arg13[%c0_182, %c4_183, %c4_184, %c0_185] : memref<2x12x12x4xf32, #tpu.memory_space<vmem>>, vector<2x8x8x4xf32>
    %c0_186 = arith.constant 0 : index
    %c0_187 = arith.constant 0 : index
    %c0_188 = arith.constant 0 : index
    %c96 = arith.constant 96 : index
    %55 = vector.load %arg14[%c0_186, %c0_187, %c0_188, %c96] : memref<2x8x8x128xf32, #tpu.memory_space<vmem>>, vector<2x8x8x4xf32>
    tpu.vector_store %arg14[%c0_186, %c0_187, %c0_188, %c96], %54 {strides = array<i32>} : memref<2x8x8x128xf32, #tpu.memory_space<vmem>>, vector<2x8x8x4xf32>,
    %c0_189 = arith.constant 0 : index
    %c0_190 = arith.constant 0 : index
    %c0_191 = arith.constant 0 : index
    %c0_192 = arith.constant 0 : index
    %56 = vector.load %arg14[%c0_189, %c0_190, %c0_191, %c0_192] : memref<2x8x8x128xf32, #tpu.memory_space<vmem>>, vector<2x8x8x128xf32>
    %57 = vector.shape_cast %56 : vector<2x8x8x128xf32> to vector<128x128xf32>
    %58 = arith.truncf %57 : vector<128x128xf32> to vector<128x128xbf16>
    %c0_193 = arith.constant 0 : index
    %c0_194 = arith.constant 0 : index
    %59 = vector.load %arg1[%c0_193, %c0_194] : memref<128x128xbf16, #tpu.memory_space<vmem>>, vector<128x128xbf16>
    %cst_195 = arith.constant dense<0.000000e+00> : vector<128x128xf32>
    %60 = tpu.matmul %58, %59, %cst_195 {dimension_numbers = #tpu.dot_dimension_numbers<[1], [0], [0], [1], [0, 0, 1, 1], [], []>} : vector<128x128xbf16>, vector<128x128xbf16>, vector<128x128xf32> -> vector<128x128xf32>
    %c0_196 = arith.constant 0 : index
    %c0_197 = arith.constant 0 : index
    %61 = vector.load %arg2[%c0_196, %c0_197] : memref<1x128xf32, #tpu.memory_space<vmem>>, vector<1x128xf32>
    %62 = vector.broadcast %61 : vector<1x128xf32> to vector<128x128xf32>
    %63 = arith.addf %60, %62 : vector<128x128xf32>
    %c0_198 = arith.constant 0 : index
    %c0_199 = arith.constant 0 : index
    %64 = vector.load %arg3[%c0_198, %c0_199] : memref<1x128xf32, #tpu.memory_space<vmem>>, vector<1x128xf32>
    %c0_200 = arith.constant 0 : index
    %c0_201 = arith.constant 0 : index
    %65 = vector.load %arg4[%c0_200, %c0_201] : memref<1x128xf32, #tpu.memory_space<vmem>>, vector<1x128xf32>
    %cst_202 = arith.constant dense<0.000000e+00> : vector<128xf32>
    %66 = vector.multi_reduction <add>, %63, %cst_202 [0] : vector<128x128xf32> to vector<128xf32>
    %67 = vector.shape_cast %66 : vector<128xf32> to vector<1x128xf32>
    %cst_203 = arith.constant 1.280000e+02 : f32
    %68 = vector.broadcast %cst_203 : f32 to vector<1x128xf32>
    %69 = arith.divf %67, %68 : vector<1x128xf32>
    %70 = vector.broadcast %69 : vector<1x128xf32> to vector<128x128xf32>
    %71 = arith.subf %63, %70 : vector<128x128xf32>
    %72 = arith.mulf %71, %71 : vector<128x128xf32>
    %cst_204 = arith.constant dense<0.000000e+00> : vector<128xf32>
    %73 = vector.multi_reduction <add>, %72, %cst_204 [0] : vector<128x128xf32> to vector<128xf32>
    %74 = vector.shape_cast %73 : vector<128xf32> to vector<1x128xf32>
    %cst_205 = arith.constant 1.280000e+02 : f32
    %75 = vector.broadcast %cst_205 : f32 to vector<1x128xf32>
    %76 = arith.divf %74, %75 : vector<1x128xf32>
    %77 = vector.broadcast %69 : vector<1x128xf32> to vector<128x128xf32>
    %78 = arith.subf %63, %77 : vector<128x128xf32>
    %cst_206 = arith.constant 9.99999974E-6 : f32
    %79 = vector.broadcast %cst_206 : f32 to vector<1x128xf32>
    %80 = arith.addf %76, %79 : vector<1x128xf32>
    %81 = math.rsqrt %80 : vector<1x128xf32>
    %82 = vector.broadcast %81 : vector<1x128xf32> to vector<128x128xf32>
    %83 = arith.mulf %78, %82 : vector<128x128xf32>
    %84 = vector.broadcast %64 : vector<1x128xf32> to vector<128x128xf32>
    %85 = arith.mulf %84, %83 : vector<128x128xf32>
    %86 = vector.broadcast %65 : vector<1x128xf32> to vector<128x128xf32>
    %87 = arith.addf %85, %86 : vector<128x128xf32>
    %cst_207 = arith.constant 0.000000e+00 : f32
    %88 = vector.broadcast %cst_207 : f32 to vector<128x128xf32>
    %89 = arith.cmpf ogt, %87, %88 : vector<128x128xf32>
    %cst_208 = arith.constant 0.000000e+00 : f32
    %90 = vector.broadcast %cst_208 : f32 to vector<128x128xf32>
    %91 = arith.minimumf %87, %90 : vector<128x128xf32>
    %92 = math.exp %91 : vector<128x128xf32>
    %cst_209 = arith.constant 1.000000e+00 : f32
    %93 = vector.broadcast %cst_209 : f32 to vector<128x128xf32>
    %94 = arith.subf %92, %93 : vector<128x128xf32>
    %95 = arith.select %89, %87, %94 : vector<128x128xi1>, vector<128x128xf32>
    %cst_210 = arith.constant 0.000000e+00 : f32
    %96 = vector.broadcast %cst_210 : f32 to vector<2x10x10x8xf32>
    %c0_211 = arith.constant 0 : index
    %c0_212 = arith.constant 0 : index
    %c0_213 = arith.constant 0 : index
    %c0_214 = arith.constant 0 : index
    %97 = vector.load %arg15[%c0_211, %c0_212, %c0_213, %c0_214] : memref<2x10x10x8xf32, #tpu.memory_space<vmem>>, vector<2x10x10x8xf32>
    tpu.vector_store %arg15[%c0_211, %c0_212, %c0_213, %c0_214], %96 {strides = array<i32>} : memref<2x10x10x8xf32, #tpu.memory_space<vmem>>, vector<2x10x10x8xf32>,
    %98 = vector.extract_strided_slice %95 {offsets = [0, 0], sizes = [128, 8], strides = [1, 1]} : vector<128x128xf32> to vector<128x8xf32>
    %99 = vector.extract_strided_slice %98 {offsets = [0, 0], sizes = [8, 8], strides = [1, 1]} : vector<128x8xf32> to vector<8x8xf32>
    %c0_215 = arith.constant 0 : index
    %c1_216 = arith.constant 1 : index
    %c1_217 = arith.constant 1 : index
    %c0_218 = arith.constant 0 : index
    %100 = vector.load %arg15[%c0_215, %c1_216, %c1_217, %c0_218] : memref<2x10x10x8xf32, #tpu.memory_space<vmem>>, vector<1x1x8x8xf32>
    %101 = vector.shape_cast %100 : vector<1x1x8x8xf32> to vector<8x8xf32>
    %102 = vector.shape_cast %99 : vector<8x8xf32> to vector<1x1x8x8xf32>
    tpu.vector_store %arg15[%c0_215, %c1_216, %c1_217, %c0_218], %102 {strides = array<i32>} : memref<2x10x10x8xf32, #tpu.memory_space<vmem>>, vector<1x1x8x8xf32>,
    %103 = vector.extract_strided_slice %98 {offsets = [8, 0], sizes = [8, 8], strides = [1, 1]} : vector<128x8xf32> to vector<8x8xf32>
    %c0_219 = arith.constant 0 : index
    %c2_220 = arith.constant 2 : index
    %c1_221 = arith.constant 1 : index
    %c0_222 = arith.constant 0 : index
    %104 = vector.load %arg15[%c0_219, %c2_220, %c1_221, %c0_222] : memref<2x10x10x8xf32, #tpu.memory_space<vmem>>, vector<1x1x8x8xf32>
    %105 = vector.shape_cast %104 : vector<1x1x8x8xf32> to vector<8x8xf32>
    %106 = vector.shape_cast %103 : vector<8x8xf32> to vector<1x1x8x8xf32>
    tpu.vector_store %arg15[%c0_219, %c2_220, %c1_221, %c0_222], %106 {strides = array<i32>} : memref<2x10x10x8xf32, #tpu.memory_space<vmem>>, vector<1x1x8x8xf32>,
    %107 = vector.extract_strided_slice %98 {offsets = [16, 0], sizes = [8, 8], strides = [1, 1]} : vector<128x8xf32> to vector<8x8xf32>
    %c0_223 = arith.constant 0 : index
    %c3_224 = arith.constant 3 : index
    %c1_225 = arith.constant 1 : index
    %c0_226 = arith.constant 0 : index
    %108 = vector.load %arg15[%c0_223, %c3_224, %c1_225, %c0_226] : memref<2x10x10x8xf32, #tpu.memory_space<vmem>>, vector<1x1x8x8xf32>
    %109 = vector.shape_cast %108 : vector<1x1x8x8xf32> to vector<8x8xf32>
    %110 = vector.shape_cast %107 : vector<8x8xf32> to vector<1x1x8x8xf32>
    tpu.vector_store %arg15[%c0_223, %c3_224, %c1_225, %c0_226], %110 {strides = array<i32>} : memref<2x10x10x8xf32, #tpu.memory_space<vmem>>, vector<1x1x8x8xf32>,
    %111 = vector.extract_strided_slice %98 {offsets = [24, 0], sizes = [8, 8], strides = [1, 1]} : vector<128x8xf32> to vector<8x8xf32>
    %c0_227 = arith.constant 0 : index
    %c4_228 = arith.constant 4 : index
    %c1_229 = arith.constant 1 : index
    %c0_230 = arith.constant 0 : index
    %112 = vector.load %arg15[%c0_227, %c4_228, %c1_229, %c0_230] : memref<2x10x10x8xf32, #tpu.memory_space<vmem>>, vector<1x1x8x8xf32>
    %113 = vector.shape_cast %112 : vector<1x1x8x8xf32> to vector<8x8xf32>
    %114 = vector.shape_cast %111 : vector<8x8xf32> to vector<1x1x8x8xf32>
    tpu.vector_store %arg15[%c0_227, %c4_228, %c1_229, %c0_230], %114 {strides = array<i32>} : memref<2x10x10x8xf32, #tpu.memory_space<vmem>>, vector<1x1x8x8xf32>,
    %115 = vector.extract_strided_slice %98 {offsets = [32, 0], sizes = [8, 8], strides = [1, 1]} : vector<128x8xf32> to vector<8x8xf32>
    %c0_231 = arith.constant 0 : index
    %c5 = arith.constant 5 : index
    %c1_232 = arith.constant 1 : index
    %c0_233 = arith.constant 0 : index
    %116 = vector.load %arg15[%c0_231, %c5, %c1_232, %c0_233] : memref<2x10x10x8xf32, #tpu.memory_space<vmem>>, vector<1x1x8x8xf32>
    %117 = vector.shape_cast %116 : vector<1x1x8x8xf32> to vector<8x8xf32>
    %118 = vector.shape_cast %115 : vector<8x8xf32> to vector<1x1x8x8xf32>
    tpu.vector_store %arg15[%c0_231, %c5, %c1_232, %c0_233], %118 {strides = array<i32>} : memref<2x10x10x8xf32, #tpu.memory_space<vmem>>, vector<1x1x8x8xf32>,
    %119 = vector.extract_strided_slice %98 {offsets = [40, 0], sizes = [8, 8], strides = [1, 1]} : vector<128x8xf32> to vector<8x8xf32>
    %c0_234 = arith.constant 0 : index
    %c6 = arith.constant 6 : index
    %c1_235 = arith.constant 1 : index
    %c0_236 = arith.constant 0 : index
    %120 = vector.load %arg15[%c0_234, %c6, %c1_235, %c0_236] : memref<2x10x10x8xf32, #tpu.memory_space<vmem>>, vector<1x1x8x8xf32>
    %121 = vector.shape_cast %120 : vector<1x1x8x8xf32> to vector<8x8xf32>
    %122 = vector.shape_cast %119 : vector<8x8xf32> to vector<1x1x8x8xf32>
    tpu.vector_store %arg15[%c0_234, %c6, %c1_235, %c0_236], %122 {strides = array<i32>} : memref<2x10x10x8xf32, #tpu.memory_space<vmem>>, vector<1x1x8x8xf32>,
    %123 = vector.extract_strided_slice %98 {offsets = [48, 0], sizes = [8, 8], strides = [1, 1]} : vector<128x8xf32> to vector<8x8xf32>
    %c0_237 = arith.constant 0 : index
    %c7 = arith.constant 7 : index
    %c1_238 = arith.constant 1 : index
    %c0_239 = arith.constant 0 : index
    %124 = vector.load %arg15[%c0_237, %c7, %c1_238, %c0_239] : memref<2x10x10x8xf32, #tpu.memory_space<vmem>>, vector<1x1x8x8xf32>
    %125 = vector.shape_cast %124 : vector<1x1x8x8xf32> to vector<8x8xf32>
    %126 = vector.shape_cast %123 : vector<8x8xf32> to vector<1x1x8x8xf32>
    tpu.vector_store %arg15[%c0_237, %c7, %c1_238, %c0_239], %126 {strides = array<i32>} : memref<2x10x10x8xf32, #tpu.memory_space<vmem>>, vector<1x1x8x8xf32>,
    %127 = vector.extract_strided_slice %98 {offsets = [56, 0], sizes = [8, 8], strides = [1, 1]} : vector<128x8xf32> to vector<8x8xf32>
    %c0_240 = arith.constant 0 : index
    %c8_241 = arith.constant 8 : index
    %c1_242 = arith.constant 1 : index
    %c0_243 = arith.constant 0 : index
    %128 = vector.load %arg15[%c0_240, %c8_241, %c1_242, %c0_243] : memref<2x10x10x8xf32, #tpu.memory_space<vmem>>, vector<1x1x8x8xf32>
    %129 = vector.shape_cast %128 : vector<1x1x8x8xf32> to vector<8x8xf32>
    %130 = vector.shape_cast %127 : vector<8x8xf32> to vector<1x1x8x8xf32>
    tpu.vector_store %arg15[%c0_240, %c8_241, %c1_242, %c0_243], %130 {strides = array<i32>} : memref<2x10x10x8xf32, #tpu.memory_space<vmem>>, vector<1x1x8x8xf32>,
    %131 = vector.extract_strided_slice %98 {offsets = [64, 0], sizes = [8, 8], strides = [1, 1]} : vector<128x8xf32> to vector<8x8xf32>
    %c1_244 = arith.constant 1 : index
    %c1_245 = arith.constant 1 : index
    %c1_246 = arith.constant 1 : index
    %c0_247 = arith.constant 0 : index
    %132 = vector.load %arg15[%c1_244, %c1_245, %c1_246, %c0_247] : memref<2x10x10x8xf32, #tpu.memory_space<vmem>>, vector<1x1x8x8xf32>
    %133 = vector.shape_cast %132 : vector<1x1x8x8xf32> to vector<8x8xf32>
    %134 = vector.shape_cast %131 : vector<8x8xf32> to vector<1x1x8x8xf32>
    tpu.vector_store %arg15[%c1_244, %c1_245, %c1_246, %c0_247], %134 {strides = array<i32>} : memref<2x10x10x8xf32, #tpu.memory_space<vmem>>, vector<1x1x8x8xf32>,
    %135 = vector.extract_strided_slice %98 {offsets = [72, 0], sizes = [8, 8], strides = [1, 1]} : vector<128x8xf32> to vector<8x8xf32>
    %c1_248 = arith.constant 1 : index
    %c2_249 = arith.constant 2 : index
    %c1_250 = arith.constant 1 : index
    %c0_251 = arith.constant 0 : index
    %136 = vector.load %arg15[%c1_248, %c2_249, %c1_250, %c0_251] : memref<2x10x10x8xf32, #tpu.memory_space<vmem>>, vector<1x1x8x8xf32>
    %137 = vector.shape_cast %136 : vector<1x1x8x8xf32> to vector<8x8xf32>
    %138 = vector.shape_cast %135 : vector<8x8xf32> to vector<1x1x8x8xf32>
    tpu.vector_store %arg15[%c1_248, %c2_249, %c1_250, %c0_251], %138 {strides = array<i32>} : memref<2x10x10x8xf32, #tpu.memory_space<vmem>>, vector<1x1x8x8xf32>,
    %139 = vector.extract_strided_slice %98 {offsets = [80, 0], sizes = [8, 8], strides = [1, 1]} : vector<128x8xf32> to vector<8x8xf32>
    %c1_252 = arith.constant 1 : index
    %c3_253 = arith.constant 3 : index
    %c1_254 = arith.constant 1 : index
    %c0_255 = arith.constant 0 : index
    %140 = vector.load %arg15[%c1_252, %c3_253, %c1_254, %c0_255] : memref<2x10x10x8xf32, #tpu.memory_space<vmem>>, vector<1x1x8x8xf32>
    %141 = vector.shape_cast %140 : vector<1x1x8x8xf32> to vector<8x8xf32>
    %142 = vector.shape_cast %139 : vector<8x8xf32> to vector<1x1x8x8xf32>
    tpu.vector_store %arg15[%c1_252, %c3_253, %c1_254, %c0_255], %142 {strides = array<i32>} : memref<2x10x10x8xf32, #tpu.memory_space<vmem>>, vector<1x1x8x8xf32>,
    %143 = vector.extract_strided_slice %98 {offsets = [88, 0], sizes = [8, 8], strides = [1, 1]} : vector<128x8xf32> to vector<8x8xf32>
    %c1_256 = arith.constant 1 : index
    %c4_257 = arith.constant 4 : index
    %c1_258 = arith.constant 1 : index
    %c0_259 = arith.constant 0 : index
    %144 = vector.load %arg15[%c1_256, %c4_257, %c1_258, %c0_259] : memref<2x10x10x8xf32, #tpu.memory_space<vmem>>, vector<1x1x8x8xf32>
    %145 = vector.shape_cast %144 : vector<1x1x8x8xf32> to vector<8x8xf32>
    %146 = vector.shape_cast %143 : vector<8x8xf32> to vector<1x1x8x8xf32>
    tpu.vector_store %arg15[%c1_256, %c4_257, %c1_258, %c0_259], %146 {strides = array<i32>} : memref<2x10x10x8xf32, #tpu.memory_space<vmem>>, vector<1x1x8x8xf32>,
    %147 = vector.extract_strided_slice %98 {offsets = [96, 0], sizes = [8, 8], strides = [1, 1]} : vector<128x8xf32> to vector<8x8xf32>
    %c1_260 = arith.constant 1 : index
    %c5_261 = arith.constant 5 : index
    %c1_262 = arith.constant 1 : index
    %c0_263 = arith.constant 0 : index
    %148 = vector.load %arg15[%c1_260, %c5_261, %c1_262, %c0_263] : memref<2x10x10x8xf32, #tpu.memory_space<vmem>>, vector<1x1x8x8xf32>
    %149 = vector.shape_cast %148 : vector<1x1x8x8xf32> to vector<8x8xf32>
    %150 = vector.shape_cast %147 : vector<8x8xf32> to vector<1x1x8x8xf32>
    tpu.vector_store %arg15[%c1_260, %c5_261, %c1_262, %c0_263], %150 {strides = array<i32>} : memref<2x10x10x8xf32, #tpu.memory_space<vmem>>, vector<1x1x8x8xf32>,
    %151 = vector.extract_strided_slice %98 {offsets = [104, 0], sizes = [8, 8], strides = [1, 1]} : vector<128x8xf32> to vector<8x8xf32>
    %c1_264 = arith.constant 1 : index
    %c6_265 = arith.constant 6 : index
    %c1_266 = arith.constant 1 : index
    %c0_267 = arith.constant 0 : index
    %152 = vector.load %arg15[%c1_264, %c6_265, %c1_266, %c0_267] : memref<2x10x10x8xf32, #tpu.memory_space<vmem>>, vector<1x1x8x8xf32>
    %153 = vector.shape_cast %152 : vector<1x1x8x8xf32> to vector<8x8xf32>
    %154 = vector.shape_cast %151 : vector<8x8xf32> to vector<1x1x8x8xf32>
    tpu.vector_store %arg15[%c1_264, %c6_265, %c1_266, %c0_267], %154 {strides = array<i32>} : memref<2x10x10x8xf32, #tpu.memory_space<vmem>>, vector<1x1x8x8xf32>,
    %155 = vector.extract_strided_slice %98 {offsets = [112, 0], sizes = [8, 8], strides = [1, 1]} : vector<128x8xf32> to vector<8x8xf32>
    %c1_268 = arith.constant 1 : index
    %c7_269 = arith.constant 7 : index
    %c1_270 = arith.constant 1 : index
    %c0_271 = arith.constant 0 : index
    %156 = vector.load %arg15[%c1_268, %c7_269, %c1_270, %c0_271] : memref<2x10x10x8xf32, #tpu.memory_space<vmem>>, vector<1x1x8x8xf32>
    %157 = vector.shape_cast %156 : vector<1x1x8x8xf32> to vector<8x8xf32>
    %158 = vector.shape_cast %155 : vector<8x8xf32> to vector<1x1x8x8xf32>
    tpu.vector_store %arg15[%c1_268, %c7_269, %c1_270, %c0_271], %158 {strides = array<i32>} : memref<2x10x10x8xf32, #tpu.memory_space<vmem>>, vector<1x1x8x8xf32>,
    %159 = vector.extract_strided_slice %98 {offsets = [120, 0], sizes = [8, 8], strides = [1, 1]} : vector<128x8xf32> to vector<8x8xf32>
    %c1_272 = arith.constant 1 : index
    %c8_273 = arith.constant 8 : index
    %c1_274 = arith.constant 1 : index
    %c0_275 = arith.constant 0 : index
    %160 = vector.load %arg15[%c1_272, %c8_273, %c1_274, %c0_275] : memref<2x10x10x8xf32, #tpu.memory_space<vmem>>, vector<1x1x8x8xf32>
    %161 = vector.shape_cast %160 : vector<1x1x8x8xf32> to vector<8x8xf32>
    %162 = vector.shape_cast %159 : vector<8x8xf32> to vector<1x1x8x8xf32>
    tpu.vector_store %arg15[%c1_272, %c8_273, %c1_274, %c0_275], %162 {strides = array<i32>} : memref<2x10x10x8xf32, #tpu.memory_space<vmem>>, vector<1x1x8x8xf32>,
    %cst_276 = arith.constant 0.000000e+00 : f32
    %163 = vector.broadcast %cst_276 : f32 to vector<2x8x8x128xf32>
    %c0_277 = arith.constant 0 : index
    %c0_278 = arith.constant 0 : index
    %c0_279 = arith.constant 0 : index
    %c0_280 = arith.constant 0 : index
    %164 = vector.load %arg16[%c0_277, %c0_278, %c0_279, %c0_280] : memref<2x8x8x128xf32, #tpu.memory_space<vmem>>, vector<2x8x8x128xf32>
    tpu.vector_store %arg16[%c0_277, %c0_278, %c0_279, %c0_280], %163 {strides = array<i32>} : memref<2x8x8x128xf32, #tpu.memory_space<vmem>>, vector<2x8x8x128xf32>,
    %c0_281 = arith.constant 0 : index
    %c0_282 = arith.constant 0 : index
    %c0_283 = arith.constant 0 : index
    %c0_284 = arith.constant 0 : index
    %165 = vector.load %arg15[%c0_281, %c0_282, %c0_283, %c0_284] : memref<2x10x10x8xf32, #tpu.memory_space<vmem>>, vector<2x8x8x8xf32>
    %c0_285 = arith.constant 0 : index
    %c0_286 = arith.constant 0 : index
    %c0_287 = arith.constant 0 : index
    %c0_288 = arith.constant 0 : index
    %166 = vector.load %arg16[%c0_285, %c0_286, %c0_287, %c0_288] : memref<2x8x8x128xf32, #tpu.memory_space<vmem>>, vector<2x8x8x8xf32>
    tpu.vector_store %arg16[%c0_285, %c0_286, %c0_287, %c0_288], %165 {strides = array<i32>} : memref<2x8x8x128xf32, #tpu.memory_space<vmem>>, vector<2x8x8x8xf32>,
    %c0_289 = arith.constant 0 : index
    %c0_290 = arith.constant 0 : index
    %c1_291 = arith.constant 1 : index
    %c0_292 = arith.constant 0 : index
    %167 = vector.load %arg15[%c0_289, %c0_290, %c1_291, %c0_292] : memref<2x10x10x8xf32, #tpu.memory_space<vmem>>, vector<2x8x8x8xf32>
    %c0_293 = arith.constant 0 : index
    %c0_294 = arith.constant 0 : index
    %c0_295 = arith.constant 0 : index
    %c8_296 = arith.constant 8 : index
    %168 = vector.load %arg16[%c0_293, %c0_294, %c0_295, %c8_296] : memref<2x8x8x128xf32, #tpu.memory_space<vmem>>, vector<2x8x8x8xf32>
    tpu.vector_store %arg16[%c0_293, %c0_294, %c0_295, %c8_296], %167 {strides = array<i32>} : memref<2x8x8x128xf32, #tpu.memory_space<vmem>>, vector<2x8x8x8xf32>,
    %c0_297 = arith.constant 0 : index
    %c0_298 = arith.constant 0 : index
    %c2_299 = arith.constant 2 : index
    %c0_300 = arith.constant 0 : index
    %169 = vector.load %arg15[%c0_297, %c0_298, %c2_299, %c0_300] : memref<2x10x10x8xf32, #tpu.memory_space<vmem>>, vector<2x8x8x8xf32>
    %c0_301 = arith.constant 0 : index
    %c0_302 = arith.constant 0 : index
    %c0_303 = arith.constant 0 : index
    %c16_304 = arith.constant 16 : index
    %170 = vector.load %arg16[%c0_301, %c0_302, %c0_303, %c16_304] : memref<2x8x8x128xf32, #tpu.memory_space<vmem>>, vector<2x8x8x8xf32>
    tpu.vector_store %arg16[%c0_301, %c0_302, %c0_303, %c16_304], %169 {strides = array<i32>} : memref<2x8x8x128xf32, #tpu.memory_space<vmem>>, vector<2x8x8x8xf32>,
    %c0_305 = arith.constant 0 : index
    %c1_306 = arith.constant 1 : index
    %c0_307 = arith.constant 0 : index
    %c0_308 = arith.constant 0 : index
    %171 = vector.load %arg15[%c0_305, %c1_306, %c0_307, %c0_308] : memref<2x10x10x8xf32, #tpu.memory_space<vmem>>, vector<2x8x8x8xf32>
    %c0_309 = arith.constant 0 : index
    %c0_310 = arith.constant 0 : index
    %c0_311 = arith.constant 0 : index
    %c24_312 = arith.constant 24 : index
    %172 = vector.load %arg16[%c0_309, %c0_310, %c0_311, %c24_312] : memref<2x8x8x128xf32, #tpu.memory_space<vmem>>, vector<2x8x8x8xf32>
    tpu.vector_store %arg16[%c0_309, %c0_310, %c0_311, %c24_312], %171 {strides = array<i32>} : memref<2x8x8x128xf32, #tpu.memory_space<vmem>>, vector<2x8x8x8xf32>,
    %c0_313 = arith.constant 0 : index
    %c1_314 = arith.constant 1 : index
    %c1_315 = arith.constant 1 : index
    %c0_316 = arith.constant 0 : index
    %173 = vector.load %arg15[%c0_313, %c1_314, %c1_315, %c0_316] : memref<2x10x10x8xf32, #tpu.memory_space<vmem>>, vector<2x8x8x8xf32>
    %c0_317 = arith.constant 0 : index
    %c0_318 = arith.constant 0 : index
    %c0_319 = arith.constant 0 : index
    %c32_320 = arith.constant 32 : index
    %174 = vector.load %arg16[%c0_317, %c0_318, %c0_319, %c32_320] : memref<2x8x8x128xf32, #tpu.memory_space<vmem>>, vector<2x8x8x8xf32>
    tpu.vector_store %arg16[%c0_317, %c0_318, %c0_319, %c32_320], %173 {strides = array<i32>} : memref<2x8x8x128xf32, #tpu.memory_space<vmem>>, vector<2x8x8x8xf32>,
    %c0_321 = arith.constant 0 : index
    %c1_322 = arith.constant 1 : index
    %c2_323 = arith.constant 2 : index
    %c0_324 = arith.constant 0 : index
    %175 = vector.load %arg15[%c0_321, %c1_322, %c2_323, %c0_324] : memref<2x10x10x8xf32, #tpu.memory_space<vmem>>, vector<2x8x8x8xf32>
    %c0_325 = arith.constant 0 : index
    %c0_326 = arith.constant 0 : index
    %c0_327 = arith.constant 0 : index
    %c40_328 = arith.constant 40 : index
    %176 = vector.load %arg16[%c0_325, %c0_326, %c0_327, %c40_328] : memref<2x8x8x128xf32, #tpu.memory_space<vmem>>, vector<2x8x8x8xf32>
    tpu.vector_store %arg16[%c0_325, %c0_326, %c0_327, %c40_328], %175 {strides = array<i32>} : memref<2x8x8x128xf32, #tpu.memory_space<vmem>>, vector<2x8x8x8xf32>,
    %c0_329 = arith.constant 0 : index
    %c2_330 = arith.constant 2 : index
    %c0_331 = arith.constant 0 : index
    %c0_332 = arith.constant 0 : index
    %177 = vector.load %arg15[%c0_329, %c2_330, %c0_331, %c0_332] : memref<2x10x10x8xf32, #tpu.memory_space<vmem>>, vector<2x8x8x8xf32>
    %c0_333 = arith.constant 0 : index
    %c0_334 = arith.constant 0 : index
    %c0_335 = arith.constant 0 : index
    %c48_336 = arith.constant 48 : index
    %178 = vector.load %arg16[%c0_333, %c0_334, %c0_335, %c48_336] : memref<2x8x8x128xf32, #tpu.memory_space<vmem>>, vector<2x8x8x8xf32>
    tpu.vector_store %arg16[%c0_333, %c0_334, %c0_335, %c48_336], %177 {strides = array<i32>} : memref<2x8x8x128xf32, #tpu.memory_space<vmem>>, vector<2x8x8x8xf32>,
    %c0_337 = arith.constant 0 : index
    %c2_338 = arith.constant 2 : index
    %c1_339 = arith.constant 1 : index
    %c0_340 = arith.constant 0 : index
    %179 = vector.load %arg15[%c0_337, %c2_338, %c1_339, %c0_340] : memref<2x10x10x8xf32, #tpu.memory_space<vmem>>, vector<2x8x8x8xf32>
    %c0_341 = arith.constant 0 : index
    %c0_342 = arith.constant 0 : index
    %c0_343 = arith.constant 0 : index
    %c56_344 = arith.constant 56 : index
    %180 = vector.load %arg16[%c0_341, %c0_342, %c0_343, %c56_344] : memref<2x8x8x128xf32, #tpu.memory_space<vmem>>, vector<2x8x8x8xf32>
    tpu.vector_store %arg16[%c0_341, %c0_342, %c0_343, %c56_344], %179 {strides = array<i32>} : memref<2x8x8x128xf32, #tpu.memory_space<vmem>>, vector<2x8x8x8xf32>,
    %c0_345 = arith.constant 0 : index
    %c2_346 = arith.constant 2 : index
    %c2_347 = arith.constant 2 : index
    %c0_348 = arith.constant 0 : index
    %181 = vector.load %arg15[%c0_345, %c2_346, %c2_347, %c0_348] : memref<2x10x10x8xf32, #tpu.memory_space<vmem>>, vector<2x8x8x8xf32>
    %c0_349 = arith.constant 0 : index
    %c0_350 = arith.constant 0 : index
    %c0_351 = arith.constant 0 : index
    %c64_352 = arith.constant 64 : index
    %182 = vector.load %arg16[%c0_349, %c0_350, %c0_351, %c64_352] : memref<2x8x8x128xf32, #tpu.memory_space<vmem>>, vector<2x8x8x8xf32>
    tpu.vector_store %arg16[%c0_349, %c0_350, %c0_351, %c64_352], %181 {strides = array<i32>} : memref<2x8x8x128xf32, #tpu.memory_space<vmem>>, vector<2x8x8x8xf32>,
    %c0_353 = arith.constant 0 : index
    %c0_354 = arith.constant 0 : index
    %c0_355 = arith.constant 0 : index
    %c0_356 = arith.constant 0 : index
    %183 = vector.load %arg16[%c0_353, %c0_354, %c0_355, %c0_356] : memref<2x8x8x128xf32, #tpu.memory_space<vmem>>, vector<2x8x8x128xf32>
    %184 = vector.shape_cast %183 : vector<2x8x8x128xf32> to vector<128x128xf32>
    %185 = arith.truncf %184 : vector<128x128xf32> to vector<128x128xbf16>
    %c0_357 = arith.constant 0 : index
    %c0_358 = arith.constant 0 : index
    %186 = vector.load %arg9[%c0_357, %c0_358] : memref<32x128xbf16, #tpu.memory_space<vmem>>, vector<32x128xbf16>
    %cst_359 = arith.constant dense<0.000000e+00> : vector<32x128xf32>
    %187 = tpu.matmul %186, %185, %cst_359 {dimension_numbers = #tpu.dot_dimension_numbers<[1], [0], [0], [1], [0, 0, 1, 1], [], []>} : vector<32x128xbf16>, vector<128x128xbf16>, vector<32x128xf32> -> vector<32x128xf32>
    %188 = arith.truncf %187 : vector<32x128xf32> to vector<32x128xbf16>
    %c0_360 = arith.constant 0 : index
    %c0_361 = arith.constant 0 : index
    %189 = vector.load %arg5[%c0_360, %c0_361] : memref<128x128xbf16, #tpu.memory_space<vmem>>, vector<128x128xbf16>
    %cst_362 = arith.constant dense<0.000000e+00> : vector<32x128xf32>
    %190 = tpu.matmul %188, %189, %cst_362 {dimension_numbers = #tpu.dot_dimension_numbers<[1], [0], [0], [1], [0, 0, 1, 1], [], []>} : vector<32x128xbf16>, vector<128x128xbf16>, vector<32x128xf32> -> vector<32x128xf32>
    %c0_363 = arith.constant 0 : index
    %c0_364 = arith.constant 0 : index
    %191 = vector.load %arg6[%c0_363, %c0_364] : memref<1x128xf32, #tpu.memory_space<vmem>>, vector<1x128xf32>
    %192 = vector.broadcast %191 : vector<1x128xf32> to vector<32x128xf32>
    %193 = arith.addf %190, %192 : vector<32x128xf32>
    %c0_365 = arith.constant 0 : index
    %c0_366 = arith.constant 0 : index
    %194 = vector.load %arg7[%c0_365, %c0_366] : memref<1x128xf32, #tpu.memory_space<vmem>>, vector<1x128xf32>
    %c0_367 = arith.constant 0 : index
    %c0_368 = arith.constant 0 : index
    %195 = vector.load %arg8[%c0_367, %c0_368] : memref<1x128xf32, #tpu.memory_space<vmem>>, vector<1x128xf32>
    %cst_369 = arith.constant dense<0.000000e+00> : vector<128xf32>
    %196 = vector.multi_reduction <add>, %193, %cst_369 [0] : vector<32x128xf32> to vector<128xf32>
    %197 = vector.shape_cast %196 : vector<128xf32> to vector<1x128xf32>
    %cst_370 = arith.constant 3.200000e+01 : f32
    %198 = vector.broadcast %cst_370 : f32 to vector<1x128xf32>
    %199 = arith.divf %197, %198 : vector<1x128xf32>
    %200 = vector.broadcast %199 : vector<1x128xf32> to vector<32x128xf32>
    %201 = arith.subf %193, %200 : vector<32x128xf32>
    %202 = arith.mulf %201, %201 : vector<32x128xf32>
    %cst_371 = arith.constant dense<0.000000e+00> : vector<128xf32>
    %203 = vector.multi_reduction <add>, %202, %cst_371 [0] : vector<32x128xf32> to vector<128xf32>
    %204 = vector.shape_cast %203 : vector<128xf32> to vector<1x128xf32>
    %cst_372 = arith.constant 3.200000e+01 : f32
    %205 = vector.broadcast %cst_372 : f32 to vector<1x128xf32>
    %206 = arith.divf %204, %205 : vector<1x128xf32>
    %207 = vector.broadcast %199 : vector<1x128xf32> to vector<32x128xf32>
    %208 = arith.subf %193, %207 : vector<32x128xf32>
    %cst_373 = arith.constant 9.99999974E-6 : f32
    %209 = vector.broadcast %cst_373 : f32 to vector<1x128xf32>
    %210 = arith.addf %206, %209 : vector<1x128xf32>
    %211 = math.rsqrt %210 : vector<1x128xf32>
    %212 = vector.broadcast %211 : vector<1x128xf32> to vector<32x128xf32>
    %213 = arith.mulf %208, %212 : vector<32x128xf32>
    %214 = vector.broadcast %194 : vector<1x128xf32> to vector<32x128xf32>
    %215 = arith.mulf %214, %213 : vector<32x128xf32>
    %216 = vector.broadcast %195 : vector<1x128xf32> to vector<32x128xf32>
    %217 = arith.addf %215, %216 : vector<32x128xf32>
    %cst_374 = arith.constant 0.000000e+00 : f32
    %218 = vector.broadcast %cst_374 : f32 to vector<32x128xf32>
    %219 = arith.cmpf ogt, %217, %218 : vector<32x128xf32>
    %cst_375 = arith.constant 0.000000e+00 : f32
    %220 = vector.broadcast %cst_375 : f32 to vector<32x128xf32>
    %221 = arith.minimumf %217, %220 : vector<32x128xf32>
    %222 = math.exp %221 : vector<32x128xf32>
    %cst_376 = arith.constant 1.000000e+00 : f32
    %223 = vector.broadcast %cst_376 : f32 to vector<32x128xf32>
    %224 = arith.subf %222, %223 : vector<32x128xf32>
    %225 = arith.select %219, %217, %224 : vector<32x128xi1>, vector<32x128xf32>
    %c0_377 = arith.constant 0 : index
    %c0_378 = arith.constant 0 : index
    %226 = vector.load %arg10[%c0_377, %c0_378] : memref<32x128xf32, #tpu.memory_space<vmem>>, vector<32x128xf32>
    %227 = arith.mulf %225, %226 : vector<32x128xf32>
    %cst_379 = arith.constant dense<0.000000e+00> : vector<32xf32>
    %228 = vector.multi_reduction <add>, %227, %cst_379 [1] : vector<32x128xf32> to vector<32xf32>
    %229 = vector.shape_cast %228 : vector<32xf32> to vector<32x1xf32>
    %cst_380 = arith.constant 0.000000e+00 : f32
    %230 = vector.broadcast %cst_380 : f32 to vector<1x1xf32>
    %231 = vector.extract_strided_slice %229 {offsets = [0, 0], sizes = [16, 1], strides = [1, 1]} : vector<32x1xf32> to vector<16x1xf32>
    %cst_381 = arith.constant dense<0.000000e+00> : vector<1xf32>
    %232 = vector.multi_reduction <add>, %231, %cst_381 [0] : vector<16x1xf32> to vector<1xf32>
    %233 = vector.shape_cast %232 : vector<1xf32> to vector<1x1xf32>
    %c0_382 = arith.constant 0 : index
    %c0_383 = arith.constant 0 : index
    %234 = vector.load %arg11[%c0_382, %c0_383] : memref<1x1xf32, #tpu.memory_space<vmem>>, vector<1x1xf32>
    %235 = arith.addf %233, %234 : vector<1x1xf32>
    %cst_384 = arith.constant 0.000000e+00 : f32
    %236 = vector.broadcast %cst_384 : f32 to vector<1x1xf32>
    %237 = arith.subf %236, %235 : vector<1x1xf32>
    %238 = math.exp %237 : vector<1x1xf32>
    %cst_385 = arith.constant 1.000000e+00 : f32
    %239 = vector.broadcast %cst_385 : f32 to vector<1x1xf32>
    %240 = arith.addf %239, %238 : vector<1x1xf32>
    %cst_386 = arith.constant 1.000000e+00 : f32
    %241 = vector.broadcast %cst_386 : f32 to vector<1x1xf32>
    %242 = arith.divf %241, %240 : vector<1x1xf32>
    %243 = arith.addf %230, %242 : vector<1x1xf32>
    %244 = vector.extract_strided_slice %229 {offsets = [16, 0], sizes = [16, 1], strides = [1, 1]} : vector<32x1xf32> to vector<16x1xf32>
    %cst_387 = arith.constant dense<0.000000e+00> : vector<1xf32>
    %245 = vector.multi_reduction <add>, %244, %cst_387 [0] : vector<16x1xf32> to vector<1xf32>
    %246 = vector.shape_cast %245 : vector<1xf32> to vector<1x1xf32>
    %c0_388 = arith.constant 0 : index
    %c0_389 = arith.constant 0 : index
    %247 = vector.load %arg11[%c0_388, %c0_389] : memref<1x1xf32, #tpu.memory_space<vmem>>, vector<1x1xf32>
    %248 = arith.addf %246, %247 : vector<1x1xf32>
    %cst_390 = arith.constant 0.000000e+00 : f32
    %249 = vector.broadcast %cst_390 : f32 to vector<1x1xf32>
    %250 = arith.subf %249, %248 : vector<1x1xf32>
    %251 = math.exp %250 : vector<1x1xf32>
    %cst_391 = arith.constant 1.000000e+00 : f32
    %252 = vector.broadcast %cst_391 : f32 to vector<1x1xf32>
    %253 = arith.addf %252, %251 : vector<1x1xf32>
    %cst_392 = arith.constant 1.000000e+00 : f32
    %254 = vector.broadcast %cst_392 : f32 to vector<1x1xf32>
    %255 = arith.divf %254, %253 : vector<1x1xf32>
    %256 = arith.addf %243, %255 : vector<1x1xf32>
    %cst_393 = arith.constant 5.000000e-01 : f32
    %257 = vector.broadcast %cst_393 : f32 to vector<1x1xf32>
    %258 = arith.mulf %256, %257 : vector<1x1xf32>
    %c0_394 = arith.constant 0 : index
    %c0_395 = arith.constant 0 : index
    %259 = vector.load %arg12[%c0_394, %c0_395] : memref<1x1xf32, #tpu.memory_space<vmem>>, vector<1x1xf32>
    tpu.vector_store %arg12[%c0_394, %c0_395], %258 {strides = array<i32>} : memref<1x1xf32, #tpu.memory_space<vmem>>, vector<1x1xf32>,
    return
  }
}

</mosaic_0001>

<llo_original>
// kernel: forward.1
$region0: #{forward.1}
  #allocation0 [shape = 'u32[]', space=smem, size = 0x4, offset = 0x4, fixed_abs, tag = 'smem constant byte address 0x4 - core index']
  #allocation1 [shape = 'u32[144,128]{1,0:T(1,128)}', space=vmem, size = 0x12000, scoped, tag = 'internal scratch']
  #allocation2 [shape = 'f32[2,12,12,4]{3,2,1,0:T(8,128)}', space=vmem, size = 0x30000, scoped, tag = 'scratch operand']
  #allocation3 [shape = 'f32[2,8,8,128]{3,2,1,0:T(8,128)}', space=vmem, size = 0x10000, scoped, tag = 'scratch operand']
  #allocation4 [shape = 'f32[2,10,10,8]{3,2,1,0:T(8,128)}', space=vmem, size = 0x28000, scoped, tag = 'scratch operand']
  #allocation5 [shape = 'f32[2,8,8,128]{3,2,1,0:T(8,128)}', space=vmem, size = 0x10000, scoped, tag = 'scratch operand']
  #allocation6 [shape = 'f32[1,1]{1,0:T(1,128)S(1)}', space=vmem, size = 0x200, scoped, tag = 'scoped memory for forward.1']
  %s0 = inlined_call_operand.vmem [shape: f32[2,8,8,4], index: 0, kind: input, shape index: {}]
  %s1 = inlined_call_operand.vmem [shape: bf16[128,128], index: 1, kind: input, shape index: {}]
  %s2 = inlined_call_operand.vmem [shape: f32[1,128], index: 2, kind: input, shape index: {}]
  %s3 = inlined_call_operand.vmem [shape: f32[1,128], index: 3, kind: input, shape index: {}]
  %s4 = inlined_call_operand.vmem [shape: f32[1,128], index: 4, kind: input, shape index: {}]
  %s5 = inlined_call_operand.vmem [shape: bf16[128,128], index: 5, kind: input, shape index: {}]
  %s6 = inlined_call_operand.vmem [shape: f32[1,128], index: 6, kind: input, shape index: {}]
  %s7 = inlined_call_operand.vmem [shape: f32[1,128], index: 7, kind: input, shape index: {}]
  %s8 = inlined_call_operand.vmem [shape: f32[1,128], index: 8, kind: input, shape index: {}]
  %s9 = inlined_call_operand.vmem [shape: bf16[32,128], index: 9, kind: input, shape index: {}]
  %s10 = inlined_call_operand.vmem [shape: f32[32,128], index: 10, kind: input, shape index: {}]
  %s11 = inlined_call_operand.<no memory space> [shape: f32[1,1], index: 11, kind: input, shape index: {}]
  %s12 = inlined_call_operand.hbm [shape: f32[1,1], index: 12, kind: output, shape index: {}]
  %s13 = sld [smem:[#allocation0]]
  $region58: #{forward.1} parent=0
    _
  %s15 = ssub.s32 1, %s13
  %s16 = scalar_select 0, %s15, %s13
  %v17 = vstv %s11
  %18 = vst [vmem:[#allocation6] sm:$0x1] %v17
  $region1: #{forward.1} parent=0
    #allocation7 [shape = 'u8[512]{0}', space=vmem, size = 0x400, scoped, tag = 'output window, operand 0, single buffered']
    #allocation8 [shape = 's32[1]{0}', space=sflag, size = 0x4, scoped, tag = 'scoped memory for forward.1']
    %19 = vsyncpa [#allocation8], 0
    // Predicated region
    $region2: #{forward.1} parent=1 // pred_check
      _
    $region3: #{forward.1} parent=1 // pred_check_branch
      %21 = sbr.rel (0) target = $region5
    $region4: #{forward.1} parent=1 // pred_region
      _
    $region5: #{forward.1} parent=1 // pred_fallthru
      _
    // Predicated region
    $region6: #{forward.1} parent=1 // pred_check
      _
    $region7: #{forward.1} parent=1 // pred_check_branch
      %23 = sbr.rel (0) target = $region9
    $region8: #{forward.1} parent=1 // pred_region
      _
    $region9: #{forward.1} parent=1 // pred_fallthru
      _
    // Predicated region
    $region10: #{forward.1} parent=1 // pred_check
      _
    $region11: #{forward.1} parent=1 // pred_check_branch
      %25 = sbr.rel (0) target = $region13
    $region12: #{forward.1} parent=1 // pred_region
      _
    $region13: #{forward.1} parent=1 // pred_fallthru
      _
    // Predicated region
    $region14: #{forward.1} parent=1 // pred_check
      _
    $region15: #{forward.1} parent=1 // pred_check_branch
      %27 = sbr.rel (0) target = $region17
    $region16: #{forward.1} parent=1 // pred_region
      _
    $region17: #{forward.1} parent=1 // pred_fallthru
      _
    // Predicated region
    $region18: #{forward.1} parent=1 // pred_check
      _
    $region19: #{forward.1} parent=1 // pred_check_branch
      %29 = sbr.rel (0) target = $region21
    $region20: #{forward.1} parent=1 // pred_region
      _
    $region21: #{forward.1} parent=1 // pred_fallthru
      _
    // Predicated region
    $region22: #{forward.1} parent=1 // pred_check
      _
    $region23: #{forward.1} parent=1 // pred_check_branch
      %31 = sbr.rel (0) target = $region25
    $region24: #{forward.1} parent=1 // pred_region
      _
    $region25: #{forward.1} parent=1 // pred_fallthru
      _
    // Predicated region
    $region26: #{forward.1} parent=1 // pred_check
      _
    $region27: #{forward.1} parent=1 // pred_check_branch
      %33 = sbr.rel (0) target = $region29
    $region28: #{forward.1} parent=1 // pred_region
      _
    $region29: #{forward.1} parent=1 // pred_fallthru
      _
    // Predicated region
    $region30: #{forward.1} parent=1 // pred_check
      _
    $region31: #{forward.1} parent=1 // pred_check_branch
      %35 = sbr.rel (0) target = $region33
    $region32: #{forward.1} parent=1 // pred_region
      _
    $region33: #{forward.1} parent=1 // pred_fallthru
      _
    // Predicated region
    $region34: #{forward.1} parent=1 // pred_check
      _
    $region35: #{forward.1} parent=1 // pred_check_branch
      %37 = sbr.rel (0) target = $region37
    $region36: #{forward.1} parent=1 // pred_region
      _
    $region37: #{forward.1} parent=1 // pred_fallthru
      _
    // Predicated region
    $region38: #{forward.1} parent=1 // pred_check
      _
    $region39: #{forward.1} parent=1 // pred_check_branch
      %39 = sbr.rel (0) target = $region41
    $region40: #{forward.1} parent=1 // pred_region
      _
    $region41: #{forward.1} parent=1 // pred_fallthru
      _
    // Predicated region
    $region42: #{forward.1} parent=1 // pred_check
      _
    $region43: #{forward.1} parent=1 // pred_check_branch
      %41 = sbr.rel (0) target = $region45
    $region44: #{forward.1} parent=1 // pred_region
      _
    $region45: #{forward.1} parent=1 // pred_fallthru
      _
    // Predicated region
    $region46: #{forward.1} parent=1 // pred_check
      _
    $region47: #{forward.1} parent=1 // pred_check_branch
      %43 = sbr.rel (0) target = $region49
    $region48: #{forward.1} parent=1 // pred_region
      _
    $region49: #{forward.1} parent=1 // pred_fallthru
      _
    %vm45 = vcmask 31744
    %46 = vst.msk [vmem:[#allocation2] sm:$0xff] %vm45, 0.0
    %vm47 = vcmask 27648
    %48 = vst.msk [vmem:[#allocation2 + $0x8] sm:$0xf] %vm47, 0.0
    %49 = vst.msk [vmem:[#allocation2 + $0x10] sm:$0xff] %vm45, 0.0
    %50 = vst.msk [vmem:[#allocation2 + $0x18] sm:$0xf] %vm47, 0.0
    %51 = vst.msk [vmem:[#allocation2 + $0x20] sm:$0xff] %vm45, 0.0
    %52 = vst.msk [vmem:[#allocation2 + $0x28] sm:$0xf] %vm47, 0.0
    %53 = vst.msk [vmem:[#allocation2 + $0x30] sm:$0xff] %vm45, 0.0
    %54 = vst.msk [vmem:[#allocation2 + $0x38] sm:$0xf] %vm47, 0.0
    %55 = vst.msk [vmem:[#allocation2 + $0x40] sm:$0xff] %vm45, 0.0
    %56 = vst.msk [vmem:[#allocation2 + $0x48] sm:$0xf] %vm47, 0.0
    %57 = vst.msk [vmem:[#allocation2 + $0x50] sm:$0xff] %vm45, 0.0
    %58 = vst.msk [vmem:[#allocation2 + $0x58] sm:$0xf] %vm47, 0.0
    %59 = vst.msk [vmem:[#allocation2 + $0x60] sm:$0xff] %vm45, 0.0
    %60 = vst.msk [vmem:[#allocation2 + $0x68] sm:$0xf] %vm47, 0.0
    %61 = vst.msk [vmem:[#allocation2 + $0x70] sm:$0xff] %vm45, 0.0
    %62 = vst.msk [vmem:[#allocation2 + $0x78] sm:$0xf] %vm47, 0.0
    %63 = vst.msk [vmem:[#allocation2 + $0x80] sm:$0xff] %vm45, 0.0
    %64 = vst.msk [vmem:[#allocation2 + $0x88] sm:$0xf] %vm47, 0.0
    %65 = vst.msk [vmem:[#allocation2 + $0x90] sm:$0xff] %vm45, 0.0
    %66 = vst.msk [vmem:[#allocation2 + $0x98] sm:$0xf] %vm47, 0.0
    %67 = vst.msk [vmem:[#allocation2 + $0xa0] sm:$0xff] %vm45, 0.0
    %68 = vst.msk [vmem:[#allocation2 + $0xa8] sm:$0xf] %vm47, 0.0
    %69 = vst.msk [vmem:[#allocation2 + $0xb0] sm:$0xff] %vm45, 0.0
    %70 = vst.msk [vmem:[#allocation2 + $0xb8] sm:$0xf] %vm47, 0.0
    %71 = vst.msk [vmem:[#allocation2 + $0xc0] sm:$0xff] %vm45, 0.0
    %72 = vst.msk [vmem:[#allocation2 + $0xc8] sm:$0xf] %vm47, 0.0
    %73 = vst.msk [vmem:[#allocation2 + $0xd0] sm:$0xff] %vm45, 0.0
    %74 = vst.msk [vmem:[#allocation2 + $0xd8] sm:$0xf] %vm47, 0.0
    %75 = vst.msk [vmem:[#allocation2 + $0xe0] sm:$0xff] %vm45, 0.0
    %76 = vst.msk [vmem:[#allocation2 + $0xe8] sm:$0xf] %vm47, 0.0
    %77 = vst.msk [vmem:[#allocation2 + $0xf0] sm:$0xff] %vm45, 0.0
    %78 = vst.msk [vmem:[#allocation2 + $0xf8] sm:$0xf] %vm47, 0.0
    %79 = vst.msk [vmem:[#allocation2 + $0x100] sm:$0xff] %vm45, 0.0
    %80 = vst.msk [vmem:[#allocation2 + $0x108] sm:$0xf] %vm47, 0.0
    %81 = vst.msk [vmem:[#allocation2 + $0x110] sm:$0xff] %vm45, 0.0
    %82 = vst.msk [vmem:[#allocation2 + $0x118] sm:$0xf] %vm47, 0.0
    %83 = vst.msk [vmem:[#allocation2 + $0x120] sm:$0xff] %vm45, 0.0
    %84 = vst.msk [vmem:[#allocation2 + $0x128] sm:$0xf] %vm47, 0.0
    %85 = vst.msk [vmem:[#allocation2 + $0x130] sm:$0xff] %vm45, 0.0
    %86 = vst.msk [vmem:[#allocation2 + $0x138] sm:$0xf] %vm47, 0.0
    %87 = vst.msk [vmem:[#allocation2 + $0x140] sm:$0xff] %vm45, 0.0
    %88 = vst.msk [vmem:[#allocation2 + $0x148] sm:$0xf] %vm47, 0.0
    %89 = vst.msk [vmem:[#allocation2 + $0x150] sm:$0xff] %vm45, 0.0
    %90 = vst.msk [vmem:[#allocation2 + $0x158] sm:$0xf] %vm47, 0.0
    %91 = vst.msk [vmem:[#allocation2 + $0x160] sm:$0xff] %vm45, 0.0
    %92 = vst.msk [vmem:[#allocation2 + $0x168] sm:$0xf] %vm47, 0.0
    %93 = vst.msk [vmem:[#allocation2 + $0x170] sm:$0xff] %vm45, 0.0
    %94 = vst.msk [vmem:[#allocation2 + $0x178] sm:$0xf] %vm47, 0.0
    %v95 = vld [vmem:[%s0] sm:$0xff]
    %v96 = vld [vmem:[%s0 + $0x8] sm:$0xff]
    %v97 = vld [vmem:[%s0 + $0x10] sm:$0xff]
    %v98 = vld [vmem:[%s0 + $0x18] sm:$0xff]
    %v99 = vld [vmem:[%s0 + $0x20] sm:$0xff]
    %v100 = vld [vmem:[%s0 + $0x28] sm:$0xff]
    %v101 = vld [vmem:[%s0 + $0x30] sm:$0xff]
    %v102 = vld [vmem:[%s0 + $0x38] sm:$0xff]
    %v103 = vld [vmem:[%s0 + $0x40] sm:$0xff]
    %v104 = vld [vmem:[%s0 + $0x48] sm:$0xff]
    %v105 = vld [vmem:[%s0 + $0x50] sm:$0xff]
    %v106 = vld [vmem:[%s0 + $0x58] sm:$0xff]
    %v107 = vld [vmem:[%s0 + $0x60] sm:$0xff]
    %v108 = vld [vmem:[%s0 + $0x68] sm:$0xff]
    %v109 = vld [vmem:[%s0 + $0x70] sm:$0xff]
    %v110 = vld [vmem:[%s0 + $0x78] sm:$0xff]
    %s111 = scalar_lea.vmem [#allocation2], 32
    %112 = vst.msk [vmem:[%s111 + $0x2] sm:$0xff] %vm45, %v95
    %113 = vst.msk [vmem:[%s111 + $0x12] sm:$0xff] %vm45, %v96
    %114 = vst.msk [vmem:[%s111 + $0x22] sm:$0xff] %vm45, %v97
    %115 = vst.msk [vmem:[%s111 + $0x32] sm:$0xff] %vm45, %v98
    %116 = vst.msk [vmem:[%s111 + $0x42] sm:$0xff] %vm45, %v99
    %117 = vst.msk [vmem:[%s111 + $0x52] sm:$0xff] %vm45, %v100
    %118 = vst.msk [vmem:[%s111 + $0x62] sm:$0xff] %vm45, %v101
    %119 = vst.msk [vmem:[%s111 + $0x72] sm:$0xff] %vm45, %v102
    %120 = vst.msk [vmem:[%s111 + $0xc2] sm:$0xff] %vm45, %v103
    %121 = vst.msk [vmem:[%s111 + $0xd2] sm:$0xff] %vm45, %v104
    %122 = vst.msk [vmem:[%s111 + $0xe2] sm:$0xff] %vm45, %v105
    %123 = vst.msk [vmem:[%s111 + $0xf2] sm:$0xff] %vm45, %v106
    %124 = vst.msk [vmem:[%s111 + $0x102] sm:$0xff] %vm45, %v107
    %125 = vst.msk [vmem:[%s111 + $0x112] sm:$0xff] %vm45, %v108
    %126 = vst.msk [vmem:[%s111 + $0x122] sm:$0xff] %vm45, %v109
    %127 = vst.msk [vmem:[%s111 + $0x132] sm:$0xff] %vm45, %v110
    %128 = vst [vmem:[#allocation3] sm:$0xff] 0.0
    %129 = vst [vmem:[#allocation3 + $0x8] sm:$0xff] 0.0
    %130 = vst [vmem:[#allocation3 + $0x10] sm:$0xff] 0.0
    %131 = vst [vmem:[#allocation3 + $0x18] sm:$0xff] 0.0
    %132 = vst [vmem:[#allocation3 + $0x20] sm:$0xff] 0.0
    %133 = vst [vmem:[#allocation3 + $0x28] sm:$0xff] 0.0
    %134 = vst [vmem:[#allocation3 + $0x30] sm:$0xff] 0.0
    %135 = vst [vmem:[#allocation3 + $0x38] sm:$0xff] 0.0
    %136 = vst [vmem:[#allocation3 + $0x40] sm:$0xff] 0.0
    %137 = vst [vmem:[#allocation3 + $0x48] sm:$0xff] 0.0
    %138 = vst [vmem:[#allocation3 + $0x50] sm:$0xff] 0.0
    %139 = vst [vmem:[#allocation3 + $0x58] sm:$0xff] 0.0
    %140 = vst [vmem:[#allocation3 + $0x60] sm:$0xff] 0.0
    %141 = vst [vmem:[#allocation3 + $0x68] sm:$0xff] 0.0
    %142 = vst [vmem:[#allocation3 + $0x70] sm:$0xff] 0.0
    %143 = vst [vmem:[#allocation3 + $0x78] sm:$0xff] 0.0
    %v144 = vld [vmem:[#allocation2] sm:$0xff]
    %v145 = vld [vmem:[#allocation2 + $0x10] sm:$0xff]
    %v146 = vld [vmem:[#allocation2 + $0x20] sm:$0xff]
    %v147 = vld [vmem:[#allocation2 + $0x30] sm:$0xff]
    %v148 = vld [vmem:[#allocation2 + $0x40] sm:$0xff]
    %v149 = vld [vmem:[#allocation2 + $0x50] sm:$0xff]
    %v150 = vld [vmem:[#allocation2 + $0x60] sm:$0xff]
    %v151 = vld [vmem:[#allocation2 + $0x70] sm:$0xff]
    %v152 = vld [vmem:[#allocation2 + $0xc0] sm:$0xff]
    %v153 = vld [vmem:[#allocation2 + $0xd0] sm:$0xff]
    %v154 = vld [vmem:[#allocation2 + $0xe0] sm:$0xff]
    %v155 = vld [vmem:[#allocation2 + $0xf0] sm:$0xff]
    %v156 = vld [vmem:[#allocation2 + $0x100] sm:$0xff]
    %v157 = vld [vmem:[#allocation2 + $0x110] sm:$0xff]
    %v158 = vld [vmem:[#allocation2 + $0x120] sm:$0xff]
    %v159 = vld [vmem:[#allocation2 + $0x130] sm:$0xff]
    %160 = vst.msk [vmem:[#allocation3] sm:$0xff] %vm45, %v144
    %161 = vst.msk [vmem:[#allocation3 + $0x8] sm:$0xff] %vm45, %v145
    %162 = vst.msk [vmem:[#allocation3 + $0x10] sm:$0xff] %vm45, %v146
    %163 = vst.msk [vmem:[#allocation3 + $0x18] sm:$0xff] %vm45, %v147
    %164 = vst.msk [vmem:[#allocation3 + $0x20] sm:$0xff] %vm45, %v148
    %165 = vst.msk [vmem:[#allocation3 + $0x28] sm:$0xff] %vm45, %v149
    %166 = vst.msk [vmem:[#allocation3 + $0x30] sm:$0xff] %vm45, %v150
    %167 = vst.msk [vmem:[#allocation3 + $0x38] sm:$0xff] %vm45, %v151
    %168 = vst.msk [vmem:[#allocation3 + $0x40] sm:$0xff] %vm45, %v152
    %169 = vst.msk [vmem:[#allocation3 + $0x48] sm:$0xff] %vm45, %v153
    %170 = vst.msk [vmem:[#allocation3 + $0x50] sm:$0xff] %vm45, %v154
    %171 = vst.msk [vmem:[#allocation3 + $0x58] sm:$0xff] %vm45, %v155
    %172 = vst.msk [vmem:[#allocation3 + $0x60] sm:$0xff] %vm45, %v156
    %173 = vst.msk [vmem:[#allocation3 + $0x68] sm:$0xff] %vm45, %v157
    %174 = vst.msk [vmem:[#allocation3 + $0x70] sm:$0xff] %vm45, %v158
    %175 = vst.msk [vmem:[#allocation3 + $0x78] sm:$0xff] %vm45, %v159
    %v176 = vld [vmem:[#allocation2 + $0x1] sm:$0xff]
    %v177 = vld [vmem:[#allocation2 + $0x11] sm:$0xff]
    %v178 = vld [vmem:[#allocation2 + $0x21] sm:$0xff]
    %v179 = vld [vmem:[#allocation2 + $0x31] sm:$0xff]
    %v180 = vld [vmem:[#allocation2 + $0x41] sm:$0xff]
    %v181 = vld [vmem:[#allocation2 + $0x51] sm:$0xff]
    %v182 = vld [vmem:[#allocation2 + $0x61] sm:$0xff]
    %v183 = vld [vmem:[#allocation2 + $0x71] sm:$0xff]
    %v184 = vld [vmem:[#allocation2 + $0xc1] sm:$0xff]
    %v185 = vld [vmem:[#allocation2 + $0xd1] sm:$0xff]
    %v186 = vld [vmem:[#allocation2 + $0xe1] sm:$0xff]
    %v187 = vld [vmem:[#allocation2 + $0xf1] sm:$0xff]
    %v188 = vld [vmem:[#allocation2 + $0x101] sm:$0xff]
    %v189 = vld [vmem:[#allocation2 + $0x111] sm:$0xff]
    %v190 = vld [vmem:[#allocation2 + $0x121] sm:$0xff]
    %v191 = vld [vmem:[#allocation2 + $0x131] sm:$0xff]
    %208 = vrot.lane.b32.xlu0 %v176, 4
    %v209 = vpop.permute.xlu0 %208
    %210 = vrot.lane.b32.xlu0 %v177, 4
    %v211 = vpop.permute.xlu0 %210
    %212 = vrot.lane.b32.xlu0 %v178, 4
    %v213 = vpop.permute.xlu0 %212
    %214 = vrot.lane.b32.xlu0 %v179, 4
    %v215 = vpop.permute.xlu0 %214
    %216 = vrot.lane.b32.xlu0 %v180, 4
    %v217 = vpop.permute.xlu0 %216
    %218 = vrot.lane.b32.xlu0 %v181, 4
    %v219 = vpop.permute.xlu0 %218
    %220 = vrot.lane.b32.xlu0 %v182, 4
    %v221 = vpop.permute.xlu0 %220
    %222 = vrot.lane.b32.xlu0 %v183, 4
    %v223 = vpop.permute.xlu0 %222
    %224 = vrot.lane.b32.xlu0 %v184, 4
    %v225 = vpop.permute.xlu0 %224
    %226 = vrot.lane.b32.xlu0 %v185, 4
    %v227 = vpop.permute.xlu0 %226
    %228 = vrot.lane.b32.xlu0 %v186, 4
    %v229 = vpop.permute.xlu0 %228
    %230 = vrot.lane.b32.xlu0 %v187, 4
    %v231 = vpop.permute.xlu0 %230
    %232 = vrot.lane.b32.xlu0 %v188, 4
    %v233 = vpop.permute.xlu0 %232
    %234 = vrot.lane.b32.xlu0 %v189, 4
    %v235 = vpop.permute.xlu0 %234
    %236 = vrot.lane.b32.xlu0 %v190, 4
    %v237 = vpop.permute.xlu0 %236
    %238 = vrot.lane.b32.xlu0 %v191, 4
    %v239 = vpop.permute.xlu0 %238
    %vm256 = vcmask 64544
    %257 = vst.msk [vmem:[#allocation3] sm:$0xff] %vm256, %v209
    %258 = vst.msk [vmem:[#allocation3 + $0x8] sm:$0xff] %vm256, %v211
    %259 = vst.msk [vmem:[#allocation3 + $0x10] sm:$0xff] %vm256, %v213
    %260 = vst.msk [vmem:[#allocation3 + $0x18] sm:$0xff] %vm256, %v215
    %261 = vst.msk [vmem:[#allocation3 + $0x20] sm:$0xff] %vm256, %v217
    %262 = vst.msk [vmem:[#allocation3 + $0x28] sm:$0xff] %vm256, %v219
    %263 = vst.msk [vmem:[#allocation3 + $0x30] sm:$0xff] %vm256, %v221
    %264 = vst.msk [vmem:[#allocation3 + $0x38] sm:$0xff] %vm256, %v223
    %265 = vst.msk [vmem:[#allocation3 + $0x40] sm:$0xff] %vm256, %v225
    %266 = vst.msk [vmem:[#allocation3 + $0x48] sm:$0xff] %vm256, %v227
    %267 = vst.msk [vmem:[#allocation3 + $0x50] sm:$0xff] %vm256, %v229
    %268 = vst.msk [vmem:[#allocation3 + $0x58] sm:$0xff] %vm256, %v231
    %269 = vst.msk [vmem:[#allocation3 + $0x60] sm:$0xff] %vm256, %v233
    %270 = vst.msk [vmem:[#allocation3 + $0x68] sm:$0xff] %vm256, %v235
    %271 = vst.msk [vmem:[#allocation3 + $0x70] sm:$0xff] %vm256, %v237
    %272 = vst.msk [vmem:[#allocation3 + $0x78] sm:$0xff] %vm256, %v239
    %v273 = vld [vmem:[#allocation2 + $0x2] sm:$0xff]
    %v274 = vld [vmem:[#allocation2 + $0x12] sm:$0xff]
    %v275 = vld [vmem:[#allocation2 + $0x22] sm:$0xff]
    %v276 = vld [vmem:[#allocation2 + $0x32] sm:$0xff]
    %v277 = vld [vmem:[#allocation2 + $0x42] sm:$0xff]
    %v278 = vld [vmem:[#allocation2 + $0x52] sm:$0xff]
    %v279 = vld [vmem:[#allocation2 + $0x62] sm:$0xff]
    %v280 = vld [vmem:[#allocation2 + $0x72] sm:$0xff]
    %v281 = vld [vmem:[#allocation2 + $0xc2] sm:$0xff]
    %v282 = vld [vmem:[#allocation2 + $0xd2] sm:$0xff]
    %v283 = vld [vmem:[#allocation2 + $0xe2] sm:$0xff]
    %v284 = vld [vmem:[#allocation2 + $0xf2] sm:$0xff]
    %v285 = vld [vmem:[#allocation2 + $0x102] sm:$0xff]
    %v286 = vld [vmem:[#allocation2 + $0x112] sm:$0xff]
    %v287 = vld [vmem:[#allocation2 + $0x122] sm:$0xff]
    %v288 = vld [vmem:[#allocation2 + $0x132] sm:$0xff]
    %305 = vrot.lane.b32.xlu0 %v273, 8
    %v306 = vpop.permute.xlu0 %305
    %307 = vrot.lane.b32.xlu0 %v274, 8
    %v308 = vpop.permute.xlu0 %307
    %309 = vrot.lane.b32.xlu0 %v275, 8
    %v310 = vpop.permute.xlu0 %309
    %311 = vrot.lane.b32.xlu0 %v276, 8
    %v312 = vpop.permute.xlu0 %311
    %313 = vrot.lane.b32.xlu0 %v277, 8
    %v314 = vpop.permute.xlu0 %313
    %315 = vrot.lane.b32.xlu0 %v278, 8
    %v316 = vpop.permute.xlu0 %315
    %317 = vrot.lane.b32.xlu0 %v279, 8
    %v318 = vpop.permute.xlu0 %317
    %319 = vrot.lane.b32.xlu0 %v280, 8
    %v320 = vpop.permute.xlu0 %319
    %321 = vrot.lane.b32.xlu0 %v281, 8
    %v322 = vpop.permute.xlu0 %321
    %323 = vrot.lane.b32.xlu0 %v282, 8
    %v324 = vpop.permute.xlu0 %323
    %325 = vrot.lane.b32.xlu0 %v283, 8
    %v326 = vpop.permute.xlu0 %325
    %327 = vrot.lane.b32.xlu0 %v284, 8
    %v328 = vpop.permute.xlu0 %327
    %329 = vrot.lane.b32.xlu0 %v285, 8
    %v330 = vpop.permute.xlu0 %329
    %331 = vrot.lane.b32.xlu0 %v286, 8
    %v332 = vpop.permute.xlu0 %331
    %333 = vrot.lane.b32.xlu0 %v287, 8
    %v334 = vpop.permute.xlu0 %333
    %335 = vrot.lane.b32.xlu0 %v288, 8
    %v336 = vpop.permute.xlu0 %335
    %vm353 = vcmask 97344
    %354 = vst.msk [vmem:[#allocation3] sm:$0xff] %vm353, %v306
    %355 = vst.msk [vmem:[#allocation3 + $0x8] sm:$0xff] %vm353, %v308
    %356 = vst.msk [vmem:[#allocation3 + $0x10] sm:$0xff] %vm353, %v310
    %357 = vst.msk [vmem:[#allocation3 + $0x18] sm:$0xff] %vm353, %v312
    %358 = vst.msk [vmem:[#allocation3 + $0x20] sm:$0xff] %vm353, %v314
    %359 = vst.msk [vmem:[#allocation3 + $0x28] sm:$0xff] %vm353, %v316
    %360 = vst.msk [vmem:[#allocation3 + $0x30] sm:$0xff] %vm353, %v318
    %361 = vst.msk [vmem:[#allocation3 + $0x38] sm:$0xff] %vm353, %v320
    %362 = vst.msk [vmem:[#allocation3 + $0x40] sm:$0xff] %vm353, %v322
    %363 = vst.msk [vmem:[#allocation3 + $0x48] sm:$0xff] %vm353, %v324
    %364 = vst.msk [vmem:[#allocation3 + $0x50] sm:$0xff] %vm353, %v326
    %365 = vst.msk [vmem:[#allocation3 + $0x58] sm:$0xff] %vm353, %v328
    %366 = vst.msk [vmem:[#allocation3 + $0x60] sm:$0xff] %vm353, %v330
    %367 = vst.msk [vmem:[#allocation3 + $0x68] sm:$0xff] %vm353, %v332
    %368 = vst.msk [vmem:[#allocation3 + $0x70] sm:$0xff] %vm353, %v334
    %369 = vst.msk [vmem:[#allocation3 + $0x78] sm:$0xff] %vm353, %v336
    %v370 = vld [vmem:[#allocation2 + $0x3] sm:$0xff]
    %v371 = vld [vmem:[#allocation2 + $0x13] sm:$0xff]
    %v372 = vld [vmem:[#allocation2 + $0x23] sm:$0xff]
    %v373 = vld [vmem:[#allocation2 + $0x33] sm:$0xff]
    %v374 = vld [vmem:[#allocation2 + $0x43] sm:$0xff]
    %v375 = vld [vmem:[#allocation2 + $0x53] sm:$0xff]
    %v376 = vld [vmem:[#allocation2 + $0x63] sm:$0xff]
    %v377 = vld [vmem:[#allocation2 + $0x73] sm:$0xff]
    %v378 = vld [vmem:[#allocation2 + $0xc3] sm:$0xff]
    %v379 = vld [vmem:[#allocation2 + $0xd3] sm:$0xff]
    %v380 = vld [vmem:[#allocation2 + $0xe3] sm:$0xff]
    %v381 = vld [vmem:[#allocation2 + $0xf3] sm:$0xff]
    %v382 = vld [vmem:[#allocation2 + $0x103] sm:$0xff]
    %v383 = vld [vmem:[#allocation2 + $0x113] sm:$0xff]
    %v384 = vld [vmem:[#allocation2 + $0x123] sm:$0xff]
    %v385 = vld [vmem:[#allocation2 + $0x133] sm:$0xff]
    %402 = vrot.lane.b32.xlu0 %v370, 12
    %v403 = vpop.permute.xlu0 %402
    %404 = vrot.lane.b32.xlu0 %v371, 12
    %v405 = vpop.permute.xlu0 %404
    %406 = vrot.lane.b32.xlu0 %v372, 12
    %v407 = vpop.permute.xlu0 %406
    %408 = vrot.lane.b32.xlu0 %v373, 12
    %v409 = vpop.permute.xlu0 %408
    %410 = vrot.lane.b32.xlu0 %v374, 12
    %v411 = vpop.permute.xlu0 %410
    %412 = vrot.lane.b32.xlu0 %v375, 12
    %v413 = vpop.permute.xlu0 %412
    %414 = vrot.lane.b32.xlu0 %v376, 12
    %v415 = vpop.permute.xlu0 %414
    %416 = vrot.lane.b32.xlu0 %v377, 12
    %v417 = vpop.permute.xlu0 %416
    %418 = vrot.lane.b32.xlu0 %v378, 12
    %v419 = vpop.permute.xlu0 %418
    %420 = vrot.lane.b32.xlu0 %v379, 12
    %v421 = vpop.permute.xlu0 %420
    %422 = vrot.lane.b32.xlu0 %v380, 12
    %v423 = vpop.permute.xlu0 %422
    %424 = vrot.lane.b32.xlu0 %v381, 12
    %v425 = vpop.permute.xlu0 %424
    %426 = vrot.lane.b32.xlu0 %v382, 12
    %v427 = vpop.permute.xlu0 %426
    %428 = vrot.lane.b32.xlu0 %v383, 12
    %v429 = vpop.permute.xlu0 %428
    %430 = vrot.lane.b32.xlu0 %v384, 12
    %v431 = vpop.permute.xlu0 %430
    %432 = vrot.lane.b32.xlu0 %v385, 12
    %v433 = vpop.permute.xlu0 %432
    %vm450 = vcmask 130144
    %451 = vst.msk [vmem:[#allocation3] sm:$0xff] %vm450, %v403
    %452 = vst.msk [vmem:[#allocation3 + $0x8] sm:$0xff] %vm450, %v405
    %453 = vst.msk [vmem:[#allocation3 + $0x10] sm:$0xff] %vm450, %v407
    %454 = vst.msk [vmem:[#allocation3 + $0x18] sm:$0xff] %vm450, %v409
    %455 = vst.msk [vmem:[#allocation3 + $0x20] sm:$0xff] %vm450, %v411
    %456 = vst.msk [vmem:[#allocation3 + $0x28] sm:$0xff] %vm450, %v413
    %457 = vst.msk [vmem:[#allocation3 + $0x30] sm:$0xff] %vm450, %v415
    %458 = vst.msk [vmem:[#allocation3 + $0x38] sm:$0xff] %vm450, %v417
    %459 = vst.msk [vmem:[#allocation3 + $0x40] sm:$0xff] %vm450, %v419
    %460 = vst.msk [vmem:[#allocation3 + $0x48] sm:$0xff] %vm450, %v421
    %461 = vst.msk [vmem:[#allocation3 + $0x50] sm:$0xff] %vm450, %v423
    %462 = vst.msk [vmem:[#allocation3 + $0x58] sm:$0xff] %vm450, %v425
    %463 = vst.msk [vmem:[#allocation3 + $0x60] sm:$0xff] %vm450, %v427
    %464 = vst.msk [vmem:[#allocation3 + $0x68] sm:$0xff] %vm450, %v429
    %465 = vst.msk [vmem:[#allocation3 + $0x70] sm:$0xff] %vm450, %v431
    %466 = vst.msk [vmem:[#allocation3 + $0x78] sm:$0xff] %vm450, %v433
    %v467 = vld [vmem:[#allocation2 + $0x4] sm:$0xff]
    %v468 = vld [vmem:[#allocation2 + $0x14] sm:$0xff]
    %v469 = vld [vmem:[#allocation2 + $0x24] sm:$0xff]
    %v470 = vld [vmem:[#allocation2 + $0x34] sm:$0xff]
    %v471 = vld [vmem:[#allocation2 + $0x44] sm:$0xff]
    %v472 = vld [vmem:[#allocation2 + $0x54] sm:$0xff]
    %v473 = vld [vmem:[#allocation2 + $0x64] sm:$0xff]
    %v474 = vld [vmem:[#allocation2 + $0x74] sm:$0xff]
    %v475 = vld [vmem:[#allocation2 + $0xc4] sm:$0xff]
    %v476 = vld [vmem:[#allocation2 + $0xd4] sm:$0xff]
    %v477 = vld [vmem:[#allocation2 + $0xe4] sm:$0xff]
    %v478 = vld [vmem:[#allocation2 + $0xf4] sm:$0xff]
    %v479 = vld [vmem:[#allocation2 + $0x104] sm:$0xff]
    %v480 = vld [vmem:[#allocation2 + $0x114] sm:$0xff]
    %v481 = vld [vmem:[#allocation2 + $0x124] sm:$0xff]
    %v482 = vld [vmem:[#allocation2 + $0x134] sm:$0xff]
    %499 = vrot.lane.b32.xlu0 %v467, 16
    %v500 = vpop.permute.xlu0 %499
    %501 = vrot.lane.b32.xlu0 %v468, 16
    %v502 = vpop.permute.xlu0 %501
    %503 = vrot.lane.b32.xlu0 %v469, 16
    %v504 = vpop.permute.xlu0 %503
    %505 = vrot.lane.b32.xlu0 %v470, 16
    %v506 = vpop.permute.xlu0 %505
    %507 = vrot.lane.b32.xlu0 %v471, 16
    %v508 = vpop.permute.xlu0 %507
    %509 = vrot.lane.b32.xlu0 %v472, 16
    %v510 = vpop.permute.xlu0 %509
    %511 = vrot.lane.b32.xlu0 %v473, 16
    %v512 = vpop.permute.xlu0 %511
    %513 = vrot.lane.b32.xlu0 %v474, 16
    %v514 = vpop.permute.xlu0 %513
    %515 = vrot.lane.b32.xlu0 %v475, 16
    %v516 = vpop.permute.xlu0 %515
    %517 = vrot.lane.b32.xlu0 %v476, 16
    %v518 = vpop.permute.xlu0 %517
    %519 = vrot.lane.b32.xlu0 %v477, 16
    %v520 = vpop.permute.xlu0 %519
    %521 = vrot.lane.b32.xlu0 %v478, 16
    %v522 = vpop.permute.xlu0 %521
    %523 = vrot.lane.b32.xlu0 %v479, 16
    %v524 = vpop.permute.xlu0 %523
    %525 = vrot.lane.b32.xlu0 %v480, 16
    %v526 = vpop.permute.xlu0 %525
    %527 = vrot.lane.b32.xlu0 %v481, 16
    %v528 = vpop.permute.xlu0 %527
    %529 = vrot.lane.b32.xlu0 %v482, 16
    %v530 = vpop.permute.xlu0 %529
    %vm547 = vcmask 162944
    %548 = vst.msk [vmem:[#allocation3] sm:$0xff] %vm547, %v500
    %549 = vst.msk [vmem:[#allocation3 + $0x8] sm:$0xff] %vm547, %v502
    %550 = vst.msk [vmem:[#allocation3 + $0x10] sm:$0xff] %vm547, %v504
    %551 = vst.msk [vmem:[#allocation3 + $0x18] sm:$0xff] %vm547, %v506
    %552 = vst.msk [vmem:[#allocation3 + $0x20] sm:$0xff] %vm547, %v508
    %553 = vst.msk [vmem:[#allocation3 + $0x28] sm:$0xff] %vm547, %v510
    %554 = vst.msk [vmem:[#allocation3 + $0x30] sm:$0xff] %vm547, %v512
    %555 = vst.msk [vmem:[#allocation3 + $0x38] sm:$0xff] %vm547, %v514
    %556 = vst.msk [vmem:[#allocation3 + $0x40] sm:$0xff] %vm547, %v516
    %557 = vst.msk [vmem:[#allocation3 + $0x48] sm:$0xff] %vm547, %v518
    %558 = vst.msk [vmem:[#allocation3 + $0x50] sm:$0xff] %vm547, %v520
    %559 = vst.msk [vmem:[#allocation3 + $0x58] sm:$0xff] %vm547, %v522
    %560 = vst.msk [vmem:[#allocation3 + $0x60] sm:$0xff] %vm547, %v524
    %561 = vst.msk [vmem:[#allocation3 + $0x68] sm:$0xff] %vm547, %v526
    %562 = vst.msk [vmem:[#allocation3 + $0x70] sm:$0xff] %vm547, %v528
    %563 = vst.msk [vmem:[#allocation3 + $0x78] sm:$0xff] %vm547, %v530
    %s564 = scalar_lea.vmem [#allocation2], 16
    %v565 = vld [vmem:[%s564] sm:$0xff]
    %v566 = vld [vmem:[%s564 + $0x10] sm:$0xff]
    %v567 = vld [vmem:[%s564 + $0x20] sm:$0xff]
    %v568 = vld [vmem:[%s564 + $0x30] sm:$0xff]
    %v569 = vld [vmem:[%s564 + $0x40] sm:$0xff]
    %v570 = vld [vmem:[%s564 + $0x50] sm:$0xff]
    %v571 = vld [vmem:[%s564 + $0x60] sm:$0xff]
    %v572 = vld [vmem:[%s564 + $0x70] sm:$0xff]
    %v573 = vld [vmem:[%s564 + $0xc0] sm:$0xff]
    %v574 = vld [vmem:[%s564 + $0xd0] sm:$0xff]
    %v575 = vld [vmem:[%s564 + $0xe0] sm:$0xff]
    %v576 = vld [vmem:[%s564 + $0xf0] sm:$0xff]
    %v577 = vld [vmem:[%s564 + $0x100] sm:$0xff]
    %v578 = vld [vmem:[%s564 + $0x110] sm:$0xff]
    %v579 = vld [vmem:[%s564 + $0x120] sm:$0xff]
    %v580 = vld [vmem:[%s564 + $0x130] sm:$0xff]
    %597 = vrot.lane.b32.xlu0 %v565, 20
    %v598 = vpop.permute.xlu0 %597
    %599 = vrot.lane.b32.xlu0 %v566, 20
    %v600 = vpop.permute.xlu0 %599
    %601 = vrot.lane.b32.xlu0 %v567, 20
    %v602 = vpop.permute.xlu0 %601
    %603 = vrot.lane.b32.xlu0 %v568, 20
    %v604 = vpop.permute.xlu0 %603
    %605 = vrot.lane.b32.xlu0 %v569, 20
    %v606 = vpop.permute.xlu0 %605
    %607 = vrot.lane.b32.xlu0 %v570, 20
    %v608 = vpop.permute.xlu0 %607
    %609 = vrot.lane.b32.xlu0 %v571, 20
    %v610 = vpop.permute.xlu0 %609
    %611 = vrot.lane.b32.xlu0 %v572, 20
    %v612 = vpop.permute.xlu0 %611
    %613 = vrot.lane.b32.xlu0 %v573, 20
    %v614 = vpop.permute.xlu0 %613
    %615 = vrot.lane.b32.xlu0 %v574, 20
    %v616 = vpop.permute.xlu0 %615
    %617 = vrot.lane.b32.xlu0 %v575, 20
    %v618 = vpop.permute.xlu0 %617
    %619 = vrot.lane.b32.xlu0 %v576, 20
    %v620 = vpop.permute.xlu0 %619
    %621 = vrot.lane.b32.xlu0 %v577, 20
    %v622 = vpop.permute.xlu0 %621
    %623 = vrot.lane.b32.xlu0 %v578, 20
    %v624 = vpop.permute.xlu0 %623
    %625 = vrot.lane.b32.xlu0 %v579, 20
    %v626 = vpop.permute.xlu0 %625
    %627 = vrot.lane.b32.xlu0 %v580, 20
    %v628 = vpop.permute.xlu0 %627
    %vm645 = vcmask 195744
    %646 = vst.msk [vmem:[#allocation3] sm:$0xff] %vm645, %v598
    %647 = vst.msk [vmem:[#allocation3 + $0x8] sm:$0xff] %vm645, %v600
    %648 = vst.msk [vmem:[#allocation3 + $0x10] sm:$0xff] %vm645, %v602
    %649 = vst.msk [vmem:[#allocation3 + $0x18] sm:$0xff] %vm645, %v604
    %650 = vst.msk [vmem:[#allocation3 + $0x20] sm:$0xff] %vm645, %v606
    %651 = vst.msk [vmem:[#allocation3 + $0x28] sm:$0xff] %vm645, %v608
    %652 = vst.msk [vmem:[#allocation3 + $0x30] sm:$0xff] %vm645, %v610
    %653 = vst.msk [vmem:[#allocation3 + $0x38] sm:$0xff] %vm645, %v612
    %654 = vst.msk [vmem:[#allocation3 + $0x40] sm:$0xff] %vm645, %v614
    %655 = vst.msk [vmem:[#allocation3 + $0x48] sm:$0xff] %vm645, %v616
    %656 = vst.msk [vmem:[#allocation3 + $0x50] sm:$0xff] %vm645, %v618
    %657 = vst.msk [vmem:[#allocation3 + $0x58] sm:$0xff] %vm645, %v620
    %658 = vst.msk [vmem:[#allocation3 + $0x60] sm:$0xff] %vm645, %v622
    %659 = vst.msk [vmem:[#allocation3 + $0x68] sm:$0xff] %vm645, %v624
    %660 = vst.msk [vmem:[#allocation3 + $0x70] sm:$0xff] %vm645, %v626
    %661 = vst.msk [vmem:[#allocation3 + $0x78] sm:$0xff] %vm645, %v628
    %v662 = vld [vmem:[%s564 + $0x1] sm:$0xff]
    %v663 = vld [vmem:[%s564 + $0x11] sm:$0xff]
    %v664 = vld [vmem:[%s564 + $0x21] sm:$0xff]
    %v665 = vld [vmem:[%s564 + $0x31] sm:$0xff]
    %v666 = vld [vmem:[%s564 + $0x41] sm:$0xff]
    %v667 = vld [vmem:[%s564 + $0x51] sm:$0xff]
    %v668 = vld [vmem:[%s564 + $0x61] sm:$0xff]
    %v669 = vld [vmem:[%s564 + $0x71] sm:$0xff]
    %v670 = vld [vmem:[%s564 + $0xc1] sm:$0xff]
    %v671 = vld [vmem:[%s564 + $0xd1] sm:$0xff]
    %v672 = vld [vmem:[%s564 + $0xe1] sm:$0xff]
    %v673 = vld [vmem:[%s564 + $0xf1] sm:$0xff]
    %v674 = vld [vmem:[%s564 + $0x101] sm:$0xff]
    %v675 = vld [vmem:[%s564 + $0x111] sm:$0xff]
    %v676 = vld [vmem:[%s564 + $0x121] sm:$0xff]
    %v677 = vld [vmem:[%s564 + $0x131] sm:$0xff]
    %694 = vrot.lane.b32.xlu0 %v662, 24
    %v695 = vpop.permute.xlu0 %694
    %696 = vrot.lane.b32.xlu0 %v663, 24
    %v697 = vpop.permute.xlu0 %696
    %698 = vrot.lane.b32.xlu0 %v664, 24
    %v699 = vpop.permute.xlu0 %698
    %700 = vrot.lane.b32.xlu0 %v665, 24
    %v701 = vpop.permute.xlu0 %700
    %702 = vrot.lane.b32.xlu0 %v666, 24
    %v703 = vpop.permute.xlu0 %702
    %704 = vrot.lane.b32.xlu0 %v667, 24
    %v705 = vpop.permute.xlu0 %704
    %706 = vrot.lane.b32.xlu0 %v668, 24
    %v707 = vpop.permute.xlu0 %706
    %708 = vrot.lane.b32.xlu0 %v669, 24
    %v709 = vpop.permute.xlu0 %708
    %710 = vrot.lane.b32.xlu0 %v670, 24
    %v711 = vpop.permute.xlu0 %710
    %712 = vrot.lane.b32.xlu0 %v671, 24
    %v713 = vpop.permute.xlu0 %712
    %714 = vrot.lane.b32.xlu0 %v672, 24
    %v715 = vpop.permute.xlu0 %714
    %716 = vrot.lane.b32.xlu0 %v673, 24
    %v717 = vpop.permute.xlu0 %716
    %718 = vrot.lane.b32.xlu0 %v674, 24
    %v719 = vpop.permute.xlu0 %718
    %720 = vrot.lane.b32.xlu0 %v675, 24
    %v721 = vpop.permute.xlu0 %720
    %722 = vrot.lane.b32.xlu0 %v676, 24
    %v723 = vpop.permute.xlu0 %722
    %724 = vrot.lane.b32.xlu0 %v677, 24
    %v725 = vpop.permute.xlu0 %724
    %vm742 = vcmask 228544
    %743 = vst.msk [vmem:[#allocation3] sm:$0xff] %vm742, %v695
    %744 = vst.msk [vmem:[#allocation3 + $0x8] sm:$0xff] %vm742, %v697
    %745 = vst.msk [vmem:[#allocation3 + $0x10] sm:$0xff] %vm742, %v699
    %746 = vst.msk [vmem:[#allocation3 + $0x18] sm:$0xff] %vm742, %v701
    %747 = vst.msk [vmem:[#allocation3 + $0x20] sm:$0xff] %vm742, %v703
    %748 = vst.msk [vmem:[#allocation3 + $0x28] sm:$0xff] %vm742, %v705
    %749 = vst.msk [vmem:[#allocation3 + $0x30] sm:$0xff] %vm742, %v707
    %750 = vst.msk [vmem:[#allocation3 + $0x38] sm:$0xff] %vm742, %v709
    %751 = vst.msk [vmem:[#allocation3 + $0x40] sm:$0xff] %vm742, %v711
    %752 = vst.msk [vmem:[#allocation3 + $0x48] sm:$0xff] %vm742, %v713
    %753 = vst.msk [vmem:[#allocation3 + $0x50] sm:$0xff] %vm742, %v715
    %754 = vst.msk [vmem:[#allocation3 + $0x58] sm:$0xff] %vm742, %v717
    %755 = vst.msk [vmem:[#allocation3 + $0x60] sm:$0xff] %vm742, %v719
    %756 = vst.msk [vmem:[#allocation3 + $0x68] sm:$0xff] %vm742, %v721
    %757 = vst.msk [vmem:[#allocation3 + $0x70] sm:$0xff] %vm742, %v723
    %758 = vst.msk [vmem:[#allocation3 + $0x78] sm:$0xff] %vm742, %v725
    %v759 = vld [vmem:[%s564 + $0x2] sm:$0xff]
    %v760 = vld [vmem:[%s564 + $0x12] sm:$0xff]
    %v761 = vld [vmem:[%s564 + $0x22] sm:$0xff]
    %v762 = vld [vmem:[%s564 + $0x32] sm:$0xff]
    %v763 = vld [vmem:[%s564 + $0x42] sm:$0xff]
    %v764 = vld [vmem:[%s564 + $0x52] sm:$0xff]
    %v765 = vld [vmem:[%s564 + $0x62] sm:$0xff]
    %v766 = vld [vmem:[%s564 + $0x72] sm:$0xff]
    %v767 = vld [vmem:[%s564 + $0xc2] sm:$0xff]
    %v768 = vld [vmem:[%s564 + $0xd2] sm:$0xff]
    %v769 = vld [vmem:[%s564 + $0xe2] sm:$0xff]
    %v770 = vld [vmem:[%s564 + $0xf2] sm:$0xff]
    %v771 = vld [vmem:[%s564 + $0x102] sm:$0xff]
    %v772 = vld [vmem:[%s564 + $0x112] sm:$0xff]
    %v773 = vld [vmem:[%s564 + $0x122] sm:$0xff]
    %v774 = vld [vmem:[%s564 + $0x132] sm:$0xff]
    %791 = vrot.lane.b32.xlu0 %v759, 28
    %v792 = vpop.permute.xlu0 %791
    %793 = vrot.lane.b32.xlu0 %v760, 28
    %v794 = vpop.permute.xlu0 %793
    %795 = vrot.lane.b32.xlu0 %v761, 28
    %v796 = vpop.permute.xlu0 %795
    %797 = vrot.lane.b32.xlu0 %v762, 28
    %v798 = vpop.permute.xlu0 %797
    %799 = vrot.lane.b32.xlu0 %v763, 28
    %v800 = vpop.permute.xlu0 %799
    %801 = vrot.lane.b32.xlu0 %v764, 28
    %v802 = vpop.permute.xlu0 %801
    %803 = vrot.lane.b32.xlu0 %v765, 28
    %v804 = vpop.permute.xlu0 %803
    %805 = vrot.lane.b32.xlu0 %v766, 28
    %v806 = vpop.permute.xlu0 %805
    %807 = vrot.lane.b32.xlu0 %v767, 28
    %v808 = vpop.permute.xlu0 %807
    %809 = vrot.lane.b32.xlu0 %v768, 28
    %v810 = vpop.permute.xlu0 %809
    %811 = vrot.lane.b32.xlu0 %v769, 28
    %v812 = vpop.permute.xlu0 %811
    %813 = vrot.lane.b32.xlu0 %v770, 28
    %v814 = vpop.permute.xlu0 %813
    %815 = vrot.lane.b32.xlu0 %v771, 28
    %v816 = vpop.permute.xlu0 %815
    %817 = vrot.lane.b32.xlu0 %v772, 28
    %v818 = vpop.permute.xlu0 %817
    %819 = vrot.lane.b32.xlu0 %v773, 28
    %v820 = vpop.permute.xlu0 %819
    %821 = vrot.lane.b32.xlu0 %v774, 28
    %v822 = vpop.permute.xlu0 %821
    %vm839 = vcmask 261344
    %840 = vst.msk [vmem:[#allocation3] sm:$0xff] %vm839, %v792
    %841 = vst.msk [vmem:[#allocation3 + $0x8] sm:$0xff] %vm839, %v794
    %842 = vst.msk [vmem:[#allocation3 + $0x10] sm:$0xff] %vm839, %v796
    %843 = vst.msk [vmem:[#allocation3 + $0x18] sm:$0xff] %vm839, %v798
    %844 = vst.msk [vmem:[#allocation3 + $0x20] sm:$0xff] %vm839, %v800
    %845 = vst.msk [vmem:[#allocation3 + $0x28] sm:$0xff] %vm839, %v802
    %846 = vst.msk [vmem:[#allocation3 + $0x30] sm:$0xff] %vm839, %v804
    %847 = vst.msk [vmem:[#allocation3 + $0x38] sm:$0xff] %vm839, %v806
    %848 = vst.msk [vmem:[#allocation3 + $0x40] sm:$0xff] %vm839, %v808
    %849 = vst.msk [vmem:[#allocation3 + $0x48] sm:$0xff] %vm839, %v810
    %850 = vst.msk [vmem:[#allocation3 + $0x50] sm:$0xff] %vm839, %v812
    %851 = vst.msk [vmem:[#allocation3 + $0x58] sm:$0xff] %vm839, %v814
    %852 = vst.msk [vmem:[#allocation3 + $0x60] sm:$0xff] %vm839, %v816
    %853 = vst.msk [vmem:[#allocation3 + $0x68] sm:$0xff] %vm839, %v818
    %854 = vst.msk [vmem:[#allocation3 + $0x70] sm:$0xff] %vm839, %v820
    %855 = vst.msk [vmem:[#allocation3 + $0x78] sm:$0xff] %vm839, %v822
    %v856 = vld [vmem:[%s564 + $0x3] sm:$0xff]
    %v857 = vld [vmem:[%s564 + $0x13] sm:$0xff]
    %v858 = vld [vmem:[%s564 + $0x23] sm:$0xff]
    %v859 = vld [vmem:[%s564 + $0x33] sm:$0xff]
    %v860 = vld [vmem:[%s564 + $0x43] sm:$0xff]
    %v861 = vld [vmem:[%s564 + $0x53] sm:$0xff]
    %v862 = vld [vmem:[%s564 + $0x63] sm:$0xff]
    %v863 = vld [vmem:[%s564 + $0x73] sm:$0xff]
    %v864 = vld [vmem:[%s564 + $0xc3] sm:$0xff]
    %v865 = vld [vmem:[%s564 + $0xd3] sm:$0xff]
    %v866 = vld [vmem:[%s564 + $0xe3] sm:$0xff]
    %v867 = vld [vmem:[%s564 + $0xf3] sm:$0xff]
    %v868 = vld [vmem:[%s564 + $0x103] sm:$0xff]
    %v869 = vld [vmem:[%s564 + $0x113] sm:$0xff]
    %v870 = vld [vmem:[%s564 + $0x123] sm:$0xff]
    %v871 = vld [vmem:[%s564 + $0x133] sm:$0xff]
    %888 = vrot.lane.b32.xlu0 %v856, 32
    %v889 = vpop.permute.xlu0 %888
    %890 = vrot.lane.b32.xlu0 %v857, 32
    %v891 = vpop.permute.xlu0 %890
    %892 = vrot.lane.b32.xlu0 %v858, 32
    %v893 = vpop.permute.xlu0 %892
    %894 = vrot.lane.b32.xlu0 %v859, 32
    %v895 = vpop.permute.xlu0 %894
    %896 = vrot.lane.b32.xlu0 %v860, 32
    %v897 = vpop.permute.xlu0 %896
    %898 = vrot.lane.b32.xlu0 %v861, 32
    %v899 = vpop.permute.xlu0 %898
    %900 = vrot.lane.b32.xlu0 %v862, 32
    %v901 = vpop.permute.xlu0 %900
    %902 = vrot.lane.b32.xlu0 %v863, 32
    %v903 = vpop.permute.xlu0 %902
    %904 = vrot.lane.b32.xlu0 %v864, 32
    %v905 = vpop.permute.xlu0 %904
    %906 = vrot.lane.b32.xlu0 %v865, 32
    %v907 = vpop.permute.xlu0 %906
    %908 = vrot.lane.b32.xlu0 %v866, 32
    %v909 = vpop.permute.xlu0 %908
    %910 = vrot.lane.b32.xlu0 %v867, 32
    %v911 = vpop.permute.xlu0 %910
    %912 = vrot.lane.b32.xlu0 %v868, 32
    %v913 = vpop.permute.xlu0 %912
    %914 = vrot.lane.b32.xlu0 %v869, 32
    %v915 = vpop.permute.xlu0 %914
    %916 = vrot.lane.b32.xlu0 %v870, 32
    %v917 = vpop.permute.xlu0 %916
    %918 = vrot.lane.b32.xlu0 %v871, 32
    %v919 = vpop.permute.xlu0 %918
    %vm936 = vcmask 294144
    %937 = vst.msk [vmem:[#allocation3] sm:$0xff] %vm936, %v889
    %938 = vst.msk [vmem:[#allocation3 + $0x8] sm:$0xff] %vm936, %v891
    %939 = vst.msk [vmem:[#allocation3 + $0x10] sm:$0xff] %vm936, %v893
    %940 = vst.msk [vmem:[#allocation3 + $0x18] sm:$0xff] %vm936, %v895
    %941 = vst.msk [vmem:[#allocation3 + $0x20] sm:$0xff] %vm936, %v897
    %942 = vst.msk [vmem:[#allocation3 + $0x28] sm:$0xff] %vm936, %v899
    %943 = vst.msk [vmem:[#allocation3 + $0x30] sm:$0xff] %vm936, %v901
    %944 = vst.msk [vmem:[#allocation3 + $0x38] sm:$0xff] %vm936, %v903
    %945 = vst.msk [vmem:[#allocation3 + $0x40] sm:$0xff] %vm936, %v905
    %946 = vst.msk [vmem:[#allocation3 + $0x48] sm:$0xff] %vm936, %v907
    %947 = vst.msk [vmem:[#allocation3 + $0x50] sm:$0xff] %vm936, %v909
    %948 = vst.msk [vmem:[#allocation3 + $0x58] sm:$0xff] %vm936, %v911
    %949 = vst.msk [vmem:[#allocation3 + $0x60] sm:$0xff] %vm936, %v913
    %950 = vst.msk [vmem:[#allocation3 + $0x68] sm:$0xff] %vm936, %v915
    %951 = vst.msk [vmem:[#allocation3 + $0x70] sm:$0xff] %vm936, %v917
    %952 = vst.msk [vmem:[#allocation3 + $0x78] sm:$0xff] %vm936, %v919
    %v953 = vld [vmem:[%s564 + $0x4] sm:$0xff]
    %v954 = vld [vmem:[%s564 + $0x14] sm:$0xff]
    %v955 = vld [vmem:[%s564 + $0x24] sm:$0xff]
    %v956 = vld [vmem:[%s564 + $0x34] sm:$0xff]
    %v957 = vld [vmem:[%s564 + $0x44] sm:$0xff]
    %v958 = vld [vmem:[%s564 + $0x54] sm:$0xff]
    %v959 = vld [vmem:[%s564 + $0x64] sm:$0xff]
    %v960 = vld [vmem:[%s564 + $0x74] sm:$0xff]
    %v961 = vld [vmem:[%s564 + $0xc4] sm:$0xff]
    %v962 = vld [vmem:[%s564 + $0xd4] sm:$0xff]
    %v963 = vld [vmem:[%s564 + $0xe4] sm:$0xff]
    %v964 = vld [vmem:[%s564 + $0xf4] sm:$0xff]
    %v965 = vld [vmem:[%s564 + $0x104] sm:$0xff]
    %v966 = vld [vmem:[%s564 + $0x114] sm:$0xff]
    %v967 = vld [vmem:[%s564 + $0x124] sm:$0xff]
    %v968 = vld [vmem:[%s564 + $0x134] sm:$0xff]
    %985 = vrot.lane.b32.xlu0 %v953, 36
    %v986 = vpop.permute.xlu0 %985
    %987 = vrot.lane.b32.xlu0 %v954, 36
    %v988 = vpop.permute.xlu0 %987
    %989 = vrot.lane.b32.xlu0 %v955, 36
    %v990 = vpop.permute.xlu0 %989
    %991 = vrot.lane.b32.xlu0 %v956, 36
    %v992 = vpop.permute.xlu0 %991
    %993 = vrot.lane.b32.xlu0 %v957, 36
    %v994 = vpop.permute.xlu0 %993
    %995 = vrot.lane.b32.xlu0 %v958, 36
    %v996 = vpop.permute.xlu0 %995
    %997 = vrot.lane.b32.xlu0 %v959, 36
    %v998 = vpop.permute.xlu0 %997
    %999 = vrot.lane.b32.xlu0 %v960, 36
    %v1000 = vpop.permute.xlu0 %999
    %1001 = vrot.lane.b32.xlu0 %v961, 36
    %v1002 = vpop.permute.xlu0 %1001
    %1003 = vrot.lane.b32.xlu0 %v962, 36
    %v1004 = vpop.permute.xlu0 %1003
    %1005 = vrot.lane.b32.xlu0 %v963, 36
    %v1006 = vpop.permute.xlu0 %1005
    %1007 = vrot.lane.b32.xlu0 %v964, 36
    %v1008 = vpop.permute.xlu0 %1007
    %1009 = vrot.lane.b32.xlu0 %v965, 36
    %v1010 = vpop.permute.xlu0 %1009
    %1011 = vrot.lane.b32.xlu0 %v966, 36
    %v1012 = vpop.permute.xlu0 %1011
    %1013 = vrot.lane.b32.xlu0 %v967, 36
    %v1014 = vpop.permute.xlu0 %1013
    %1015 = vrot.lane.b32.xlu0 %v968, 36
    %v1016 = vpop.permute.xlu0 %1015
    %vm1033 = vcmask 326944
    %1034 = vst.msk [vmem:[#allocation3] sm:$0xff] %vm1033, %v986
    %1035 = vst.msk [vmem:[#allocation3 + $0x8] sm:$0xff] %vm1033, %v988
    %1036 = vst.msk [vmem:[#allocation3 + $0x10] sm:$0xff] %vm1033, %v990
    %1037 = vst.msk [vmem:[#allocation3 + $0x18] sm:$0xff] %vm1033, %v992
    %1038 = vst.msk [vmem:[#allocation3 + $0x20] sm:$0xff] %vm1033, %v994
    %1039 = vst.msk [vmem:[#allocation3 + $0x28] sm:$0xff] %vm1033, %v996
    %1040 = vst.msk [vmem:[#allocation3 + $0x30] sm:$0xff] %vm1033, %v998
    %1041 = vst.msk [vmem:[#allocation3 + $0x38] sm:$0xff] %vm1033, %v1000
    %1042 = vst.msk [vmem:[#allocation3 + $0x40] sm:$0xff] %vm1033, %v1002
    %1043 = vst.msk [vmem:[#allocation3 + $0x48] sm:$0xff] %vm1033, %v1004
    %1044 = vst.msk [vmem:[#allocation3 + $0x50] sm:$0xff] %vm1033, %v1006
    %1045 = vst.msk [vmem:[#allocation3 + $0x58] sm:$0xff] %vm1033, %v1008
    %1046 = vst.msk [vmem:[#allocation3 + $0x60] sm:$0xff] %vm1033, %v1010
    %1047 = vst.msk [vmem:[#allocation3 + $0x68] sm:$0xff] %vm1033, %v1012
    %1048 = vst.msk [vmem:[#allocation3 + $0x70] sm:$0xff] %vm1033, %v1014
    %1049 = vst.msk [vmem:[#allocation3 + $0x78] sm:$0xff] %vm1033, %v1016
    %v1050 = vld [vmem:[%s111] sm:$0xff]
    %v1051 = vld [vmem:[%s111 + $0x10] sm:$0xff]
    %v1052 = vld [vmem:[%s111 + $0x20] sm:$0xff]
    %v1053 = vld [vmem:[%s111 + $0x30] sm:$0xff]
    %v1054 = vld [vmem:[%s111 + $0x40] sm:$0xff]
    %v1055 = vld [vmem:[%s111 + $0x50] sm:$0xff]
    %v1056 = vld [vmem:[%s111 + $0x60] sm:$0xff]
    %v1057 = vld [vmem:[%s111 + $0x70] sm:$0xff]
    %v1058 = vld [vmem:[%s111 + $0xc0] sm:$0xff]
    %v1059 = vld [vmem:[%s111 + $0xd0] sm:$0xff]
    %v1060 = vld [vmem:[%s111 + $0xe0] sm:$0xff]
    %v1061 = vld [vmem:[%s111 + $0xf0] sm:$0xff]
    %v1062 = vld [vmem:[%s111 + $0x100] sm:$0xff]
    %v1063 = vld [vmem:[%s111 + $0x110] sm:$0xff]
    %v1064 = vld [vmem:[%s111 + $0x120] sm:$0xff]
    %v1065 = vld [vmem:[%s111 + $0x130] sm:$0xff]
    %1082 = vrot.lane.b32.xlu0 %v1050, 40
    %v1083 = vpop.permute.xlu0 %1082
    %1084 = vrot.lane.b32.xlu0 %v1051, 40
    %v1085 = vpop.permute.xlu0 %1084
    %1086 = vrot.lane.b32.xlu0 %v1052, 40
    %v1087 = vpop.permute.xlu0 %1086
    %1088 = vrot.lane.b32.xlu0 %v1053, 40
    %v1089 = vpop.permute.xlu0 %1088
    %1090 = vrot.lane.b32.xlu0 %v1054, 40
    %v1091 = vpop.permute.xlu0 %1090
    %1092 = vrot.lane.b32.xlu0 %v1055, 40
    %v1093 = vpop.permute.xlu0 %1092
    %1094 = vrot.lane.b32.xlu0 %v1056, 40
    %v1095 = vpop.permute.xlu0 %1094
    %1096 = vrot.lane.b32.xlu0 %v1057, 40
    %v1097 = vpop.permute.xlu0 %1096
    %1098 = vrot.lane.b32.xlu0 %v1058, 40
    %v1099 = vpop.permute.xlu0 %1098
    %1100 = vrot.lane.b32.xlu0 %v1059, 40
    %v1101 = vpop.permute.xlu0 %1100
    %1102 = vrot.lane.b32.xlu0 %v1060, 40
    %v1103 = vpop.permute.xlu0 %1102
    %1104 = vrot.lane.b32.xlu0 %v1061, 40
    %v1105 = vpop.permute.xlu0 %1104
    %1106 = vrot.lane.b32.xlu0 %v1062, 40
    %v1107 = vpop.permute.xlu0 %1106
    %1108 = vrot.lane.b32.xlu0 %v1063, 40
    %v1109 = vpop.permute.xlu0 %1108
    %1110 = vrot.lane.b32.xlu0 %v1064, 40
    %v1111 = vpop.permute.xlu0 %1110
    %1112 = vrot.lane.b32.xlu0 %v1065, 40
    %v1113 = vpop.permute.xlu0 %1112
    %vm1130 = vcmask 359744
    %1131 = vst.msk [vmem:[#allocation3] sm:$0xff] %vm1130, %v1083
    %1132 = vst.msk [vmem:[#allocation3 + $0x8] sm:$0xff] %vm1130, %v1085
    %1133 = vst.msk [vmem:[#allocation3 + $0x10] sm:$0xff] %vm1130, %v1087
    %1134 = vst.msk [vmem:[#allocation3 + $0x18] sm:$0xff] %vm1130, %v1089
    %1135 = vst.msk [vmem:[#allocation3 + $0x20] sm:$0xff] %vm1130, %v1091
    %1136 = vst.msk [vmem:[#allocation3 + $0x28] sm:$0xff] %vm1130, %v1093
    %1137 = vst.msk [vmem:[#allocation3 + $0x30] sm:$0xff] %vm1130, %v1095
    %1138 = vst.msk [vmem:[#allocation3 + $0x38] sm:$0xff] %vm1130, %v1097
    %1139 = vst.msk [vmem:[#allocation3 + $0x40] sm:$0xff] %vm1130, %v1099
    %1140 = vst.msk [vmem:[#allocation3 + $0x48] sm:$0xff] %vm1130, %v1101
    %1141 = vst.msk [vmem:[#allocation3 + $0x50] sm:$0xff] %vm1130, %v1103
    %1142 = vst.msk [vmem:[#allocation3 + $0x58] sm:$0xff] %vm1130, %v1105
    %1143 = vst.msk [vmem:[#allocation3 + $0x60] sm:$0xff] %vm1130, %v1107
    %1144 = vst.msk [vmem:[#allocation3 + $0x68] sm:$0xff] %vm1130, %v1109
    %1145 = vst.msk [vmem:[#allocation3 + $0x70] sm:$0xff] %vm1130, %v1111
    %1146 = vst.msk [vmem:[#allocation3 + $0x78] sm:$0xff] %vm1130, %v1113
    %v1147 = vld [vmem:[%s111 + $0x1] sm:$0xff]
    %v1148 = vld [vmem:[%s111 + $0x11] sm:$0xff]
    %v1149 = vld [vmem:[%s111 + $0x21] sm:$0xff]
    %v1150 = vld [vmem:[%s111 + $0x31] sm:$0xff]
    %v1151 = vld [vmem:[%s111 + $0x41] sm:$0xff]
    %v1152 = vld [vmem:[%s111 + $0x51] sm:$0xff]
    %v1153 = vld [vmem:[%s111 + $0x61] sm:$0xff]
    %v1154 = vld [vmem:[%s111 + $0x71] sm:$0xff]
    %v1155 = vld [vmem:[%s111 + $0xc1] sm:$0xff]
    %v1156 = vld [vmem:[%s111 + $0xd1] sm:$0xff]
    %v1157 = vld [vmem:[%s111 + $0xe1] sm:$0xff]
    %v1158 = vld [vmem:[%s111 + $0xf1] sm:$0xff]
    %v1159 = vld [vmem:[%s111 + $0x101] sm:$0xff]
    %v1160 = vld [vmem:[%s111 + $0x111] sm:$0xff]
    %v1161 = vld [vmem:[%s111 + $0x121] sm:$0xff]
    %v1162 = vld [vmem:[%s111 + $0x131] sm:$0xff]
    %1179 = vrot.lane.b32.xlu0 %v1147, 44
    %v1180 = vpop.permute.xlu0 %1179
    %1181 = vrot.lane.b32.xlu0 %v1148, 44
    %v1182 = vpop.permute.xlu0 %1181
    %1183 = vrot.lane.b32.xlu0 %v1149, 44
    %v1184 = vpop.permute.xlu0 %1183
    %1185 = vrot.lane.b32.xlu0 %v1150, 44
    %v1186 = vpop.permute.xlu0 %1185
    %1187 = vrot.lane.b32.xlu0 %v1151, 44
    %v1188 = vpop.permute.xlu0 %1187
    %1189 = vrot.lane.b32.xlu0 %v1152, 44
    %v1190 = vpop.permute.xlu0 %1189
    %1191 = vrot.lane.b32.xlu0 %v1153, 44
    %v1192 = vpop.permute.xlu0 %1191
    %1193 = vrot.lane.b32.xlu0 %v1154, 44
    %v1194 = vpop.permute.xlu0 %1193
    %1195 = vrot.lane.b32.xlu0 %v1155, 44
    %v1196 = vpop.permute.xlu0 %1195
    %1197 = vrot.lane.b32.xlu0 %v1156, 44
    %v1198 = vpop.permute.xlu0 %1197
    %1199 = vrot.lane.b32.xlu0 %v1157, 44
    %v1200 = vpop.permute.xlu0 %1199
    %1201 = vrot.lane.b32.xlu0 %v1158, 44
    %v1202 = vpop.permute.xlu0 %1201
    %1203 = vrot.lane.b32.xlu0 %v1159, 44
    %v1204 = vpop.permute.xlu0 %1203
    %1205 = vrot.lane.b32.xlu0 %v1160, 44
    %v1206 = vpop.permute.xlu0 %1205
    %1207 = vrot.lane.b32.xlu0 %v1161, 44
    %v1208 = vpop.permute.xlu0 %1207
    %1209 = vrot.lane.b32.xlu0 %v1162, 44
    %v1210 = vpop.permute.xlu0 %1209
    %vm1227 = vcmask 392544
    %1228 = vst.msk [vmem:[#allocation3] sm:$0xff] %vm1227, %v1180
    %1229 = vst.msk [vmem:[#allocation3 + $0x8] sm:$0xff] %vm1227, %v1182
    %1230 = vst.msk [vmem:[#allocation3 + $0x10] sm:$0xff] %vm1227, %v1184
    %1231 = vst.msk [vmem:[#allocation3 + $0x18] sm:$0xff] %vm1227, %v1186
    %1232 = vst.msk [vmem:[#allocation3 + $0x20] sm:$0xff] %vm1227, %v1188
    %1233 = vst.msk [vmem:[#allocation3 + $0x28] sm:$0xff] %vm1227, %v1190
    %1234 = vst.msk [vmem:[#allocation3 + $0x30] sm:$0xff] %vm1227, %v1192
    %1235 = vst.msk [vmem:[#allocation3 + $0x38] sm:$0xff] %vm1227, %v1194
    %1236 = vst.msk [vmem:[#allocation3 + $0x40] sm:$0xff] %vm1227, %v1196
    %1237 = vst.msk [vmem:[#allocation3 + $0x48] sm:$0xff] %vm1227, %v1198
    %1238 = vst.msk [vmem:[#allocation3 + $0x50] sm:$0xff] %vm1227, %v1200
    %1239 = vst.msk [vmem:[#allocation3 + $0x58] sm:$0xff] %vm1227, %v1202
    %1240 = vst.msk [vmem:[#allocation3 + $0x60] sm:$0xff] %vm1227, %v1204
    %1241 = vst.msk [vmem:[#allocation3 + $0x68] sm:$0xff] %vm1227, %v1206
    %1242 = vst.msk [vmem:[#allocation3 + $0x70] sm:$0xff] %vm1227, %v1208
    %1243 = vst.msk [vmem:[#allocation3 + $0x78] sm:$0xff] %vm1227, %v1210
    %v1244 = vld [vmem:[%s111 + $0x2] sm:$0xff]
    %v1245 = vld [vmem:[%s111 + $0x12] sm:$0xff]
    %v1246 = vld [vmem:[%s111 + $0x22] sm:$0xff]
    %v1247 = vld [vmem:[%s111 + $0x32] sm:$0xff]
    %v1248 = vld [vmem:[%s111 + $0x42] sm:$0xff]
    %v1249 = vld [vmem:[%s111 + $0x52] sm:$0xff]
    %v1250 = vld [vmem:[%s111 + $0x62] sm:$0xff]
    %v1251 = vld [vmem:[%s111 + $0x72] sm:$0xff]
    %v1252 = vld [vmem:[%s111 + $0xc2] sm:$0xff]
    %v1253 = vld [vmem:[%s111 + $0xd2] sm:$0xff]
    %v1254 = vld [vmem:[%s111 + $0xe2] sm:$0xff]
    %v1255 = vld [vmem:[%s111 + $0xf2] sm:$0xff]
    %v1256 = vld [vmem:[%s111 + $0x102] sm:$0xff]
    %v1257 = vld [vmem:[%s111 + $0x112] sm:$0xff]
    %v1258 = vld [vmem:[%s111 + $0x122] sm:$0xff]
    %v1259 = vld [vmem:[%s111 + $0x132] sm:$0xff]
    %1276 = vrot.lane.b32.xlu0 %v1244, 48
    %v1277 = vpop.permute.xlu0 %1276
    %1278 = vrot.lane.b32.xlu0 %v1245, 48
    %v1279 = vpop.permute.xlu0 %1278
    %1280 = vrot.lane.b32.xlu0 %v1246, 48
    %v1281 = vpop.permute.xlu0 %1280
    %1282 = vrot.lane.b32.xlu0 %v1247, 48
    %v1283 = vpop.permute.xlu0 %1282
    %1284 = vrot.lane.b32.xlu0 %v1248, 48
    %v1285 = vpop.permute.xlu0 %1284
    %1286 = vrot.lane.b32.xlu0 %v1249, 48
    %v1287 = vpop.permute.xlu0 %1286
    %1288 = vrot.lane.b32.xlu0 %v1250, 48
    %v1289 = vpop.permute.xlu0 %1288
    %1290 = vrot.lane.b32.xlu0 %v1251, 48
    %v1291 = vpop.permute.xlu0 %1290
    %1292 = vrot.lane.b32.xlu0 %v1252, 48
    %v1293 = vpop.permute.xlu0 %1292
    %1294 = vrot.lane.b32.xlu0 %v1253, 48
    %v1295 = vpop.permute.xlu0 %1294
    %1296 = vrot.lane.b32.xlu0 %v1254, 48
    %v1297 = vpop.permute.xlu0 %1296
    %1298 = vrot.lane.b32.xlu0 %v1255, 48
    %v1299 = vpop.permute.xlu0 %1298
    %1300 = vrot.lane.b32.xlu0 %v1256, 48
    %v1301 = vpop.permute.xlu0 %1300
    %1302 = vrot.lane.b32.xlu0 %v1257, 48
    %v1303 = vpop.permute.xlu0 %1302
    %1304 = vrot.lane.b32.xlu0 %v1258, 48
    %v1305 = vpop.permute.xlu0 %1304
    %1306 = vrot.lane.b32.xlu0 %v1259, 48
    %v1307 = vpop.permute.xlu0 %1306
    %vm1324 = vcmask 425344
    %1325 = vst.msk [vmem:[#allocation3] sm:$0xff] %vm1324, %v1277
    %1326 = vst.msk [vmem:[#allocation3 + $0x8] sm:$0xff] %vm1324, %v1279
    %1327 = vst.msk [vmem:[#allocation3 + $0x10] sm:$0xff] %vm1324, %v1281
    %1328 = vst.msk [vmem:[#allocation3 + $0x18] sm:$0xff] %vm1324, %v1283
    %1329 = vst.msk [vmem:[#allocation3 + $0x20] sm:$0xff] %vm1324, %v1285
    %1330 = vst.msk [vmem:[#allocation3 + $0x28] sm:$0xff] %vm1324, %v1287
    %1331 = vst.msk [vmem:[#allocation3 + $0x30] sm:$0xff] %vm1324, %v1289
    %1332 = vst.msk [vmem:[#allocation3 + $0x38] sm:$0xff] %vm1324, %v1291
    %1333 = vst.msk [vmem:[#allocation3 + $0x40] sm:$0xff] %vm1324, %v1293
    %1334 = vst.msk [vmem:[#allocation3 + $0x48] sm:$0xff] %vm1324, %v1295
    %1335 = vst.msk [vmem:[#allocation3 + $0x50] sm:$0xff] %vm1324, %v1297
    %1336 = vst.msk [vmem:[#allocation3 + $0x58] sm:$0xff] %vm1324, %v1299
    %1337 = vst.msk [vmem:[#allocation3 + $0x60] sm:$0xff] %vm1324, %v1301
    %1338 = vst.msk [vmem:[#allocation3 + $0x68] sm:$0xff] %vm1324, %v1303
    %1339 = vst.msk [vmem:[#allocation3 + $0x70] sm:$0xff] %vm1324, %v1305
    %1340 = vst.msk [vmem:[#allocation3 + $0x78] sm:$0xff] %vm1324, %v1307
    %v1341 = vld [vmem:[%s111 + $0x3] sm:$0xff]
    %v1342 = vld [vmem:[%s111 + $0x13] sm:$0xff]
    %v1343 = vld [vmem:[%s111 + $0x23] sm:$0xff]
    %v1344 = vld [vmem:[%s111 + $0x33] sm:$0xff]
    %v1345 = vld [vmem:[%s111 + $0x43] sm:$0xff]
    %v1346 = vld [vmem:[%s111 + $0x53] sm:$0xff]
    %v1347 = vld [vmem:[%s111 + $0x63] sm:$0xff]
    %v1348 = vld [vmem:[%s111 + $0x73] sm:$0xff]
    %v1349 = vld [vmem:[%s111 + $0xc3] sm:$0xff]
    %v1350 = vld [vmem:[%s111 + $0xd3] sm:$0xff]
    %v1351 = vld [vmem:[%s111 + $0xe3] sm:$0xff]
    %v1352 = vld [vmem:[%s111 + $0xf3] sm:$0xff]
    %v1353 = vld [vmem:[%s111 + $0x103] sm:$0xff]
    %v1354 = vld [vmem:[%s111 + $0x113] sm:$0xff]
    %v1355 = vld [vmem:[%s111 + $0x123] sm:$0xff]
    %v1356 = vld [vmem:[%s111 + $0x133] sm:$0xff]
    %1373 = vrot.lane.b32.xlu0 %v1341, 52
    %v1374 = vpop.permute.xlu0 %1373
    %1375 = vrot.lane.b32.xlu0 %v1342, 52
    %v1376 = vpop.permute.xlu0 %1375
    %1377 = vrot.lane.b32.xlu0 %v1343, 52
    %v1378 = vpop.permute.xlu0 %1377
    %1379 = vrot.lane.b32.xlu0 %v1344, 52
    %v1380 = vpop.permute.xlu0 %1379
    %1381 = vrot.lane.b32.xlu0 %v1345, 52
    %v1382 = vpop.permute.xlu0 %1381
    %1383 = vrot.lane.b32.xlu0 %v1346, 52
    %v1384 = vpop.permute.xlu0 %1383
    %1385 = vrot.lane.b32.xlu0 %v1347, 52
    %v1386 = vpop.permute.xlu0 %1385
    %1387 = vrot.lane.b32.xlu0 %v1348, 52
    %v1388 = vpop.permute.xlu0 %1387
    %1389 = vrot.lane.b32.xlu0 %v1349, 52
    %v1390 = vpop.permute.xlu0 %1389
    %1391 = vrot.lane.b32.xlu0 %v1350, 52
    %v1392 = vpop.permute.xlu0 %1391
    %1393 = vrot.lane.b32.xlu0 %v1351, 52
    %v1394 = vpop.permute.xlu0 %1393
    %1395 = vrot.lane.b32.xlu0 %v1352, 52
    %v1396 = vpop.permute.xlu0 %1395
    %1397 = vrot.lane.b32.xlu0 %v1353, 52
    %v1398 = vpop.permute.xlu0 %1397
    %1399 = vrot.lane.b32.xlu0 %v1354, 52
    %v1400 = vpop.permute.xlu0 %1399
    %1401 = vrot.lane.b32.xlu0 %v1355, 52
    %v1402 = vpop.permute.xlu0 %1401
    %1403 = vrot.lane.b32.xlu0 %v1356, 52
    %v1404 = vpop.permute.xlu0 %1403
    %vm1421 = vcmask 458144
    %1422 = vst.msk [vmem:[#allocation3] sm:$0xff] %vm1421, %v1374
    %1423 = vst.msk [vmem:[#allocation3 + $0x8] sm:$0xff] %vm1421, %v1376
    %1424 = vst.msk [vmem:[#allocation3 + $0x10] sm:$0xff] %vm1421, %v1378
    %1425 = vst.msk [vmem:[#allocation3 + $0x18] sm:$0xff] %vm1421, %v1380
    %1426 = vst.msk [vmem:[#allocation3 + $0x20] sm:$0xff] %vm1421, %v1382
    %1427 = vst.msk [vmem:[#allocation3 + $0x28] sm:$0xff] %vm1421, %v1384
    %1428 = vst.msk [vmem:[#allocation3 + $0x30] sm:$0xff] %vm1421, %v1386
    %1429 = vst.msk [vmem:[#allocation3 + $0x38] sm:$0xff] %vm1421, %v1388
    %1430 = vst.msk [vmem:[#allocation3 + $0x40] sm:$0xff] %vm1421, %v1390
    %1431 = vst.msk [vmem:[#allocation3 + $0x48] sm:$0xff] %vm1421, %v1392
    %1432 = vst.msk [vmem:[#allocation3 + $0x50] sm:$0xff] %vm1421, %v1394
    %1433 = vst.msk [vmem:[#allocation3 + $0x58] sm:$0xff] %vm1421, %v1396
    %1434 = vst.msk [vmem:[#allocation3 + $0x60] sm:$0xff] %vm1421, %v1398
    %1435 = vst.msk [vmem:[#allocation3 + $0x68] sm:$0xff] %vm1421, %v1400
    %1436 = vst.msk [vmem:[#allocation3 + $0x70] sm:$0xff] %vm1421, %v1402
    %1437 = vst.msk [vmem:[#allocation3 + $0x78] sm:$0xff] %vm1421, %v1404
    %v1438 = vld [vmem:[%s111 + $0x4] sm:$0xff]
    %v1439 = vld [vmem:[%s111 + $0x14] sm:$0xff]
    %v1440 = vld [vmem:[%s111 + $0x24] sm:$0xff]
    %v1441 = vld [vmem:[%s111 + $0x34] sm:$0xff]
    %v1442 = vld [vmem:[%s111 + $0x44] sm:$0xff]
    %v1443 = vld [vmem:[%s111 + $0x54] sm:$0xff]
    %v1444 = vld [vmem:[%s111 + $0x64] sm:$0xff]
    %v1445 = vld [vmem:[%s111 + $0x74] sm:$0xff]
    %v1446 = vld [vmem:[%s111 + $0xc4] sm:$0xff]
    %v1447 = vld [vmem:[%s111 + $0xd4] sm:$0xff]
    %v1448 = vld [vmem:[%s111 + $0xe4] sm:$0xff]
    %v1449 = vld [vmem:[%s111 + $0xf4] sm:$0xff]
    %v1450 = vld [vmem:[%s111 + $0x104] sm:$0xff]
    %v1451 = vld [vmem:[%s111 + $0x114] sm:$0xff]
    %v1452 = vld [vmem:[%s111 + $0x124] sm:$0xff]
    %v1453 = vld [vmem:[%s111 + $0x134] sm:$0xff]
    %1470 = vrot.lane.b32.xlu0 %v1438, 56
    %v1471 = vpop.permute.xlu0 %1470
    %1472 = vrot.lane.b32.xlu0 %v1439, 56
    %v1473 = vpop.permute.xlu0 %1472
    %1474 = vrot.lane.b32.xlu0 %v1440, 56
    %v1475 = vpop.permute.xlu0 %1474
    %1476 = vrot.lane.b32.xlu0 %v1441, 56
    %v1477 = vpop.permute.xlu0 %1476
    %1478 = vrot.lane.b32.xlu0 %v1442, 56
    %v1479 = vpop.permute.xlu0 %1478
    %1480 = vrot.lane.b32.xlu0 %v1443, 56
    %v1481 = vpop.permute.xlu0 %1480
    %1482 = vrot.lane.b32.xlu0 %v1444, 56
    %v1483 = vpop.permute.xlu0 %1482
    %1484 = vrot.lane.b32.xlu0 %v1445, 56
    %v1485 = vpop.permute.xlu0 %1484
    %1486 = vrot.lane.b32.xlu0 %v1446, 56
    %v1487 = vpop.permute.xlu0 %1486
    %1488 = vrot.lane.b32.xlu0 %v1447, 56
    %v1489 = vpop.permute.xlu0 %1488
    %1490 = vrot.lane.b32.xlu0 %v1448, 56
    %v1491 = vpop.permute.xlu0 %1490
    %1492 = vrot.lane.b32.xlu0 %v1449, 56
    %v1493 = vpop.permute.xlu0 %1492
    %1494 = vrot.lane.b32.xlu0 %v1450, 56
    %v1495 = vpop.permute.xlu0 %1494
    %1496 = vrot.lane.b32.xlu0 %v1451, 56
    %v1497 = vpop.permute.xlu0 %1496
    %1498 = vrot.lane.b32.xlu0 %v1452, 56
    %v1499 = vpop.permute.xlu0 %1498
    %1500 = vrot.lane.b32.xlu0 %v1453, 56
    %v1501 = vpop.permute.xlu0 %1500
    %vm1518 = vcmask 490944
    %1519 = vst.msk [vmem:[#allocation3] sm:$0xff] %vm1518, %v1471
    %1520 = vst.msk [vmem:[#allocation3 + $0x8] sm:$0xff] %vm1518, %v1473
    %1521 = vst.msk [vmem:[#allocation3 + $0x10] sm:$0xff] %vm1518, %v1475
    %1522 = vst.msk [vmem:[#allocation3 + $0x18] sm:$0xff] %vm1518, %v1477
    %1523 = vst.msk [vmem:[#allocation3 + $0x20] sm:$0xff] %vm1518, %v1479
    %1524 = vst.msk [vmem:[#allocation3 + $0x28] sm:$0xff] %vm1518, %v1481
    %1525 = vst.msk [vmem:[#allocation3 + $0x30] sm:$0xff] %vm1518, %v1483
    %1526 = vst.msk [vmem:[#allocation3 + $0x38] sm:$0xff] %vm1518, %v1485
    %1527 = vst.msk [vmem:[#allocation3 + $0x40] sm:$0xff] %vm1518, %v1487
    %1528 = vst.msk [vmem:[#allocation3 + $0x48] sm:$0xff] %vm1518, %v1489
    %1529 = vst.msk [vmem:[#allocation3 + $0x50] sm:$0xff] %vm1518, %v1491
    %1530 = vst.msk [vmem:[#allocation3 + $0x58] sm:$0xff] %vm1518, %v1493
    %1531 = vst.msk [vmem:[#allocation3 + $0x60] sm:$0xff] %vm1518, %v1495
    %1532 = vst.msk [vmem:[#allocation3 + $0x68] sm:$0xff] %vm1518, %v1497
    %1533 = vst.msk [vmem:[#allocation3 + $0x70] sm:$0xff] %vm1518, %v1499
    %1534 = vst.msk [vmem:[#allocation3 + $0x78] sm:$0xff] %vm1518, %v1501
    %s1535 = scalar_lea.vmem [#allocation2], 48
    %v1536 = vld [vmem:[%s1535] sm:$0xff]
    %v1537 = vld [vmem:[%s1535 + $0x10] sm:$0xff]
    %v1538 = vld [vmem:[%s1535 + $0x20] sm:$0xff]
    %v1539 = vld [vmem:[%s1535 + $0x30] sm:$0xff]
    %v1540 = vld [vmem:[%s1535 + $0x40] sm:$0xff]
    %v1541 = vld [vmem:[%s1535 + $0x50] sm:$0xff]
    %v1542 = vld [vmem:[%s1535 + $0x60] sm:$0xff]
    %v1543 = vld [vmem:[%s1535 + $0x70] sm:$0xff]
    %v1544 = vld [vmem:[%s1535 + $0xc0] sm:$0xff]
    %v1545 = vld [vmem:[%s1535 + $0xd0] sm:$0xff]
    %v1546 = vld [vmem:[%s1535 + $0xe0] sm:$0xff]
    %v1547 = vld [vmem:[%s1535 + $0xf0] sm:$0xff]
    %v1548 = vld [vmem:[%s1535 + $0x100] sm:$0xff]
    %v1549 = vld [vmem:[%s1535 + $0x110] sm:$0xff]
    %v1550 = vld [vmem:[%s1535 + $0x120] sm:$0xff]
    %v1551 = vld [vmem:[%s1535 + $0x130] sm:$0xff]
    %1568 = vrot.lane.b32.xlu0 %v1536, 60
    %v1569 = vpop.permute.xlu0 %1568
    %1570 = vrot.lane.b32.xlu0 %v1537, 60
    %v1571 = vpop.permute.xlu0 %1570
    %1572 = vrot.lane.b32.xlu0 %v1538, 60
    %v1573 = vpop.permute.xlu0 %1572
    %1574 = vrot.lane.b32.xlu0 %v1539, 60
    %v1575 = vpop.permute.xlu0 %1574
    %1576 = vrot.lane.b32.xlu0 %v1540, 60
    %v1577 = vpop.permute.xlu0 %1576
    %1578 = vrot.lane.b32.xlu0 %v1541, 60
    %v1579 = vpop.permute.xlu0 %1578
    %1580 = vrot.lane.b32.xlu0 %v1542, 60
    %v1581 = vpop.permute.xlu0 %1580
    %1582 = vrot.lane.b32.xlu0 %v1543, 60
    %v1583 = vpop.permute.xlu0 %1582
    %1584 = vrot.lane.b32.xlu0 %v1544, 60
    %v1585 = vpop.permute.xlu0 %1584
    %1586 = vrot.lane.b32.xlu0 %v1545, 60
    %v1587 = vpop.permute.xlu0 %1586
    %1588 = vrot.lane.b32.xlu0 %v1546, 60
    %v1589 = vpop.permute.xlu0 %1588
    %1590 = vrot.lane.b32.xlu0 %v1547, 60
    %v1591 = vpop.permute.xlu0 %1590
    %1592 = vrot.lane.b32.xlu0 %v1548, 60
    %v1593 = vpop.permute.xlu0 %1592
    %1594 = vrot.lane.b32.xlu0 %v1549, 60
    %v1595 = vpop.permute.xlu0 %1594
    %1596 = vrot.lane.b32.xlu0 %v1550, 60
    %v1597 = vpop.permute.xlu0 %1596
    %1598 = vrot.lane.b32.xlu0 %v1551, 60
    %v1599 = vpop.permute.xlu0 %1598
    %vm1616 = vcmask 523744
    %1617 = vst.msk [vmem:[#allocation3] sm:$0xff] %vm1616, %v1569
    %1618 = vst.msk [vmem:[#allocation3 + $0x8] sm:$0xff] %vm1616, %v1571
    %1619 = vst.msk [vmem:[#allocation3 + $0x10] sm:$0xff] %vm1616, %v1573
    %1620 = vst.msk [vmem:[#allocation3 + $0x18] sm:$0xff] %vm1616, %v1575
    %1621 = vst.msk [vmem:[#allocation3 + $0x20] sm:$0xff] %vm1616, %v1577
    %1622 = vst.msk [vmem:[#allocation3 + $0x28] sm:$0xff] %vm1616, %v1579
    %1623 = vst.msk [vmem:[#allocation3 + $0x30] sm:$0xff] %vm1616, %v1581
    %1624 = vst.msk [vmem:[#allocation3 + $0x38] sm:$0xff] %vm1616, %v1583
    %1625 = vst.msk [vmem:[#allocation3 + $0x40] sm:$0xff] %vm1616, %v1585
    %1626 = vst.msk [vmem:[#allocation3 + $0x48] sm:$0xff] %vm1616, %v1587
    %1627 = vst.msk [vmem:[#allocation3 + $0x50] sm:$0xff] %vm1616, %v1589
    %1628 = vst.msk [vmem:[#allocation3 + $0x58] sm:$0xff] %vm1616, %v1591
    %1629 = vst.msk [vmem:[#allocation3 + $0x60] sm:$0xff] %vm1616, %v1593
    %1630 = vst.msk [vmem:[#allocation3 + $0x68] sm:$0xff] %vm1616, %v1595
    %1631 = vst.msk [vmem:[#allocation3 + $0x70] sm:$0xff] %vm1616, %v1597
    %1632 = vst.msk [vmem:[#allocation3 + $0x78] sm:$0xff] %vm1616, %v1599
    %v1633 = vld [vmem:[%s1535 + $0x1] sm:$0xff]
    %v1634 = vld [vmem:[%s1535 + $0x11] sm:$0xff]
    %v1635 = vld [vmem:[%s1535 + $0x21] sm:$0xff]
    %v1636 = vld [vmem:[%s1535 + $0x31] sm:$0xff]
    %v1637 = vld [vmem:[%s1535 + $0x41] sm:$0xff]
    %v1638 = vld [vmem:[%s1535 + $0x51] sm:$0xff]
    %v1639 = vld [vmem:[%s1535 + $0x61] sm:$0xff]
    %v1640 = vld [vmem:[%s1535 + $0x71] sm:$0xff]
    %v1641 = vld [vmem:[%s1535 + $0xc1] sm:$0xff]
    %v1642 = vld [vmem:[%s1535 + $0xd1] sm:$0xff]
    %v1643 = vld [vmem:[%s1535 + $0xe1] sm:$0xff]
    %v1644 = vld [vmem:[%s1535 + $0xf1] sm:$0xff]
    %v1645 = vld [vmem:[%s1535 + $0x101] sm:$0xff]
    %v1646 = vld [vmem:[%s1535 + $0x111] sm:$0xff]
    %v1647 = vld [vmem:[%s1535 + $0x121] sm:$0xff]
    %v1648 = vld [vmem:[%s1535 + $0x131] sm:$0xff]
    %1665 = vrot.lane.b32.xlu0 %v1633, 64
    %v1666 = vpop.permute.xlu0 %1665
    %1667 = vrot.lane.b32.xlu0 %v1634, 64
    %v1668 = vpop.permute.xlu0 %1667
    %1669 = vrot.lane.b32.xlu0 %v1635, 64
    %v1670 = vpop.permute.xlu0 %1669
    %1671 = vrot.lane.b32.xlu0 %v1636, 64
    %v1672 = vpop.permute.xlu0 %1671
    %1673 = vrot.lane.b32.xlu0 %v1637, 64
    %v1674 = vpop.permute.xlu0 %1673
    %1675 = vrot.lane.b32.xlu0 %v1638, 64
    %v1676 = vpop.permute.xlu0 %1675
    %1677 = vrot.lane.b32.xlu0 %v1639, 64
    %v1678 = vpop.permute.xlu0 %1677
    %1679 = vrot.lane.b32.xlu0 %v1640, 64
    %v1680 = vpop.permute.xlu0 %1679
    %1681 = vrot.lane.b32.xlu0 %v1641, 64
    %v1682 = vpop.permute.xlu0 %1681
    %1683 = vrot.lane.b32.xlu0 %v1642, 64
    %v1684 = vpop.permute.xlu0 %1683
    %1685 = vrot.lane.b32.xlu0 %v1643, 64
    %v1686 = vpop.permute.xlu0 %1685
    %1687 = vrot.lane.b32.xlu0 %v1644, 64
    %v1688 = vpop.permute.xlu0 %1687
    %1689 = vrot.lane.b32.xlu0 %v1645, 64
    %v1690 = vpop.permute.xlu0 %1689
    %1691 = vrot.lane.b32.xlu0 %v1646, 64
    %v1692 = vpop.permute.xlu0 %1691
    %1693 = vrot.lane.b32.xlu0 %v1647, 64
    %v1694 = vpop.permute.xlu0 %1693
    %1695 = vrot.lane.b32.xlu0 %v1648, 64
    %v1696 = vpop.permute.xlu0 %1695
    %vm1713 = vcmask 556544
    %1714 = vst.msk [vmem:[#allocation3] sm:$0xff] %vm1713, %v1666
    %1715 = vst.msk [vmem:[#allocation3 + $0x8] sm:$0xff] %vm1713, %v1668
    %1716 = vst.msk [vmem:[#allocation3 + $0x10] sm:$0xff] %vm1713, %v1670
    %1717 = vst.msk [vmem:[#allocation3 + $0x18] sm:$0xff] %vm1713, %v1672
    %1718 = vst.msk [vmem:[#allocation3 + $0x20] sm:$0xff] %vm1713, %v1674
    %1719 = vst.msk [vmem:[#allocation3 + $0x28] sm:$0xff] %vm1713, %v1676
    %1720 = vst.msk [vmem:[#allocation3 + $0x30] sm:$0xff] %vm1713, %v1678
    %1721 = vst.msk [vmem:[#allocation3 + $0x38] sm:$0xff] %vm1713, %v1680
    %1722 = vst.msk [vmem:[#allocation3 + $0x40] sm:$0xff] %vm1713, %v1682
    %1723 = vst.msk [vmem:[#allocation3 + $0x48] sm:$0xff] %vm1713, %v1684
    %1724 = vst.msk [vmem:[#allocation3 + $0x50] sm:$0xff] %vm1713, %v1686
    %1725 = vst.msk [vmem:[#allocation3 + $0x58] sm:$0xff] %vm1713, %v1688
    %1726 = vst.msk [vmem:[#allocation3 + $0x60] sm:$0xff] %vm1713, %v1690
    %1727 = vst.msk [vmem:[#allocation3 + $0x68] sm:$0xff] %vm1713, %v1692
    %1728 = vst.msk [vmem:[#allocation3 + $0x70] sm:$0xff] %vm1713, %v1694
    %1729 = vst.msk [vmem:[#allocation3 + $0x78] sm:$0xff] %vm1713, %v1696
    %v1730 = vld [vmem:[%s1535 + $0x2] sm:$0xff]
    %v1731 = vld [vmem:[%s1535 + $0x12] sm:$0xff]
    %v1732 = vld [vmem:[%s1535 + $0x22] sm:$0xff]
    %v1733 = vld [vmem:[%s1535 + $0x32] sm:$0xff]
    %v1734 = vld [vmem:[%s1535 + $0x42] sm:$0xff]
    %v1735 = vld [vmem:[%s1535 + $0x52] sm:$0xff]
    %v1736 = vld [vmem:[%s1535 + $0x62] sm:$0xff]
    %v1737 = vld [vmem:[%s1535 + $0x72] sm:$0xff]
    %v1738 = vld [vmem:[%s1535 + $0xc2] sm:$0xff]
    %v1739 = vld [vmem:[%s1535 + $0xd2] sm:$0xff]
    %v1740 = vld [vmem:[%s1535 + $0xe2] sm:$0xff]
    %v1741 = vld [vmem:[%s1535 + $0xf2] sm:$0xff]
    %v1742 = vld [vmem:[%s1535 + $0x102] sm:$0xff]
    %v1743 = vld [vmem:[%s1535 + $0x112] sm:$0xff]
    %v1744 = vld [vmem:[%s1535 + $0x122] sm:$0xff]
    %v1745 = vld [vmem:[%s1535 + $0x132] sm:$0xff]
    %1762 = vrot.lane.b32.xlu0 %v1730, 68
    %v1763 = vpop.permute.xlu0 %1762
    %1764 = vrot.lane.b32.xlu0 %v1731, 68
    %v1765 = vpop.permute.xlu0 %1764
    %1766 = vrot.lane.b32.xlu0 %v1732, 68
    %v1767 = vpop.permute.xlu0 %1766
    %1768 = vrot.lane.b32.xlu0 %v1733, 68
    %v1769 = vpop.permute.xlu0 %1768
    %1770 = vrot.lane.b32.xlu0 %v1734, 68
    %v1771 = vpop.permute.xlu0 %1770
    %1772 = vrot.lane.b32.xlu0 %v1735, 68
    %v1773 = vpop.permute.xlu0 %1772
    %1774 = vrot.lane.b32.xlu0 %v1736, 68
    %v1775 = vpop.permute.xlu0 %1774
    %1776 = vrot.lane.b32.xlu0 %v1737, 68
    %v1777 = vpop.permute.xlu0 %1776
    %1778 = vrot.lane.b32.xlu0 %v1738, 68
    %v1779 = vpop.permute.xlu0 %1778
    %1780 = vrot.lane.b32.xlu0 %v1739, 68
    %v1781 = vpop.permute.xlu0 %1780
    %1782 = vrot.lane.b32.xlu0 %v1740, 68
    %v1783 = vpop.permute.xlu0 %1782
    %1784 = vrot.lane.b32.xlu0 %v1741, 68
    %v1785 = vpop.permute.xlu0 %1784
    %1786 = vrot.lane.b32.xlu0 %v1742, 68
    %v1787 = vpop.permute.xlu0 %1786
    %1788 = vrot.lane.b32.xlu0 %v1743, 68
    %v1789 = vpop.permute.xlu0 %1788
    %1790 = vrot.lane.b32.xlu0 %v1744, 68
    %v1791 = vpop.permute.xlu0 %1790
    %1792 = vrot.lane.b32.xlu0 %v1745, 68
    %v1793 = vpop.permute.xlu0 %1792
    %vm1810 = vcmask 589344
    %1811 = vst.msk [vmem:[#allocation3] sm:$0xff] %vm1810, %v1763
    %1812 = vst.msk [vmem:[#allocation3 + $0x8] sm:$0xff] %vm1810, %v1765
    %1813 = vst.msk [vmem:[#allocation3 + $0x10] sm:$0xff] %vm1810, %v1767
    %1814 = vst.msk [vmem:[#allocation3 + $0x18] sm:$0xff] %vm1810, %v1769
    %1815 = vst.msk [vmem:[#allocation3 + $0x20] sm:$0xff] %vm1810, %v1771
    %1816 = vst.msk [vmem:[#allocation3 + $0x28] sm:$0xff] %vm1810, %v1773
    %1817 = vst.msk [vmem:[#allocation3 + $0x30] sm:$0xff] %vm1810, %v1775
    %1818 = vst.msk [vmem:[#allocation3 + $0x38] sm:$0xff] %vm1810, %v1777
    %1819 = vst.msk [vmem:[#allocation3 + $0x40] sm:$0xff] %vm1810, %v1779
    %1820 = vst.msk [vmem:[#allocation3 + $0x48] sm:$0xff] %vm1810, %v1781
    %1821 = vst.msk [vmem:[#allocation3 + $0x50] sm:$0xff] %vm1810, %v1783
    %1822 = vst.msk [vmem:[#allocation3 + $0x58] sm:$0xff] %vm1810, %v1785
    %1823 = vst.msk [vmem:[#allocation3 + $0x60] sm:$0xff] %vm1810, %v1787
    %1824 = vst.msk [vmem:[#allocation3 + $0x68] sm:$0xff] %vm1810, %v1789
    %1825 = vst.msk [vmem:[#allocation3 + $0x70] sm:$0xff] %vm1810, %v1791
    %1826 = vst.msk [vmem:[#allocation3 + $0x78] sm:$0xff] %vm1810, %v1793
    %v1827 = vld [vmem:[%s1535 + $0x3] sm:$0xff]
    %v1828 = vld [vmem:[%s1535 + $0x13] sm:$0xff]
    %v1829 = vld [vmem:[%s1535 + $0x23] sm:$0xff]
    %v1830 = vld [vmem:[%s1535 + $0x33] sm:$0xff]
    %v1831 = vld [vmem:[%s1535 + $0x43] sm:$0xff]
    %v1832 = vld [vmem:[%s1535 + $0x53] sm:$0xff]
    %v1833 = vld [vmem:[%s1535 + $0x63] sm:$0xff]
    %v1834 = vld [vmem:[%s1535 + $0x73] sm:$0xff]
    %v1835 = vld [vmem:[%s1535 + $0xc3] sm:$0xff]
    %v1836 = vld [vmem:[%s1535 + $0xd3] sm:$0xff]
    %v1837 = vld [vmem:[%s1535 + $0xe3] sm:$0xff]
    %v1838 = vld [vmem:[%s1535 + $0xf3] sm:$0xff]
    %v1839 = vld [vmem:[%s1535 + $0x103] sm:$0xff]
    %v1840 = vld [vmem:[%s1535 + $0x113] sm:$0xff]
    %v1841 = vld [vmem:[%s1535 + $0x123] sm:$0xff]
    %v1842 = vld [vmem:[%s1535 + $0x133] sm:$0xff]
    %1859 = vrot.lane.b32.xlu0 %v1827, 72
    %v1860 = vpop.permute.xlu0 %1859
    %1861 = vrot.lane.b32.xlu0 %v1828, 72
    %v1862 = vpop.permute.xlu0 %1861
    %1863 = vrot.lane.b32.xlu0 %v1829, 72
    %v1864 = vpop.permute.xlu0 %1863
    %1865 = vrot.lane.b32.xlu0 %v1830, 72
    %v1866 = vpop.permute.xlu0 %1865
    %1867 = vrot.lane.b32.xlu0 %v1831, 72
    %v1868 = vpop.permute.xlu0 %1867
    %1869 = vrot.lane.b32.xlu0 %v1832, 72
    %v1870 = vpop.permute.xlu0 %1869
    %1871 = vrot.lane.b32.xlu0 %v1833, 72
    %v1872 = vpop.permute.xlu0 %1871
    %1873 = vrot.lane.b32.xlu0 %v1834, 72
    %v1874 = vpop.permute.xlu0 %1873
    %1875 = vrot.lane.b32.xlu0 %v1835, 72
    %v1876 = vpop.permute.xlu0 %1875
    %1877 = vrot.lane.b32.xlu0 %v1836, 72
    %v1878 = vpop.permute.xlu0 %1877
    %1879 = vrot.lane.b32.xlu0 %v1837, 72
    %v1880 = vpop.permute.xlu0 %1879
    %1881 = vrot.lane.b32.xlu0 %v1838, 72
    %v1882 = vpop.permute.xlu0 %1881
    %1883 = vrot.lane.b32.xlu0 %v1839, 72
    %v1884 = vpop.permute.xlu0 %1883
    %1885 = vrot.lane.b32.xlu0 %v1840, 72
    %v1886 = vpop.permute.xlu0 %1885
    %1887 = vrot.lane.b32.xlu0 %v1841, 72
    %v1888 = vpop.permute.xlu0 %1887
    %1889 = vrot.lane.b32.xlu0 %v1842, 72
    %v1890 = vpop.permute.xlu0 %1889
    %vm1907 = vcmask 622144
    %1908 = vst.msk [vmem:[#allocation3] sm:$0xff] %vm1907, %v1860
    %1909 = vst.msk [vmem:[#allocation3 + $0x8] sm:$0xff] %vm1907, %v1862
    %1910 = vst.msk [vmem:[#allocation3 + $0x10] sm:$0xff] %vm1907, %v1864
    %1911 = vst.msk [vmem:[#allocation3 + $0x18] sm:$0xff] %vm1907, %v1866
    %1912 = vst.msk [vmem:[#allocation3 + $0x20] sm:$0xff] %vm1907, %v1868
    %1913 = vst.msk [vmem:[#allocation3 + $0x28] sm:$0xff] %vm1907, %v1870
    %1914 = vst.msk [vmem:[#allocation3 + $0x30] sm:$0xff] %vm1907, %v1872
    %1915 = vst.msk [vmem:[#allocation3 + $0x38] sm:$0xff] %vm1907, %v1874
    %1916 = vst.msk [vmem:[#allocation3 + $0x40] sm:$0xff] %vm1907, %v1876
    %1917 = vst.msk [vmem:[#allocation3 + $0x48] sm:$0xff] %vm1907, %v1878
    %1918 = vst.msk [vmem:[#allocation3 + $0x50] sm:$0xff] %vm1907, %v1880
    %1919 = vst.msk [vmem:[#allocation3 + $0x58] sm:$0xff] %vm1907, %v1882
    %1920 = vst.msk [vmem:[#allocation3 + $0x60] sm:$0xff] %vm1907, %v1884
    %1921 = vst.msk [vmem:[#allocation3 + $0x68] sm:$0xff] %vm1907, %v1886
    %1922 = vst.msk [vmem:[#allocation3 + $0x70] sm:$0xff] %vm1907, %v1888
    %1923 = vst.msk [vmem:[#allocation3 + $0x78] sm:$0xff] %vm1907, %v1890
    %v1924 = vld [vmem:[%s1535 + $0x4] sm:$0xff]
    %v1925 = vld [vmem:[%s1535 + $0x14] sm:$0xff]
    %v1926 = vld [vmem:[%s1535 + $0x24] sm:$0xff]
    %v1927 = vld [vmem:[%s1535 + $0x34] sm:$0xff]
    %v1928 = vld [vmem:[%s1535 + $0x44] sm:$0xff]
    %v1929 = vld [vmem:[%s1535 + $0x54] sm:$0xff]
    %v1930 = vld [vmem:[%s1535 + $0x64] sm:$0xff]
    %v1931 = vld [vmem:[%s1535 + $0x74] sm:$0xff]
    %v1932 = vld [vmem:[%s1535 + $0xc4] sm:$0xff]
    %v1933 = vld [vmem:[%s1535 + $0xd4] sm:$0xff]
    %v1934 = vld [vmem:[%s1535 + $0xe4] sm:$0xff]
    %v1935 = vld [vmem:[%s1535 + $0xf4] sm:$0xff]
    %v1936 = vld [vmem:[%s1535 + $0x104] sm:$0xff]
    %v1937 = vld [vmem:[%s1535 + $0x114] sm:$0xff]
    %v1938 = vld [vmem:[%s1535 + $0x124] sm:$0xff]
    %v1939 = vld [vmem:[%s1535 + $0x134] sm:$0xff]
    %1956 = vrot.lane.b32.xlu0 %v1924, 76
    %v1957 = vpop.permute.xlu0 %1956
    %1958 = vrot.lane.b32.xlu0 %v1925, 76
    %v1959 = vpop.permute.xlu0 %1958
    %1960 = vrot.lane.b32.xlu0 %v1926, 76
    %v1961 = vpop.permute.xlu0 %1960
    %1962 = vrot.lane.b32.xlu0 %v1927, 76
    %v1963 = vpop.permute.xlu0 %1962
    %1964 = vrot.lane.b32.xlu0 %v1928, 76
    %v1965 = vpop.permute.xlu0 %1964
    %1966 = vrot.lane.b32.xlu0 %v1929, 76
    %v1967 = vpop.permute.xlu0 %1966
    %1968 = vrot.lane.b32.xlu0 %v1930, 76
    %v1969 = vpop.permute.xlu0 %1968
    %1970 = vrot.lane.b32.xlu0 %v1931, 76
    %v1971 = vpop.permute.xlu0 %1970
    %1972 = vrot.lane.b32.xlu0 %v1932, 76
    %v1973 = vpop.permute.xlu0 %1972
    %1974 = vrot.lane.b32.xlu0 %v1933, 76
    %v1975 = vpop.permute.xlu0 %1974
    %1976 = vrot.lane.b32.xlu0 %v1934, 76
    %v1977 = vpop.permute.xlu0 %1976
    %1978 = vrot.lane.b32.xlu0 %v1935, 76
    %v1979 = vpop.permute.xlu0 %1978
    %1980 = vrot.lane.b32.xlu0 %v1936, 76
    %v1981 = vpop.permute.xlu0 %1980
    %1982 = vrot.lane.b32.xlu0 %v1937, 76
    %v1983 = vpop.permute.xlu0 %1982
    %1984 = vrot.lane.b32.xlu0 %v1938, 76
    %v1985 = vpop.permute.xlu0 %1984
    %1986 = vrot.lane.b32.xlu0 %v1939, 76
    %v1987 = vpop.permute.xlu0 %1986
    %vm2004 = vcmask 654944
    %2005 = vst.msk [vmem:[#allocation3] sm:$0xff] %vm2004, %v1957
    %2006 = vst.msk [vmem:[#allocation3 + $0x8] sm:$0xff] %vm2004, %v1959
    %2007 = vst.msk [vmem:[#allocation3 + $0x10] sm:$0xff] %vm2004, %v1961
    %2008 = vst.msk [vmem:[#allocation3 + $0x18] sm:$0xff] %vm2004, %v1963
    %2009 = vst.msk [vmem:[#allocation3 + $0x20] sm:$0xff] %vm2004, %v1965
    %2010 = vst.msk [vmem:[#allocation3 + $0x28] sm:$0xff] %vm2004, %v1967
    %2011 = vst.msk [vmem:[#allocation3 + $0x30] sm:$0xff] %vm2004, %v1969
    %2012 = vst.msk [vmem:[#allocation3 + $0x38] sm:$0xff] %vm2004, %v1971
    %2013 = vst.msk [vmem:[#allocation3 + $0x40] sm:$0xff] %vm2004, %v1973
    %2014 = vst.msk [vmem:[#allocation3 + $0x48] sm:$0xff] %vm2004, %v1975
    %2015 = vst.msk [vmem:[#allocation3 + $0x50] sm:$0xff] %vm2004, %v1977
    %2016 = vst.msk [vmem:[#allocation3 + $0x58] sm:$0xff] %vm2004, %v1979
    %2017 = vst.msk [vmem:[#allocation3 + $0x60] sm:$0xff] %vm2004, %v1981
    %2018 = vst.msk [vmem:[#allocation3 + $0x68] sm:$0xff] %vm2004, %v1983
    %2019 = vst.msk [vmem:[#allocation3 + $0x70] sm:$0xff] %vm2004, %v1985
    %2020 = vst.msk [vmem:[#allocation3 + $0x78] sm:$0xff] %vm2004, %v1987
    %s2021 = scalar_lea.vmem [#allocation2], 64
    %v2022 = vld [vmem:[%s2021] sm:$0xff]
    %v2023 = vld [vmem:[%s2021 + $0x10] sm:$0xff]
    %v2024 = vld [vmem:[%s2021 + $0x20] sm:$0xff]
    %v2025 = vld [vmem:[%s2021 + $0x30] sm:$0xff]
    %v2026 = vld [vmem:[%s2021 + $0x40] sm:$0xff]
    %v2027 = vld [vmem:[%s2021 + $0x50] sm:$0xff]
    %v2028 = vld [vmem:[%s2021 + $0x60] sm:$0xff]
    %v2029 = vld [vmem:[%s2021 + $0x70] sm:$0xff]
    %v2030 = vld [vmem:[%s2021 + $0xc0] sm:$0xff]
    %v2031 = vld [vmem:[%s2021 + $0xd0] sm:$0xff]
    %v2032 = vld [vmem:[%s2021 + $0xe0] sm:$0xff]
    %v2033 = vld [vmem:[%s2021 + $0xf0] sm:$0xff]
    %v2034 = vld [vmem:[%s2021 + $0x100] sm:$0xff]
    %v2035 = vld [vmem:[%s2021 + $0x110] sm:$0xff]
    %v2036 = vld [vmem:[%s2021 + $0x120] sm:$0xff]
    %v2037 = vld [vmem:[%s2021 + $0x130] sm:$0xff]
    %2054 = vrot.lane.b32.xlu0 %v2022, 80
    %v2055 = vpop.permute.xlu0 %2054
    %2056 = vrot.lane.b32.xlu0 %v2023, 80
    %v2057 = vpop.permute.xlu0 %2056
    %2058 = vrot.lane.b32.xlu0 %v2024, 80
    %v2059 = vpop.permute.xlu0 %2058
    %2060 = vrot.lane.b32.xlu0 %v2025, 80
    %v2061 = vpop.permute.xlu0 %2060
    %2062 = vrot.lane.b32.xlu0 %v2026, 80
    %v2063 = vpop.permute.xlu0 %2062
    %2064 = vrot.lane.b32.xlu0 %v2027, 80
    %v2065 = vpop.permute.xlu0 %2064
    %2066 = vrot.lane.b32.xlu0 %v2028, 80
    %v2067 = vpop.permute.xlu0 %2066
    %2068 = vrot.lane.b32.xlu0 %v2029, 80
    %v2069 = vpop.permute.xlu0 %2068
    %2070 = vrot.lane.b32.xlu0 %v2030, 80
    %v2071 = vpop.permute.xlu0 %2070
    %2072 = vrot.lane.b32.xlu0 %v2031, 80
    %v2073 = vpop.permute.xlu0 %2072
    %2074 = vrot.lane.b32.xlu0 %v2032, 80
    %v2075 = vpop.permute.xlu0 %2074
    %2076 = vrot.lane.b32.xlu0 %v2033, 80
    %v2077 = vpop.permute.xlu0 %2076
    %2078 = vrot.lane.b32.xlu0 %v2034, 80
    %v2079 = vpop.permute.xlu0 %2078
    %2080 = vrot.lane.b32.xlu0 %v2035, 80
    %v2081 = vpop.permute.xlu0 %2080
    %2082 = vrot.lane.b32.xlu0 %v2036, 80
    %v2083 = vpop.permute.xlu0 %2082
    %2084 = vrot.lane.b32.xlu0 %v2037, 80
    %v2085 = vpop.permute.xlu0 %2084
    %vm2102 = vcmask 687744
    %2103 = vst.msk [vmem:[#allocation3] sm:$0xff] %vm2102, %v2055
    %2104 = vst.msk [vmem:[#allocation3 + $0x8] sm:$0xff] %vm2102, %v2057
    %2105 = vst.msk [vmem:[#allocation3 + $0x10] sm:$0xff] %vm2102, %v2059
    %2106 = vst.msk [vmem:[#allocation3 + $0x18] sm:$0xff] %vm2102, %v2061
    %2107 = vst.msk [vmem:[#allocation3 + $0x20] sm:$0xff] %vm2102, %v2063
    %2108 = vst.msk [vmem:[#allocation3 + $0x28] sm:$0xff] %vm2102, %v2065
    %2109 = vst.msk [vmem:[#allocation3 + $0x30] sm:$0xff] %vm2102, %v2067
    %2110 = vst.msk [vmem:[#allocation3 + $0x38] sm:$0xff] %vm2102, %v2069
    %2111 = vst.msk [vmem:[#allocation3 + $0x40] sm:$0xff] %vm2102, %v2071
    %2112 = vst.msk [vmem:[#allocation3 + $0x48] sm:$0xff] %vm2102, %v2073
    %2113 = vst.msk [vmem:[#allocation3 + $0x50] sm:$0xff] %vm2102, %v2075
    %2114 = vst.msk [vmem:[#allocation3 + $0x58] sm:$0xff] %vm2102, %v2077
    %2115 = vst.msk [vmem:[#allocation3 + $0x60] sm:$0xff] %vm2102, %v2079
    %2116 = vst.msk [vmem:[#allocation3 + $0x68] sm:$0xff] %vm2102, %v2081
    %2117 = vst.msk [vmem:[#allocation3 + $0x70] sm:$0xff] %vm2102, %v2083
    %2118 = vst.msk [vmem:[#allocation3 + $0x78] sm:$0xff] %vm2102, %v2085
    %v2119 = vld [vmem:[%s2021 + $0x1] sm:$0xff]
    %v2120 = vld [vmem:[%s2021 + $0x11] sm:$0xff]
    %v2121 = vld [vmem:[%s2021 + $0x21] sm:$0xff]
    %v2122 = vld [vmem:[%s2021 + $0x31] sm:$0xff]
    %v2123 = vld [vmem:[%s2021 + $0x41] sm:$0xff]
    %v2124 = vld [vmem:[%s2021 + $0x51] sm:$0xff]
    %v2125 = vld [vmem:[%s2021 + $0x61] sm:$0xff]
    %v2126 = vld [vmem:[%s2021 + $0x71] sm:$0xff]
    %v2127 = vld [vmem:[%s2021 + $0xc1] sm:$0xff]
    %v2128 = vld [vmem:[%s2021 + $0xd1] sm:$0xff]
    %v2129 = vld [vmem:[%s2021 + $0xe1] sm:$0xff]
    %v2130 = vld [vmem:[%s2021 + $0xf1] sm:$0xff]
    %v2131 = vld [vmem:[%s2021 + $0x101] sm:$0xff]
    %v2132 = vld [vmem:[%s2021 + $0x111] sm:$0xff]
    %v2133 = vld [vmem:[%s2021 + $0x121] sm:$0xff]
    %v2134 = vld [vmem:[%s2021 + $0x131] sm:$0xff]
    %2151 = vrot.lane.b32.xlu0 %v2119, 84
    %v2152 = vpop.permute.xlu0 %2151
    %2153 = vrot.lane.b32.xlu0 %v2120, 84
    %v2154 = vpop.permute.xlu0 %2153
    %2155 = vrot.lane.b32.xlu0 %v2121, 84
    %v2156 = vpop.permute.xlu0 %2155
    %2157 = vrot.lane.b32.xlu0 %v2122, 84
    %v2158 = vpop.permute.xlu0 %2157
    %2159 = vrot.lane.b32.xlu0 %v2123, 84
    %v2160 = vpop.permute.xlu0 %2159
    %2161 = vrot.lane.b32.xlu0 %v2124, 84
    %v2162 = vpop.permute.xlu0 %2161
    %2163 = vrot.lane.b32.xlu0 %v2125, 84
    %v2164 = vpop.permute.xlu0 %2163
    %2165 = vrot.lane.b32.xlu0 %v2126, 84
    %v2166 = vpop.permute.xlu0 %2165
    %2167 = vrot.lane.b32.xlu0 %v2127, 84
    %v2168 = vpop.permute.xlu0 %2167
    %2169 = vrot.lane.b32.xlu0 %v2128, 84
    %v2170 = vpop.permute.xlu0 %2169
    %2171 = vrot.lane.b32.xlu0 %v2129, 84
    %v2172 = vpop.permute.xlu0 %2171
    %2173 = vrot.lane.b32.xlu0 %v2130, 84
    %v2174 = vpop.permute.xlu0 %2173
    %2175 = vrot.lane.b32.xlu0 %v2131, 84
    %v2176 = vpop.permute.xlu0 %2175
    %2177 = vrot.lane.b32.xlu0 %v2132, 84
    %v2178 = vpop.permute.xlu0 %2177
    %2179 = vrot.lane.b32.xlu0 %v2133, 84
    %v2180 = vpop.permute.xlu0 %2179
    %2181 = vrot.lane.b32.xlu0 %v2134, 84
    %v2182 = vpop.permute.xlu0 %2181
    %vm2199 = vcmask 720544
    %2200 = vst.msk [vmem:[#allocation3] sm:$0xff] %vm2199, %v2152
    %2201 = vst.msk [vmem:[#allocation3 + $0x8] sm:$0xff] %vm2199, %v2154
    %2202 = vst.msk [vmem:[#allocation3 + $0x10] sm:$0xff] %vm2199, %v2156
    %2203 = vst.msk [vmem:[#allocation3 + $0x18] sm:$0xff] %vm2199, %v2158
    %2204 = vst.msk [vmem:[#allocation3 + $0x20] sm:$0xff] %vm2199, %v2160
    %2205 = vst.msk [vmem:[#allocation3 + $0x28] sm:$0xff] %vm2199, %v2162
    %2206 = vst.msk [vmem:[#allocation3 + $0x30] sm:$0xff] %vm2199, %v2164
    %2207 = vst.msk [vmem:[#allocation3 + $0x38] sm:$0xff] %vm2199, %v2166
    %2208 = vst.msk [vmem:[#allocation3 + $0x40] sm:$0xff] %vm2199, %v2168
    %2209 = vst.msk [vmem:[#allocation3 + $0x48] sm:$0xff] %vm2199, %v2170
    %2210 = vst.msk [vmem:[#allocation3 + $0x50] sm:$0xff] %vm2199, %v2172
    %2211 = vst.msk [vmem:[#allocation3 + $0x58] sm:$0xff] %vm2199, %v2174
    %2212 = vst.msk [vmem:[#allocation3 + $0x60] sm:$0xff] %vm2199, %v2176
    %2213 = vst.msk [vmem:[#allocation3 + $0x68] sm:$0xff] %vm2199, %v2178
    %2214 = vst.msk [vmem:[#allocation3 + $0x70] sm:$0xff] %vm2199, %v2180
    %2215 = vst.msk [vmem:[#allocation3 + $0x78] sm:$0xff] %vm2199, %v2182
    %v2216 = vld [vmem:[%s2021 + $0x2] sm:$0xff]
    %v2217 = vld [vmem:[%s2021 + $0x12] sm:$0xff]
    %v2218 = vld [vmem:[%s2021 + $0x22] sm:$0xff]
    %v2219 = vld [vmem:[%s2021 + $0x32] sm:$0xff]
    %v2220 = vld [vmem:[%s2021 + $0x42] sm:$0xff]
    %v2221 = vld [vmem:[%s2021 + $0x52] sm:$0xff]
    %v2222 = vld [vmem:[%s2021 + $0x62] sm:$0xff]
    %v2223 = vld [vmem:[%s2021 + $0x72] sm:$0xff]
    %v2224 = vld [vmem:[%s2021 + $0xc2] sm:$0xff]
    %v2225 = vld [vmem:[%s2021 + $0xd2] sm:$0xff]
    %v2226 = vld [vmem:[%s2021 + $0xe2] sm:$0xff]
    %v2227 = vld [vmem:[%s2021 + $0xf2] sm:$0xff]
    %v2228 = vld [vmem:[%s2021 + $0x102] sm:$0xff]
    %v2229 = vld [vmem:[%s2021 + $0x112] sm:$0xff]
    %v2230 = vld [vmem:[%s2021 + $0x122] sm:$0xff]
    %v2231 = vld [vmem:[%s2021 + $0x132] sm:$0xff]
    %2248 = vrot.lane.b32.xlu0 %v2216, 88
    %v2249 = vpop.permute.xlu0 %2248
    %2250 = vrot.lane.b32.xlu0 %v2217, 88
    %v2251 = vpop.permute.xlu0 %2250
    %2252 = vrot.lane.b32.xlu0 %v2218, 88
    %v2253 = vpop.permute.xlu0 %2252
    %2254 = vrot.lane.b32.xlu0 %v2219, 88
    %v2255 = vpop.permute.xlu0 %2254
    %2256 = vrot.lane.b32.xlu0 %v2220, 88
    %v2257 = vpop.permute.xlu0 %2256
    %2258 = vrot.lane.b32.xlu0 %v2221, 88
    %v2259 = vpop.permute.xlu0 %2258
    %2260 = vrot.lane.b32.xlu0 %v2222, 88
    %v2261 = vpop.permute.xlu0 %2260
    %2262 = vrot.lane.b32.xlu0 %v2223, 88
    %v2263 = vpop.permute.xlu0 %2262
    %2264 = vrot.lane.b32.xlu0 %v2224, 88
    %v2265 = vpop.permute.xlu0 %2264
    %2266 = vrot.lane.b32.xlu0 %v2225, 88
    %v2267 = vpop.permute.xlu0 %2266
    %2268 = vrot.lane.b32.xlu0 %v2226, 88
    %v2269 = vpop.permute.xlu0 %2268
    %2270 = vrot.lane.b32.xlu0 %v2227, 88
    %v2271 = vpop.permute.xlu0 %2270
    %2272 = vrot.lane.b32.xlu0 %v2228, 88
    %v2273 = vpop.permute.xlu0 %2272
    %2274 = vrot.lane.b32.xlu0 %v2229, 88
    %v2275 = vpop.permute.xlu0 %2274
    %2276 = vrot.lane.b32.xlu0 %v2230, 88
    %v2277 = vpop.permute.xlu0 %2276
    %2278 = vrot.lane.b32.xlu0 %v2231, 88
    %v2279 = vpop.permute.xlu0 %2278
    %vm2296 = vcmask 753344
    %2297 = vst.msk [vmem:[#allocation3] sm:$0xff] %vm2296, %v2249
    %2298 = vst.msk [vmem:[#allocation3 + $0x8] sm:$0xff] %vm2296, %v2251
    %2299 = vst.msk [vmem:[#allocation3 + $0x10] sm:$0xff] %vm2296, %v2253
    %2300 = vst.msk [vmem:[#allocation3 + $0x18] sm:$0xff] %vm2296, %v2255
    %2301 = vst.msk [vmem:[#allocation3 + $0x20] sm:$0xff] %vm2296, %v2257
    %2302 = vst.msk [vmem:[#allocation3 + $0x28] sm:$0xff] %vm2296, %v2259
    %2303 = vst.msk [vmem:[#allocation3 + $0x30] sm:$0xff] %vm2296, %v2261
    %2304 = vst.msk [vmem:[#allocation3 + $0x38] sm:$0xff] %vm2296, %v2263
    %2305 = vst.msk [vmem:[#allocation3 + $0x40] sm:$0xff] %vm2296, %v2265
    %2306 = vst.msk [vmem:[#allocation3 + $0x48] sm:$0xff] %vm2296, %v2267
    %2307 = vst.msk [vmem:[#allocation3 + $0x50] sm:$0xff] %vm2296, %v2269
    %2308 = vst.msk [vmem:[#allocation3 + $0x58] sm:$0xff] %vm2296, %v2271
    %2309 = vst.msk [vmem:[#allocation3 + $0x60] sm:$0xff] %vm2296, %v2273
    %2310 = vst.msk [vmem:[#allocation3 + $0x68] sm:$0xff] %vm2296, %v2275
    %2311 = vst.msk [vmem:[#allocation3 + $0x70] sm:$0xff] %vm2296, %v2277
    %2312 = vst.msk [vmem:[#allocation3 + $0x78] sm:$0xff] %vm2296, %v2279
    %v2313 = vld [vmem:[%s2021 + $0x3] sm:$0xff]
    %v2314 = vld [vmem:[%s2021 + $0x13] sm:$0xff]
    %v2315 = vld [vmem:[%s2021 + $0x23] sm:$0xff]
    %v2316 = vld [vmem:[%s2021 + $0x33] sm:$0xff]
    %v2317 = vld [vmem:[%s2021 + $0x43] sm:$0xff]
    %v2318 = vld [vmem:[%s2021 + $0x53] sm:$0xff]
    %v2319 = vld [vmem:[%s2021 + $0x63] sm:$0xff]
    %v2320 = vld [vmem:[%s2021 + $0x73] sm:$0xff]
    %v2321 = vld [vmem:[%s2021 + $0xc3] sm:$0xff]
    %v2322 = vld [vmem:[%s2021 + $0xd3] sm:$0xff]
    %v2323 = vld [vmem:[%s2021 + $0xe3] sm:$0xff]
    %v2324 = vld [vmem:[%s2021 + $0xf3] sm:$0xff]
    %v2325 = vld [vmem:[%s2021 + $0x103] sm:$0xff]
    %v2326 = vld [vmem:[%s2021 + $0x113] sm:$0xff]
    %v2327 = vld [vmem:[%s2021 + $0x123] sm:$0xff]
    %v2328 = vld [vmem:[%s2021 + $0x133] sm:$0xff]
    %2345 = vrot.lane.b32.xlu0 %v2313, 92
    %v2346 = vpop.permute.xlu0 %2345
    %2347 = vrot.lane.b32.xlu0 %v2314, 92
    %v2348 = vpop.permute.xlu0 %2347
    %2349 = vrot.lane.b32.xlu0 %v2315, 92
    %v2350 = vpop.permute.xlu0 %2349
    %2351 = vrot.lane.b32.xlu0 %v2316, 92
    %v2352 = vpop.permute.xlu0 %2351
    %2353 = vrot.lane.b32.xlu0 %v2317, 92
    %v2354 = vpop.permute.xlu0 %2353
    %2355 = vrot.lane.b32.xlu0 %v2318, 92
    %v2356 = vpop.permute.xlu0 %2355
    %2357 = vrot.lane.b32.xlu0 %v2319, 92
    %v2358 = vpop.permute.xlu0 %2357
    %2359 = vrot.lane.b32.xlu0 %v2320, 92
    %v2360 = vpop.permute.xlu0 %2359
    %2361 = vrot.lane.b32.xlu0 %v2321, 92
    %v2362 = vpop.permute.xlu0 %2361
    %2363 = vrot.lane.b32.xlu0 %v2322, 92
    %v2364 = vpop.permute.xlu0 %2363
    %2365 = vrot.lane.b32.xlu0 %v2323, 92
    %v2366 = vpop.permute.xlu0 %2365
    %2367 = vrot.lane.b32.xlu0 %v2324, 92
    %v2368 = vpop.permute.xlu0 %2367
    %2369 = vrot.lane.b32.xlu0 %v2325, 92
    %v2370 = vpop.permute.xlu0 %2369
    %2371 = vrot.lane.b32.xlu0 %v2326, 92
    %v2372 = vpop.permute.xlu0 %2371
    %2373 = vrot.lane.b32.xlu0 %v2327, 92
    %v2374 = vpop.permute.xlu0 %2373
    %2375 = vrot.lane.b32.xlu0 %v2328, 92
    %v2376 = vpop.permute.xlu0 %2375
    %vm2393 = vcmask 786144
    %2394 = vst.msk [vmem:[#allocation3] sm:$0xff] %vm2393, %v2346
    %2395 = vst.msk [vmem:[#allocation3 + $0x8] sm:$0xff] %vm2393, %v2348
    %2396 = vst.msk [vmem:[#allocation3 + $0x10] sm:$0xff] %vm2393, %v2350
    %2397 = vst.msk [vmem:[#allocation3 + $0x18] sm:$0xff] %vm2393, %v2352
    %2398 = vst.msk [vmem:[#allocation3 + $0x20] sm:$0xff] %vm2393, %v2354
    %2399 = vst.msk [vmem:[#allocation3 + $0x28] sm:$0xff] %vm2393, %v2356
    %2400 = vst.msk [vmem:[#allocation3 + $0x30] sm:$0xff] %vm2393, %v2358
    %2401 = vst.msk [vmem:[#allocation3 + $0x38] sm:$0xff] %vm2393, %v2360
    %2402 = vst.msk [vmem:[#allocation3 + $0x40] sm:$0xff] %vm2393, %v2362
    %2403 = vst.msk [vmem:[#allocation3 + $0x48] sm:$0xff] %vm2393, %v2364
    %2404 = vst.msk [vmem:[#allocation3 + $0x50] sm:$0xff] %vm2393, %v2366
    %2405 = vst.msk [vmem:[#allocation3 + $0x58] sm:$0xff] %vm2393, %v2368
    %2406 = vst.msk [vmem:[#allocation3 + $0x60] sm:$0xff] %vm2393, %v2370
    %2407 = vst.msk [vmem:[#allocation3 + $0x68] sm:$0xff] %vm2393, %v2372
    %2408 = vst.msk [vmem:[#allocation3 + $0x70] sm:$0xff] %vm2393, %v2374
    %2409 = vst.msk [vmem:[#allocation3 + $0x78] sm:$0xff] %vm2393, %v2376
    %v2410 = vld [vmem:[%s2021 + $0x4] sm:$0xff]
    %v2411 = vld [vmem:[%s2021 + $0x14] sm:$0xff]
    %v2412 = vld [vmem:[%s2021 + $0x24] sm:$0xff]
    %v2413 = vld [vmem:[%s2021 + $0x34] sm:$0xff]
    %v2414 = vld [vmem:[%s2021 + $0x44] sm:$0xff]
    %v2415 = vld [vmem:[%s2021 + $0x54] sm:$0xff]
    %v2416 = vld [vmem:[%s2021 + $0x64] sm:$0xff]
    %v2417 = vld [vmem:[%s2021 + $0x74] sm:$0xff]
    %v2418 = vld [vmem:[%s2021 + $0xc4] sm:$0xff]
    %v2419 = vld [vmem:[%s2021 + $0xd4] sm:$0xff]
    %v2420 = vld [vmem:[%s2021 + $0xe4] sm:$0xff]
    %v2421 = vld [vmem:[%s2021 + $0xf4] sm:$0xff]
    %v2422 = vld [vmem:[%s2021 + $0x104] sm:$0xff]
    %v2423 = vld [vmem:[%s2021 + $0x114] sm:$0xff]
    %v2424 = vld [vmem:[%s2021 + $0x124] sm:$0xff]
    %v2425 = vld [vmem:[%s2021 + $0x134] sm:$0xff]
    %2442 = vrot.lane.b32.xlu0 %v2410, 96
    %v2443 = vpop.permute.xlu0 %2442
    %2444 = vrot.lane.b32.xlu0 %v2411, 96
    %v2445 = vpop.permute.xlu0 %2444
    %2446 = vrot.lane.b32.xlu0 %v2412, 96
    %v2447 = vpop.permute.xlu0 %2446
    %2448 = vrot.lane.b32.xlu0 %v2413, 96
    %v2449 = vpop.permute.xlu0 %2448
    %2450 = vrot.lane.b32.xlu0 %v2414, 96
    %v2451 = vpop.permute.xlu0 %2450
    %2452 = vrot.lane.b32.xlu0 %v2415, 96
    %v2453 = vpop.permute.xlu0 %2452
    %2454 = vrot.lane.b32.xlu0 %v2416, 96
    %v2455 = vpop.permute.xlu0 %2454
    %2456 = vrot.lane.b32.xlu0 %v2417, 96
    %v2457 = vpop.permute.xlu0 %2456
    %2458 = vrot.lane.b32.xlu0 %v2418, 96
    %v2459 = vpop.permute.xlu0 %2458
    %2460 = vrot.lane.b32.xlu0 %v2419, 96
    %v2461 = vpop.permute.xlu0 %2460
    %2462 = vrot.lane.b32.xlu0 %v2420, 96
    %v2463 = vpop.permute.xlu0 %2462
    %2464 = vrot.lane.b32.xlu0 %v2421, 96
    %v2465 = vpop.permute.xlu0 %2464
    %2466 = vrot.lane.b32.xlu0 %v2422, 96
    %v2467 = vpop.permute.xlu0 %2466
    %2468 = vrot.lane.b32.xlu0 %v2423, 96
    %v2469 = vpop.permute.xlu0 %2468
    %2470 = vrot.lane.b32.xlu0 %v2424, 96
    %v2471 = vpop.permute.xlu0 %2470
    %2472 = vrot.lane.b32.xlu0 %v2425, 96
    %v2473 = vpop.permute.xlu0 %2472
    %vm2490 = vcmask 818944
    %2491 = vst.msk [vmem:[#allocation3] sm:$0xff] %vm2490, %v2443
    %2492 = vst.msk [vmem:[#allocation3 + $0x8] sm:$0xff] %vm2490, %v2445
    %2493 = vst.msk [vmem:[#allocation3 + $0x10] sm:$0xff] %vm2490, %v2447
    %2494 = vst.msk [vmem:[#allocation3 + $0x18] sm:$0xff] %vm2490, %v2449
    %2495 = vst.msk [vmem:[#allocation3 + $0x20] sm:$0xff] %vm2490, %v2451
    %2496 = vst.msk [vmem:[#allocation3 + $0x28] sm:$0xff] %vm2490, %v2453
    %2497 = vst.msk [vmem:[#allocation3 + $0x30] sm:$0xff] %vm2490, %v2455
    %2498 = vst.msk [vmem:[#allocation3 + $0x38] sm:$0xff] %vm2490, %v2457
    %2499 = vst.msk [vmem:[#allocation3 + $0x40] sm:$0xff] %vm2490, %v2459
    %2500 = vst.msk [vmem:[#allocation3 + $0x48] sm:$0xff] %vm2490, %v2461
    %2501 = vst.msk [vmem:[#allocation3 + $0x50] sm:$0xff] %vm2490, %v2463
    %2502 = vst.msk [vmem:[#allocation3 + $0x58] sm:$0xff] %vm2490, %v2465
    %2503 = vst.msk [vmem:[#allocation3 + $0x60] sm:$0xff] %vm2490, %v2467
    %2504 = vst.msk [vmem:[#allocation3 + $0x68] sm:$0xff] %vm2490, %v2469
    %2505 = vst.msk [vmem:[#allocation3 + $0x70] sm:$0xff] %vm2490, %v2471
    %2506 = vst.msk [vmem:[#allocation3 + $0x78] sm:$0xff] %vm2490, %v2473
    %v2507 = vld [vmem:[#allocation3] sm:$0xff]
    %v2508 = vld [vmem:[#allocation3 + $0x8] sm:$0xff]
    %v2509 = vld [vmem:[#allocation3 + $0x10] sm:$0xff]
    %v2510 = vld [vmem:[#allocation3 + $0x18] sm:$0xff]
    %v2511 = vld [vmem:[#allocation3 + $0x20] sm:$0xff]
    %v2512 = vld [vmem:[#allocation3 + $0x28] sm:$0xff]
    %v2513 = vld [vmem:[#allocation3 + $0x30] sm:$0xff]
    %v2514 = vld [vmem:[#allocation3 + $0x38] sm:$0xff]
    %v2515 = vld [vmem:[#allocation3 + $0x40] sm:$0xff]
    %v2516 = vld [vmem:[#allocation3 + $0x48] sm:$0xff]
    %v2517 = vld [vmem:[#allocation3 + $0x50] sm:$0xff]
    %v2518 = vld [vmem:[#allocation3 + $0x58] sm:$0xff]
    %v2519 = vld [vmem:[#allocation3 + $0x60] sm:$0xff]
    %v2520 = vld [vmem:[#allocation3 + $0x68] sm:$0xff]
    %v2521 = vld [vmem:[#allocation3 + $0x70] sm:$0xff]
    %v2522 = vld [vmem:[#allocation3 + $0x78] sm:$0xff]
    %v2523 = vpack.c.bf16 %v2508, %v2507
    %v2524 = vpack.c.bf16 %v2510, %v2509
    %v2525 = vpack.c.bf16 %v2512, %v2511
    %v2526 = vpack.c.bf16 %v2514, %v2513
    %v2527 = vpack.c.bf16 %v2516, %v2515
    %v2528 = vpack.c.bf16 %v2518, %v2517
    %v2529 = vpack.c.bf16 %v2520, %v2519
    %v2530 = vpack.c.bf16 %v2522, %v2521
    %v2531 = vld [vmem:[%s1] sm:$0xf]
    %v2532 = vld [vmem:[%s1 + $0x4] sm:$0xf]
    %v2533 = vld [vmem:[%s1 + $0x8] sm:$0xf]
    %v2534 = vld [vmem:[%s1 + $0xc] sm:$0xf]
    %v2535 = vld [vmem:[%s1 + $0x10] sm:$0xf]
    %v2536 = vld [vmem:[%s1 + $0x14] sm:$0xf]
    %v2537 = vld [vmem:[%s1 + $0x18] sm:$0xf]
    %v2538 = vld [vmem:[%s1 + $0x1c] sm:$0xf]
    %v2539 = vld [vmem:[%s1 + $0x20] sm:$0xf]
    %v2540 = vld [vmem:[%s1 + $0x24] sm:$0xf]
    %v2541 = vld [vmem:[%s1 + $0x28] sm:$0xf]
    %v2542 = vld [vmem:[%s1 + $0x2c] sm:$0xf]
    %v2543 = vld [vmem:[%s1 + $0x30] sm:$0xf]
    %v2544 = vld [vmem:[%s1 + $0x34] sm:$0xf]
    %v2545 = vld [vmem:[%s1 + $0x38] sm:$0xf]
    %v2546 = vld [vmem:[%s1 + $0x3c] sm:$0xf]
    %v2547 = vld [vmem:[%s2] sm:$0x1]
    %v2549 = vlaneseq
    %v2550 = vshrl.u32 %v2549, 7
    %v2551 = vsub.s32 0, %v2550
    %v2552 = vrot.slane %v2547, %v2551
    %v2570 = vunpack.c.l.b16 %v2531
    %v2571 = vunpack.c.l.b16 %v2532
    %v2572 = vunpack.c.l.b16 %v2533
    %v2573 = vunpack.c.l.b16 %v2534
    %v2574 = vunpack.c.l.b16 %v2535
    %v2575 = vunpack.c.l.b16 %v2536
    %v2576 = vunpack.c.l.b16 %v2537
    %v2577 = vunpack.c.l.b16 %v2538
    %v2578 = vunpack.c.l.b16 %v2539
    %v2579 = vunpack.c.l.b16 %v2540
    %v2580 = vunpack.c.l.b16 %v2541
    %v2581 = vunpack.c.l.b16 %v2542
    %v2582 = vunpack.c.l.b16 %v2543
    %v2583 = vunpack.c.l.b16 %v2544
    %v2584 = vunpack.c.l.b16 %v2545
    %v2585 = vunpack.c.l.b16 %v2546
    %v2586 = vpack.c.b16 %v2571, %v2570
    %v2587 = vpack.c.b16 %v2573, %v2572
    %v2588 = vpack.c.b16 %v2575, %v2574
    %v2589 = vpack.c.b16 %v2577, %v2576
    %v2590 = vpack.c.b16 %v2579, %v2578
    %v2591 = vpack.c.b16 %v2581, %v2580
    %v2592 = vpack.c.b16 %v2583, %v2582
    %v2593 = vpack.c.b16 %v2585, %v2584
    %2602 = vmatprep.subr.bf16.mxu0 0
    %2603 = vmatpush1.bf16.msra.mxu0 %v2586
    %2604 = vmatprep.subr.bf16.mxu0 0
    %2605 = vmatpush1.bf16.msra.mxu0 %v2587
    %2606 = vmatprep.subr.bf16.mxu0 0
    %2607 = vmatpush1.bf16.msra.mxu0 %v2588
    %2608 = vmatprep.subr.bf16.mxu0 0
    %2609 = vmatpush1.bf16.msra.mxu0 %v2589
    %2610 = vmatprep.subr.bf16.mxu0 0
    %2611 = vmatpush1.bf16.msra.mxu0 %v2590
    %2612 = vmatprep.subr.bf16.mxu0 0
    %2613 = vmatpush1.bf16.msra.mxu0 %v2591
    %2614 = vmatprep.subr.bf16.mxu0 0
    %2615 = vmatpush1.bf16.msra.mxu0 %v2592
    %2616 = vmatprep.subr.bf16.mxu0 0
    %2617 = vmatpush1.bf16.msra.mxu0 %v2593
    %2618 = vmatprep.subr.bf16.mxu0 0
    %2619 = vmatpush1.bf16.msra.mxu0 0
    %2620 = vmatprep.subr.bf16.mxu0 0
    %2621 = vmatpush1.bf16.msra.mxu0 0
    %2622 = vmatprep.subr.bf16.mxu0 0
    %2623 = vmatpush1.bf16.msra.mxu0 0
    %2624 = vmatprep.subr.bf16.mxu0 0
    %2625 = vmatpush1.bf16.msra.mxu0 0
    %2626 = vmatprep.subr.bf16.mxu0 0
    %2627 = vmatpush1.bf16.msra.mxu0 0
    %2628 = vmatprep.subr.bf16.mxu0 0
    %2629 = vmatpush1.bf16.msra.mxu0 0
    %2630 = vmatprep.subr.bf16.mxu0 0
    %2631 = vmatpush1.bf16.msra.mxu0 0
    %2632 = vmatprep.subr.bf16.mxu0 0
    %2633 = vmatpush1.bf16.msra.mxu0 0
    %2634 = vmatprep.mubr.bf16.mxu0 0
    %2635 = vmatmul.mubr.bf16.gmra.mrb[0].mxu0 %v2523
    %v2636 = vpop.f32.mrb[0].mxu0
    %v2637 = vadd.f32 %v2552, %v2636
    %v2638 = vpop.f32.mrb[0].mxu0
    %v2639 = vpop.f32.mrb[0].mxu0
    %v2640 = vadd.f32 %v2552, %v2639
    %v2641 = vpop.f32.mrb[0].mxu0
    %2642 = vmatprep.mubr.bf16.mxu0 0
    %2643 = vmatmul.mubr.bf16.gmra.mrb[0].mxu0 %v2524
    %v2644 = vpop.f32.mrb[0].mxu0
    %v2645 = vadd.f32 %v2552, %v2644
    %v2646 = vpop.f32.mrb[0].mxu0
    %v2647 = vpop.f32.mrb[0].mxu0
    %v2648 = vadd.f32 %v2552, %v2647
    %v2649 = vpop.f32.mrb[0].mxu0
    %2650 = vmatprep.mubr.bf16.mxu0 0
    %2651 = vmatmul.mubr.bf16.gmra.mrb[0].mxu0 %v2525
    %v2652 = vpop.f32.mrb[0].mxu0
    %v2653 = vadd.f32 %v2552, %v2652
    %v2654 = vpop.f32.mrb[0].mxu0
    %v2655 = vpop.f32.mrb[0].mxu0
    %v2656 = vadd.f32 %v2552, %v2655
    %v2657 = vpop.f32.mrb[0].mxu0
    %2658 = vmatprep.mubr.bf16.mxu0 0
    %2659 = vmatmul.mubr.bf16.gmra.mrb[0].mxu0 %v2526
    %v2660 = vpop.f32.mrb[0].mxu0
    %v2661 = vadd.f32 %v2552, %v2660
    %v2662 = vpop.f32.mrb[0].mxu0
    %v2663 = vpop.f32.mrb[0].mxu0
    %v2664 = vadd.f32 %v2552, %v2663
    %v2665 = vpop.f32.mrb[0].mxu0
    %2666 = vmatprep.mubr.bf16.mxu0 0
    %2667 = vmatmul.mubr.bf16.gmra.mrb[0].mxu0 %v2527
    %v2668 = vpop.f32.mrb[0].mxu0
    %v2669 = vadd.f32 %v2552, %v2668
    %v2670 = vpop.f32.mrb[0].mxu0
    %v2671 = vpop.f32.mrb[0].mxu0
    %v2672 = vadd.f32 %v2552, %v2671
    %v2673 = vpop.f32.mrb[0].mxu0
    %2674 = vmatprep.mubr.bf16.mxu0 0
    %2675 = vmatmul.mubr.bf16.gmra.mrb[0].mxu0 %v2528
    %v2676 = vpop.f32.mrb[0].mxu0
    %v2677 = vadd.f32 %v2552, %v2676
    %v2678 = vpop.f32.mrb[0].mxu0
    %v2679 = vpop.f32.mrb[0].mxu0
    %v2680 = vadd.f32 %v2552, %v2679
    %v2681 = vpop.f32.mrb[0].mxu0
    %2682 = vmatprep.mubr.bf16.mxu0 0
    %2683 = vmatmul.mubr.bf16.gmra.mrb[0].mxu0 %v2529
    %v2684 = vpop.f32.mrb[0].mxu0
    %v2685 = vadd.f32 %v2552, %v2684
    %v2686 = vpop.f32.mrb[0].mxu0
    %v2687 = vpop.f32.mrb[0].mxu0
    %v2688 = vadd.f32 %v2552, %v2687
    %v2689 = vpop.f32.mrb[0].mxu0
    %2690 = vmatprep.mubr.bf16.mxu0 0
    %2691 = vmatmul.mubr.bf16.gmra.mrb[0].mxu0 %v2530
    %v2692 = vpop.f32.mrb[0].mxu0
    %v2693 = vadd.f32 %v2552, %v2692
    %v2694 = vpop.f32.mrb[0].mxu0
    %v2695 = vpop.f32.mrb[0].mxu0
    %v2696 = vadd.f32 %v2552, %v2695
    %v2697 = vpop.f32.mrb[0].mxu0
    %2698 = vdwg.mxu0
    %v2699 = vld [vmem:[%s3] sm:$0x1]
    %v2700 = vld [vmem:[%s4] sm:$0x1]
    %v2701 = vadd.f32 %v2637, %v2640
    %v2702 = vadd.f32 %v2701, %v2645
    %v2703 = vadd.f32 %v2702, %v2648
    %v2704 = vadd.f32 %v2703, %v2653
    %v2705 = vadd.f32 %v2704, %v2656
    %v2706 = vadd.f32 %v2705, %v2661
    %v2707 = vadd.f32 %v2706, %v2664
    %v2708 = vadd.f32 %v2707, %v2669
    %v2709 = vadd.f32 %v2708, %v2672
    %v2710 = vadd.f32 %v2709, %v2677
    %v2711 = vadd.f32 %v2710, %v2680
    %v2712 = vadd.f32 %v2711, %v2685
    %v2713 = vadd.f32 %v2712, %v2688
    %v2714 = vadd.f32 %v2713, %v2693
    %v2715 = vadd.f32 %v2714, %v2696
    %v2716 = vrot.slane %v2715, 4
    %v2717 = vadd.f32 %v2715, %v2716
    %v2718 = vrot.slane %v2717, 2
    %v2719 = vadd.f32 %v2717, %v2718
    %v2720 = vrot.slane %v2719, 1
    %v2721 = vadd.f32 %v2719, %v2720
    %v2722 = vrcp.pop 128.0
    %v2723 = vmul.f32 %v2721, %v2722
    %v2724 = vsub.f32 %v2637, %v2723
    %v2725 = vsub.f32 %v2640, %v2723
    %v2726 = vsub.f32 %v2645, %v2723
    %v2727 = vsub.f32 %v2648, %v2723
    %v2728 = vsub.f32 %v2653, %v2723
    %v2729 = vsub.f32 %v2656, %v2723
    %v2730 = vsub.f32 %v2661, %v2723
    %v2731 = vsub.f32 %v2664, %v2723
    %v2732 = vsub.f32 %v2669, %v2723
    %v2733 = vsub.f32 %v2672, %v2723
    %v2734 = vsub.f32 %v2677, %v2723
    %v2735 = vsub.f32 %v2680, %v2723
    %v2736 = vsub.f32 %v2685, %v2723
    %v2737 = vsub.f32 %v2688, %v2723
    %v2738 = vsub.f32 %v2693, %v2723
    %v2739 = vsub.f32 %v2696, %v2723
    %v2740 = vmul.f32 %v2724, %v2724
    %v2741 = vmul.f32 %v2725, %v2725
    %v2742 = vmul.f32 %v2726, %v2726
    %v2743 = vmul.f32 %v2727, %v2727
    %v2744 = vmul.f32 %v2728, %v2728
    %v2745 = vmul.f32 %v2729, %v2729
    %v2746 = vmul.f32 %v2730, %v2730
    %v2747 = vmul.f32 %v2731, %v2731
    %v2748 = vmul.f32 %v2732, %v2732
    %v2749 = vmul.f32 %v2733, %v2733
    %v2750 = vmul.f32 %v2734, %v2734
    %v2751 = vmul.f32 %v2735, %v2735
    %v2752 = vmul.f32 %v2736, %v2736
    %v2753 = vmul.f32 %v2737, %v2737
    %v2754 = vmul.f32 %v2738, %v2738
    %v2755 = vmul.f32 %v2739, %v2739
    %v2756 = vadd.f32 %v2740, %v2741
    %v2757 = vadd.f32 %v2756, %v2742
    %v2758 = vadd.f32 %v2757, %v2743
    %v2759 = vadd.f32 %v2758, %v2744
    %v2760 = vadd.f32 %v2759, %v2745
    %v2761 = vadd.f32 %v2760, %v2746
    %v2762 = vadd.f32 %v2761, %v2747
    %v2763 = vadd.f32 %v2762, %v2748
    %v2764 = vadd.f32 %v2763, %v2749
    %v2765 = vadd.f32 %v2764, %v2750
    %v2766 = vadd.f32 %v2765, %v2751
    %v2767 = vadd.f32 %v2766, %v2752
    %v2768 = vadd.f32 %v2767, %v2753
    %v2769 = vadd.f32 %v2768, %v2754
    %v2770 = vadd.f32 %v2769, %v2755
    %v2771 = vrot.slane %v2770, 4
    %v2772 = vadd.f32 %v2770, %v2771
    %v2773 = vrot.slane %v2772, 2
    %v2774 = vadd.f32 %v2772, %v2773
    %v2775 = vrot.slane %v2774, 1
    %v2776 = vadd.f32 %v2774, %v2775
    %v2777 = vmul.f32 %v2776, %v2722
    %v2778 = vadd.f32 %v2777, 1e-05
    %v2779 = vrsqrt.pop %v2778
    %v2780 = vmul.f32 %v2724, %v2779
    %v2781 = vmul.f32 %v2725, %v2779
    %v2782 = vmul.f32 %v2726, %v2779
    %v2783 = vmul.f32 %v2727, %v2779
    %v2784 = vmul.f32 %v2728, %v2779
    %v2785 = vmul.f32 %v2729, %v2779
    %v2786 = vmul.f32 %v2730, %v2779
    %v2787 = vmul.f32 %v2731, %v2779
    %v2788 = vmul.f32 %v2732, %v2779
    %v2789 = vmul.f32 %v2733, %v2779
    %v2790 = vmul.f32 %v2734, %v2779
    %v2791 = vmul.f32 %v2735, %v2779
    %v2792 = vmul.f32 %v2736, %v2779
    %v2793 = vmul.f32 %v2737, %v2779
    %v2794 = vmul.f32 %v2738, %v2779
    %v2795 = vmul.f32 %v2739, %v2779
    %v2797 = vlaneseq
    %v2798 = vshrl.u32 %v2797, 7
    %v2799 = vsub.s32 0, %v2798
    %v2800 = vrot.slane %v2699, %v2799
    %v2802 = vmul.f32 %v2800, %v2780
    %v2803 = vmul.f32 %v2800, %v2781
    %v2804 = vmul.f32 %v2800, %v2782
    %v2805 = vmul.f32 %v2800, %v2783
    %v2806 = vmul.f32 %v2800, %v2784
    %v2807 = vmul.f32 %v2800, %v2785
    %v2808 = vmul.f32 %v2800, %v2786
    %v2809 = vmul.f32 %v2800, %v2787
    %v2810 = vmul.f32 %v2800, %v2788
    %v2811 = vmul.f32 %v2800, %v2789
    %v2812 = vmul.f32 %v2800, %v2790
    %v2813 = vmul.f32 %v2800, %v2791
    %v2814 = vmul.f32 %v2800, %v2792
    %v2815 = vmul.f32 %v2800, %v2793
    %v2816 = vmul.f32 %v2800, %v2794
    %v2817 = vmul.f32 %v2800, %v2795
    %v2819 = vlaneseq
    %v2820 = vshrl.u32 %v2819, 7
    %v2821 = vsub.s32 0, %v2820
    %v2822 = vrot.slane %v2700, %v2821
    %v2824 = vadd.f32 %v2802, %v2822
    %v2825 = vadd.f32 %v2803, %v2822
    %v2826 = vadd.f32 %v2804, %v2822
    %v2827 = vadd.f32 %v2805, %v2822
    %v2828 = vadd.f32 %v2806, %v2822
    %v2829 = vadd.f32 %v2807, %v2822
    %v2830 = vadd.f32 %v2808, %v2822
    %v2831 = vadd.f32 %v2809, %v2822
    %v2832 = vadd.f32 %v2810, %v2822
    %v2833 = vadd.f32 %v2811, %v2822
    %v2834 = vadd.f32 %v2812, %v2822
    %v2835 = vadd.f32 %v2813, %v2822
    %v2836 = vadd.f32 %v2814, %v2822
    %v2837 = vadd.f32 %v2815, %v2822
    %v2838 = vadd.f32 %v2816, %v2822
    %v2839 = vadd.f32 %v2817, %v2822
    %vm2840 = vcmp.gt.f32.partialorder %v2824, 0.0
    %vm2841 = vcmp.gt.f32.partialorder %v2825, 0.0
    %vm2842 = vcmp.gt.f32.partialorder %v2826, 0.0
    %vm2843 = vcmp.gt.f32.partialorder %v2827, 0.0
    %vm2844 = vcmp.gt.f32.partialorder %v2828, 0.0
    %vm2845 = vcmp.gt.f32.partialorder %v2829, 0.0
    %vm2846 = vcmp.gt.f32.partialorder %v2830, 0.0
    %vm2847 = vcmp.gt.f32.partialorder %v2831, 0.0
    %vm2848 = vcmp.gt.f32.partialorder %v2832, 0.0
    %vm2849 = vcmp.gt.f32.partialorder %v2833, 0.0
    %vm2850 = vcmp.gt.f32.partialorder %v2834, 0.0
    %vm2851 = vcmp.gt.f32.partialorder %v2835, 0.0
    %vm2852 = vcmp.gt.f32.partialorder %v2836, 0.0
    %vm2853 = vcmp.gt.f32.partialorder %v2837, 0.0
    %vm2854 = vcmp.gt.f32.partialorder %v2838, 0.0
    %vm2855 = vcmp.gt.f32.partialorder %v2839, 0.0
    %v2856 = vmin.f32 %v2824, 0.0
    %v2857 = vmin.f32 %v2825, 0.0
    %v2858 = vmin.f32 %v2826, 0.0
    %v2859 = vmin.f32 %v2827, 0.0
    %v2860 = vmin.f32 %v2828, 0.0
    %v2861 = vmin.f32 %v2829, 0.0
    %v2862 = vmin.f32 %v2830, 0.0
    %v2863 = vmin.f32 %v2831, 0.0
    %v2864 = vmin.f32 %v2832, 0.0
    %v2865 = vmin.f32 %v2833, 0.0
    %v2866 = vmin.f32 %v2834, 0.0
    %v2867 = vmin.f32 %v2835, 0.0
    %v2868 = vmin.f32 %v2836, 0.0
    %v2869 = vmin.f32 %v2837, 0.0
    %v2870 = vmin.f32 %v2838, 0.0
    %v2871 = vmin.f32 %v2839, 0.0
    %v2872 = vmul.f32 %v2856, 1.442695
    %v2873 = vpow.pop %v2872
    %v2874 = vmul.f32 %v2857, 1.442695
    %v2875 = vpow.pop %v2874
    %v2876 = vmul.f32 %v2858, 1.442695
    %v2877 = vpow.pop %v2876
    %v2878 = vmul.f32 %v2859, 1.442695
    %v2879 = vpow.pop %v2878
    %v2880 = vmul.f32 %v2860, 1.442695
    %v2881 = vpow.pop %v2880
    %v2882 = vmul.f32 %v2861, 1.442695
    %v2883 = vpow.pop %v2882
    %v2884 = vmul.f32 %v2862, 1.442695
    %v2885 = vpow.pop %v2884
    %v2886 = vmul.f32 %v2863, 1.442695
    %v2887 = vpow.pop %v2886
    %v2888 = vmul.f32 %v2864, 1.442695
    %v2889 = vpow.pop %v2888
    %v2890 = vmul.f32 %v2865, 1.442695
    %v2891 = vpow.pop %v2890
    %v2892 = vmul.f32 %v2866, 1.442695
    %v2893 = vpow.pop %v2892
    %v2894 = vmul.f32 %v2867, 1.442695
    %v2895 = vpow.pop %v2894
    %v2896 = vmul.f32 %v2868, 1.442695
    %v2897 = vpow.pop %v2896
    %v2898 = vmul.f32 %v2869, 1.442695
    %v2899 = vpow.pop %v2898
    %v2900 = vmul.f32 %v2870, 1.442695
    %v2901 = vpow.pop %v2900
    %v2902 = vmul.f32 %v2871, 1.442695
    %v2903 = vpow.pop %v2902
    %v2904 = vsub.f32 %v2873, 1.0
    %v2905 = vsub.f32 %v2875, 1.0
    %v2906 = vsub.f32 %v2877, 1.0
    %v2907 = vsub.f32 %v2879, 1.0
    %v2908 = vsub.f32 %v2881, 1.0
    %v2909 = vsub.f32 %v2883, 1.0
    %v2910 = vsub.f32 %v2885, 1.0
    %v2911 = vsub.f32 %v2887, 1.0
    %v2912 = vsub.f32 %v2889, 1.0
    %v2913 = vsub.f32 %v2891, 1.0
    %v2914 = vsub.f32 %v2893, 1.0
    %v2915 = vsub.f32 %v2895, 1.0
    %v2916 = vsub.f32 %v2897, 1.0
    %v2917 = vsub.f32 %v2899, 1.0
    %v2918 = vsub.f32 %v2901, 1.0
    %v2919 = vsub.f32 %v2903, 1.0
    %v2920 = vsel %vm2840, %v2824, %v2904
    %v2921 = vsel %vm2841, %v2825, %v2905
    %v2922 = vsel %vm2842, %v2826, %v2906
    %v2923 = vsel %vm2843, %v2827, %v2907
    %v2924 = vsel %vm2844, %v2828, %v2908
    %v2925 = vsel %vm2845, %v2829, %v2909
    %v2926 = vsel %vm2846, %v2830, %v2910
    %v2927 = vsel %vm2847, %v2831, %v2911
    %v2928 = vsel %vm2848, %v2832, %v2912
    %v2929 = vsel %vm2849, %v2833, %v2913
    %v2930 = vsel %vm2850, %v2834, %v2914
    %v2931 = vsel %vm2851, %v2835, %v2915
    %v2932 = vsel %vm2852, %v2836, %v2916
    %v2933 = vsel %vm2853, %v2837, %v2917
    %v2934 = vsel %vm2854, %v2838, %v2918
    %v2935 = vsel %vm2855, %v2839, %v2919
    %vm2936 = vcmask 64512
    %2937 = vst.msk [vmem:[#allocation4] sm:$0xff] %vm2936, 0.0
    %vm2938 = vcmask 58368
    %2939 = vst.msk [vmem:[#allocation4 + $0x8] sm:$0x3] %vm2938, 0.0
    %2940 = vst.msk [vmem:[#allocation4 + $0x10] sm:$0xff] %vm2936, 0.0
    %2941 = vst.msk [vmem:[#allocation4 + $0x18] sm:$0x3] %vm2938, 0.0
    %2942 = vst.msk [vmem:[#allocation4 + $0x20] sm:$0xff] %vm2936, 0.0
    %2943 = vst.msk [vmem:[#allocation4 + $0x28] sm:$0x3] %vm2938, 0.0
    %2944 = vst.msk [vmem:[#allocation4 + $0x30] sm:$0xff] %vm2936, 0.0
    %2945 = vst.msk [vmem:[#allocation4 + $0x38] sm:$0x3] %vm2938, 0.0
    %2946 = vst.msk [vmem:[#allocation4 + $0x40] sm:$0xff] %vm2936, 0.0
    %2947 = vst.msk [vmem:[#allocation4 + $0x48] sm:$0x3] %vm2938, 0.0
    %2948 = vst.msk [vmem:[#allocation4 + $0x50] sm:$0xff] %vm2936, 0.0
    %2949 = vst.msk [vmem:[#allocation4 + $0x58] sm:$0x3] %vm2938, 0.0
    %2950 = vst.msk [vmem:[#allocation4 + $0x60] sm:$0xff] %vm2936, 0.0
    %2951 = vst.msk [vmem:[#allocation4 + $0x68] sm:$0x3] %vm2938, 0.0
    %2952 = vst.msk [vmem:[#allocation4 + $0x70] sm:$0xff] %vm2936, 0.0
    %2953 = vst.msk [vmem:[#allocation4 + $0x78] sm:$0x3] %vm2938, 0.0
    %2954 = vst.msk [vmem:[#allocation4 + $0x80] sm:$0xff] %vm2936, 0.0
    %2955 = vst.msk [vmem:[#allocation4 + $0x88] sm:$0x3] %vm2938, 0.0
    %2956 = vst.msk [vmem:[#allocation4 + $0x90] sm:$0xff] %vm2936, 0.0
    %2957 = vst.msk [vmem:[#allocation4 + $0x98] sm:$0x3] %vm2938, 0.0
    %2958 = vst.msk [vmem:[#allocation4 + $0xa0] sm:$0xff] %vm2936, 0.0
    %2959 = vst.msk [vmem:[#allocation4 + $0xa8] sm:$0x3] %vm2938, 0.0
    %2960 = vst.msk [vmem:[#allocation4 + $0xb0] sm:$0xff] %vm2936, 0.0
    %2961 = vst.msk [vmem:[#allocation4 + $0xb8] sm:$0x3] %vm2938, 0.0
    %2962 = vst.msk [vmem:[#allocation4 + $0xc0] sm:$0xff] %vm2936, 0.0
    %2963 = vst.msk [vmem:[#allocation4 + $0xc8] sm:$0x3] %vm2938, 0.0
    %2964 = vst.msk [vmem:[#allocation4 + $0xd0] sm:$0xff] %vm2936, 0.0
    %2965 = vst.msk [vmem:[#allocation4 + $0xd8] sm:$0x3] %vm2938, 0.0
    %2966 = vst.msk [vmem:[#allocation4 + $0xe0] sm:$0xff] %vm2936, 0.0
    %2967 = vst.msk [vmem:[#allocation4 + $0xe8] sm:$0x3] %vm2938, 0.0
    %2968 = vst.msk [vmem:[#allocation4 + $0xf0] sm:$0xff] %vm2936, 0.0
    %2969 = vst.msk [vmem:[#allocation4 + $0xf8] sm:$0x3] %vm2938, 0.0
    %2970 = vst.msk [vmem:[#allocation4 + $0x100] sm:$0xff] %vm2936, 0.0
    %2971 = vst.msk [vmem:[#allocation4 + $0x108] sm:$0x3] %vm2938, 0.0
    %2972 = vst.msk [vmem:[#allocation4 + $0x110] sm:$0xff] %vm2936, 0.0
    %2973 = vst.msk [vmem:[#allocation4 + $0x118] sm:$0x3] %vm2938, 0.0
    %2974 = vst.msk [vmem:[#allocation4 + $0x120] sm:$0xff] %vm2936, 0.0
    %2975 = vst.msk [vmem:[#allocation4 + $0x128] sm:$0x3] %vm2938, 0.0
    %2976 = vst.msk [vmem:[#allocation4 + $0x130] sm:$0xff] %vm2936, 0.0
    %2977 = vst.msk [vmem:[#allocation4 + $0x138] sm:$0x3] %vm2938, 0.0
    %s2978 = scalar_lea.vmem [#allocation4], 16
    %2979 = vst.msk [vmem:[%s2978 + $0x1] sm:$0xff] %vm2936, %v2920
    %s2980 = scalar_lea.vmem [#allocation4], 32
    %2981 = vst.msk [vmem:[%s2980 + $0x1] sm:$0xff] %vm2936, %v2921
    %s2982 = scalar_lea.vmem [#allocation4], 48
    %2983 = vst.msk [vmem:[%s2982 + $0x1] sm:$0xff] %vm2936, %v2922
    %s2984 = scalar_lea.vmem [#allocation4], 64
    %2985 = vst.msk [vmem:[%s2984 + $0x1] sm:$0xff] %vm2936, %v2923
    %s2986 = scalar_lea.vmem [#allocation4], 80
    %2987 = vst.msk [vmem:[%s2986 + $0x1] sm:$0xff] %vm2936, %v2924
    %s2988 = scalar_lea.vmem [#allocation4], 96
    %2989 = vst.msk [vmem:[%s2988 + $0x1] sm:$0xff] %vm2936, %v2925
    %s2990 = scalar_lea.vmem [#allocation4], 112
    %2991 = vst.msk [vmem:[%s2990 + $0x1] sm:$0xff] %vm2936, %v2926
    %s2992 = scalar_lea.vmem [#allocation4], 128
    %2993 = vst.msk [vmem:[%s2992 + $0x1] sm:$0xff] %vm2936, %v2927
    %s2994 = scalar_lea.vmem [#allocation4], 176
    %2995 = vst.msk [vmem:[%s2994 + $0x1] sm:$0xff] %vm2936, %v2928
    %s2996 = scalar_lea.vmem [#allocation4], 192
    %2997 = vst.msk [vmem:[%s2996 + $0x1] sm:$0xff] %vm2936, %v2929
    %s2998 = scalar_lea.vmem [#allocation4], 208
    %2999 = vst.msk [vmem:[%s2998 + $0x1] sm:$0xff] %vm2936, %v2930
    %s3000 = scalar_lea.vmem [#allocation4], 224
    %3001 = vst.msk [vmem:[%s3000 + $0x1] sm:$0xff] %vm2936, %v2931
    %s3002 = scalar_lea.vmem [#allocation4], 240
    %3003 = vst.msk [vmem:[%s3002 + $0x1] sm:$0xff] %vm2936, %v2932
    %s3004 = scalar_lea.vmem [#allocation4], 256
    %3005 = vst.msk [vmem:[%s3004 + $0x1] sm:$0xff] %vm2936, %v2933
    %s3006 = scalar_lea.vmem [#allocation4], 272
    %3007 = vst.msk [vmem:[%s3006 + $0x1] sm:$0xff] %vm2936, %v2934
    %s3008 = scalar_lea.vmem [#allocation4], 288
    %3009 = vst.msk [vmem:[%s3008 + $0x1] sm:$0xff] %vm2936, %v2935
    %3010 = vst [vmem:[#allocation5] sm:$0xff] 0.0
    %3011 = vst [vmem:[#allocation5 + $0x8] sm:$0xff] 0.0
    %3012 = vst [vmem:[#allocation5 + $0x10] sm:$0xff] 0.0
    %3013 = vst [vmem:[#allocation5 + $0x18] sm:$0xff] 0.0
    %3014 = vst [vmem:[#allocation5 + $0x20] sm:$0xff] 0.0
    %3015 = vst [vmem:[#allocation5 + $0x28] sm:$0xff] 0.0
    %3016 = vst [vmem:[#allocation5 + $0x30] sm:$0xff] 0.0
    %3017 = vst [vmem:[#allocation5 + $0x38] sm:$0xff] 0.0
    %3018 = vst [vmem:[#allocation5 + $0x40] sm:$0xff] 0.0
    %3019 = vst [vmem:[#allocation5 + $0x48] sm:$0xff] 0.0
    %3020 = vst [vmem:[#allocation5 + $0x50] sm:$0xff] 0.0
    %3021 = vst [vmem:[#allocation5 + $0x58] sm:$0xff] 0.0
    %3022 = vst [vmem:[#allocation5 + $0x60] sm:$0xff] 0.0
    %3023 = vst [vmem:[#allocation5 + $0x68] sm:$0xff] 0.0
    %3024 = vst [vmem:[#allocation5 + $0x70] sm:$0xff] 0.0
    %3025 = vst [vmem:[#allocation5 + $0x78] sm:$0xff] 0.0
    %v3026 = vld [vmem:[#allocation4] sm:$0xff]
    %v3027 = vld [vmem:[#allocation4 + $0x10] sm:$0xff]
    %v3028 = vld [vmem:[#allocation4 + $0x20] sm:$0xff]
    %v3029 = vld [vmem:[#allocation4 + $0x30] sm:$0xff]
    %v3030 = vld [vmem:[#allocation4 + $0x40] sm:$0xff]
    %v3031 = vld [vmem:[#allocation4 + $0x50] sm:$0xff]
    %v3032 = vld [vmem:[#allocation4 + $0x60] sm:$0xff]
    %v3033 = vld [vmem:[#allocation4 + $0x70] sm:$0xff]
    %v3034 = vld [vmem:[#allocation4 + $0xa0] sm:$0xff]
    %v3035 = vld [vmem:[#allocation4 + $0xb0] sm:$0xff]
    %v3036 = vld [vmem:[#allocation4 + $0xc0] sm:$0xff]
    %v3037 = vld [vmem:[#allocation4 + $0xd0] sm:$0xff]
    %v3038 = vld [vmem:[#allocation4 + $0xe0] sm:$0xff]
    %v3039 = vld [vmem:[#allocation4 + $0xf0] sm:$0xff]
    %v3040 = vld [vmem:[#allocation4 + $0x100] sm:$0xff]
    %v3041 = vld [vmem:[#allocation4 + $0x110] sm:$0xff]
    %3042 = vst.msk [vmem:[#allocation5] sm:$0xff] %vm2936, %v3026
    %3043 = vst.msk [vmem:[#allocation5 + $0x8] sm:$0xff] %vm2936, %v3027
    %3044 = vst.msk [vmem:[#allocation5 + $0x10] sm:$0xff] %vm2936, %v3028
    %3045 = vst.msk [vmem:[#allocation5 + $0x18] sm:$0xff] %vm2936, %v3029
    %3046 = vst.msk [vmem:[#allocation5 + $0x20] sm:$0xff] %vm2936, %v3030
    %3047 = vst.msk [vmem:[#allocation5 + $0x28] sm:$0xff] %vm2936, %v3031
    %3048 = vst.msk [vmem:[#allocation5 + $0x30] sm:$0xff] %vm2936, %v3032
    %3049 = vst.msk [vmem:[#allocation5 + $0x38] sm:$0xff] %vm2936, %v3033
    %3050 = vst.msk [vmem:[#allocation5 + $0x40] sm:$0xff] %vm2936, %v3034
    %3051 = vst.msk [vmem:[#allocation5 + $0x48] sm:$0xff] %vm2936, %v3035
    %3052 = vst.msk [vmem:[#allocation5 + $0x50] sm:$0xff] %vm2936, %v3036
    %3053 = vst.msk [vmem:[#allocation5 + $0x58] sm:$0xff] %vm2936, %v3037
    %3054 = vst.msk [vmem:[#allocation5 + $0x60] sm:$0xff] %vm2936, %v3038
    %3055 = vst.msk [vmem:[#allocation5 + $0x68] sm:$0xff] %vm2936, %v3039
    %3056 = vst.msk [vmem:[#allocation5 + $0x70] sm:$0xff] %vm2936, %v3040
    %3057 = vst.msk [vmem:[#allocation5 + $0x78] sm:$0xff] %vm2936, %v3041
    %v3058 = vld [vmem:[#allocation4 + $0x1] sm:$0xff]
    %v3059 = vld [vmem:[#allocation4 + $0x11] sm:$0xff]
    %v3060 = vld [vmem:[#allocation4 + $0x21] sm:$0xff]
    %v3061 = vld [vmem:[#allocation4 + $0x31] sm:$0xff]
    %v3062 = vld [vmem:[#allocation4 + $0x41] sm:$0xff]
    %v3063 = vld [vmem:[#allocation4 + $0x51] sm:$0xff]
    %v3064 = vld [vmem:[#allocation4 + $0x61] sm:$0xff]
    %v3065 = vld [vmem:[#allocation4 + $0x71] sm:$0xff]
    %v3066 = vld [vmem:[#allocation4 + $0xa1] sm:$0xff]
    %v3067 = vld [vmem:[#allocation4 + $0xb1] sm:$0xff]
    %v3068 = vld [vmem:[#allocation4 + $0xc1] sm:$0xff]
    %v3069 = vld [vmem:[#allocation4 + $0xd1] sm:$0xff]
    %v3070 = vld [vmem:[#allocation4 + $0xe1] sm:$0xff]
    %v3071 = vld [vmem:[#allocation4 + $0xf1] sm:$0xff]
    %v3072 = vld [vmem:[#allocation4 + $0x101] sm:$0xff]
    %v3073 = vld [vmem:[#allocation4 + $0x111] sm:$0xff]
    %3090 = vrot.lane.b32.xlu0 %v3058, 8
    %v3091 = vpop.permute.xlu0 %3090
    %3092 = vrot.lane.b32.xlu0 %v3059, 8
    %v3093 = vpop.permute.xlu0 %3092
    %3094 = vrot.lane.b32.xlu0 %v3060, 8
    %v3095 = vpop.permute.xlu0 %3094
    %3096 = vrot.lane.b32.xlu0 %v3061, 8
    %v3097 = vpop.permute.xlu0 %3096
    %3098 = vrot.lane.b32.xlu0 %v3062, 8
    %v3099 = vpop.permute.xlu0 %3098
    %3100 = vrot.lane.b32.xlu0 %v3063, 8
    %v3101 = vpop.permute.xlu0 %3100
    %3102 = vrot.lane.b32.xlu0 %v3064, 8
    %v3103 = vpop.permute.xlu0 %3102
    %3104 = vrot.lane.b32.xlu0 %v3065, 8
    %v3105 = vpop.permute.xlu0 %3104
    %3106 = vrot.lane.b32.xlu0 %v3066, 8
    %v3107 = vpop.permute.xlu0 %3106
    %3108 = vrot.lane.b32.xlu0 %v3067, 8
    %v3109 = vpop.permute.xlu0 %3108
    %3110 = vrot.lane.b32.xlu0 %v3068, 8
    %v3111 = vpop.permute.xlu0 %3110
    %3112 = vrot.lane.b32.xlu0 %v3069, 8
    %v3113 = vpop.permute.xlu0 %3112
    %3114 = vrot.lane.b32.xlu0 %v3070, 8
    %v3115 = vpop.permute.xlu0 %3114
    %3116 = vrot.lane.b32.xlu0 %v3071, 8
    %v3117 = vpop.permute.xlu0 %3116
    %3118 = vrot.lane.b32.xlu0 %v3072, 8
    %v3119 = vpop.permute.xlu0 %3118
    %3120 = vrot.lane.b32.xlu0 %v3073, 8
    %v3121 = vpop.permute.xlu0 %3120
    %vm3138 = vcmask 130112
    %3139 = vst.msk [vmem:[#allocation5] sm:$0xff] %vm3138, %v3091
    %3140 = vst.msk [vmem:[#allocation5 + $0x8] sm:$0xff] %vm3138, %v3093
    %3141 = vst.msk [vmem:[#allocation5 + $0x10] sm:$0xff] %vm3138, %v3095
    %3142 = vst.msk [vmem:[#allocation5 + $0x18] sm:$0xff] %vm3138, %v3097
    %3143 = vst.msk [vmem:[#allocation5 + $0x20] sm:$0xff] %vm3138, %v3099
    %3144 = vst.msk [vmem:[#allocation5 + $0x28] sm:$0xff] %vm3138, %v3101
    %3145 = vst.msk [vmem:[#allocation5 + $0x30] sm:$0xff] %vm3138, %v3103
    %3146 = vst.msk [vmem:[#allocation5 + $0x38] sm:$0xff] %vm3138, %v3105
    %3147 = vst.msk [vmem:[#allocation5 + $0x40] sm:$0xff] %vm3138, %v3107
    %3148 = vst.msk [vmem:[#allocation5 + $0x48] sm:$0xff] %vm3138, %v3109
    %3149 = vst.msk [vmem:[#allocation5 + $0x50] sm:$0xff] %vm3138, %v3111
    %3150 = vst.msk [vmem:[#allocation5 + $0x58] sm:$0xff] %vm3138, %v3113
    %3151 = vst.msk [vmem:[#allocation5 + $0x60] sm:$0xff] %vm3138, %v3115
    %3152 = vst.msk [vmem:[#allocation5 + $0x68] sm:$0xff] %vm3138, %v3117
    %3153 = vst.msk [vmem:[#allocation5 + $0x70] sm:$0xff] %vm3138, %v3119
    %3154 = vst.msk [vmem:[#allocation5 + $0x78] sm:$0xff] %vm3138, %v3121
    %v3155 = vld [vmem:[#allocation4 + $0x2] sm:$0xff]
    %v3156 = vld [vmem:[#allocation4 + $0x12] sm:$0xff]
    %v3157 = vld [vmem:[#allocation4 + $0x22] sm:$0xff]
    %v3158 = vld [vmem:[#allocation4 + $0x32] sm:$0xff]
    %v3159 = vld [vmem:[#allocation4 + $0x42] sm:$0xff]
    %v3160 = vld [vmem:[#allocation4 + $0x52] sm:$0xff]
    %v3161 = vld [vmem:[#allocation4 + $0x62] sm:$0xff]
    %v3162 = vld [vmem:[#allocation4 + $0x72] sm:$0xff]
    %v3163 = vld [vmem:[#allocation4 + $0xa2] sm:$0xff]
    %v3164 = vld [vmem:[#allocation4 + $0xb2] sm:$0xff]
    %v3165 = vld [vmem:[#allocation4 + $0xc2] sm:$0xff]
    %v3166 = vld [vmem:[#allocation4 + $0xd2] sm:$0xff]
    %v3167 = vld [vmem:[#allocation4 + $0xe2] sm:$0xff]
    %v3168 = vld [vmem:[#allocation4 + $0xf2] sm:$0xff]
    %v3169 = vld [vmem:[#allocation4 + $0x102] sm:$0xff]
    %v3170 = vld [vmem:[#allocation4 + $0x112] sm:$0xff]
    %3187 = vrot.lane.b32.xlu0 %v3155, 16
    %v3188 = vpop.permute.xlu0 %3187
    %3189 = vrot.lane.b32.xlu0 %v3156, 16
    %v3190 = vpop.permute.xlu0 %3189
    %3191 = vrot.lane.b32.xlu0 %v3157, 16
    %v3192 = vpop.permute.xlu0 %3191
    %3193 = vrot.lane.b32.xlu0 %v3158, 16
    %v3194 = vpop.permute.xlu0 %3193
    %3195 = vrot.lane.b32.xlu0 %v3159, 16
    %v3196 = vpop.permute.xlu0 %3195
    %3197 = vrot.lane.b32.xlu0 %v3160, 16
    %v3198 = vpop.permute.xlu0 %3197
    %3199 = vrot.lane.b32.xlu0 %v3161, 16
    %v3200 = vpop.permute.xlu0 %3199
    %3201 = vrot.lane.b32.xlu0 %v3162, 16
    %v3202 = vpop.permute.xlu0 %3201
    %3203 = vrot.lane.b32.xlu0 %v3163, 16
    %v3204 = vpop.permute.xlu0 %3203
    %3205 = vrot.lane.b32.xlu0 %v3164, 16
    %v3206 = vpop.permute.xlu0 %3205
    %3207 = vrot.lane.b32.xlu0 %v3165, 16
    %v3208 = vpop.permute.xlu0 %3207
    %3209 = vrot.lane.b32.xlu0 %v3166, 16
    %v3210 = vpop.permute.xlu0 %3209
    %3211 = vrot.lane.b32.xlu0 %v3167, 16
    %v3212 = vpop.permute.xlu0 %3211
    %3213 = vrot.lane.b32.xlu0 %v3168, 16
    %v3214 = vpop.permute.xlu0 %3213
    %3215 = vrot.lane.b32.xlu0 %v3169, 16
    %v3216 = vpop.permute.xlu0 %3215
    %3217 = vrot.lane.b32.xlu0 %v3170, 16
    %v3218 = vpop.permute.xlu0 %3217
    %vm3235 = vcmask 195712
    %3236 = vst.msk [vmem:[#allocation5] sm:$0xff] %vm3235, %v3188
    %3237 = vst.msk [vmem:[#allocation5 + $0x8] sm:$0xff] %vm3235, %v3190
    %3238 = vst.msk [vmem:[#allocation5 + $0x10] sm:$0xff] %vm3235, %v3192
    %3239 = vst.msk [vmem:[#allocation5 + $0x18] sm:$0xff] %vm3235, %v3194
    %3240 = vst.msk [vmem:[#allocation5 + $0x20] sm:$0xff] %vm3235, %v3196
    %3241 = vst.msk [vmem:[#allocation5 + $0x28] sm:$0xff] %vm3235, %v3198
    %3242 = vst.msk [vmem:[#allocation5 + $0x30] sm:$0xff] %vm3235, %v3200
    %3243 = vst.msk [vmem:[#allocation5 + $0x38] sm:$0xff] %vm3235, %v3202
    %3244 = vst.msk [vmem:[#allocation5 + $0x40] sm:$0xff] %vm3235, %v3204
    %3245 = vst.msk [vmem:[#allocation5 + $0x48] sm:$0xff] %vm3235, %v3206
    %3246 = vst.msk [vmem:[#allocation5 + $0x50] sm:$0xff] %vm3235, %v3208
    %3247 = vst.msk [vmem:[#allocation5 + $0x58] sm:$0xff] %vm3235, %v3210
    %3248 = vst.msk [vmem:[#allocation5 + $0x60] sm:$0xff] %vm3235, %v3212
    %3249 = vst.msk [vmem:[#allocation5 + $0x68] sm:$0xff] %vm3235, %v3214
    %3250 = vst.msk [vmem:[#allocation5 + $0x70] sm:$0xff] %vm3235, %v3216
    %3251 = vst.msk [vmem:[#allocation5 + $0x78] sm:$0xff] %vm3235, %v3218
    %v3252 = vld [vmem:[%s2978] sm:$0xff]
    %v3253 = vld [vmem:[%s2978 + $0x10] sm:$0xff]
    %v3254 = vld [vmem:[%s2978 + $0x20] sm:$0xff]
    %v3255 = vld [vmem:[%s2978 + $0x30] sm:$0xff]
    %v3256 = vld [vmem:[%s2978 + $0x40] sm:$0xff]
    %v3257 = vld [vmem:[%s2978 + $0x50] sm:$0xff]
    %v3258 = vld [vmem:[%s2978 + $0x60] sm:$0xff]
    %v3259 = vld [vmem:[%s2978 + $0x70] sm:$0xff]
    %v3260 = vld [vmem:[%s2978 + $0xa0] sm:$0xff]
    %v3261 = vld [vmem:[%s2978 + $0xb0] sm:$0xff]
    %v3262 = vld [vmem:[%s2978 + $0xc0] sm:$0xff]
    %v3263 = vld [vmem:[%s2978 + $0xd0] sm:$0xff]
    %v3264 = vld [vmem:[%s2978 + $0xe0] sm:$0xff]
    %v3265 = vld [vmem:[%s2978 + $0xf0] sm:$0xff]
    %v3266 = vld [vmem:[%s2978 + $0x100] sm:$0xff]
    %v3267 = vld [vmem:[%s2978 + $0x110] sm:$0xff]
    %3284 = vrot.lane.b32.xlu0 %v3252, 24
    %v3285 = vpop.permute.xlu0 %3284
    %3286 = vrot.lane.b32.xlu0 %v3253, 24
    %v3287 = vpop.permute.xlu0 %3286
    %3288 = vrot.lane.b32.xlu0 %v3254, 24
    %v3289 = vpop.permute.xlu0 %3288
    %3290 = vrot.lane.b32.xlu0 %v3255, 24
    %v3291 = vpop.permute.xlu0 %3290
    %3292 = vrot.lane.b32.xlu0 %v3256, 24
    %v3293 = vpop.permute.xlu0 %3292
    %3294 = vrot.lane.b32.xlu0 %v3257, 24
    %v3295 = vpop.permute.xlu0 %3294
    %3296 = vrot.lane.b32.xlu0 %v3258, 24
    %v3297 = vpop.permute.xlu0 %3296
    %3298 = vrot.lane.b32.xlu0 %v3259, 24
    %v3299 = vpop.permute.xlu0 %3298
    %3300 = vrot.lane.b32.xlu0 %v3260, 24
    %v3301 = vpop.permute.xlu0 %3300
    %3302 = vrot.lane.b32.xlu0 %v3261, 24
    %v3303 = vpop.permute.xlu0 %3302
    %3304 = vrot.lane.b32.xlu0 %v3262, 24
    %v3305 = vpop.permute.xlu0 %3304
    %3306 = vrot.lane.b32.xlu0 %v3263, 24
    %v3307 = vpop.permute.xlu0 %3306
    %3308 = vrot.lane.b32.xlu0 %v3264, 24
    %v3309 = vpop.permute.xlu0 %3308
    %3310 = vrot.lane.b32.xlu0 %v3265, 24
    %v3311 = vpop.permute.xlu0 %3310
    %3312 = vrot.lane.b32.xlu0 %v3266, 24
    %v3313 = vpop.permute.xlu0 %3312
    %3314 = vrot.lane.b32.xlu0 %v3267, 24
    %v3315 = vpop.permute.xlu0 %3314
    %vm3332 = vcmask 261312
    %3333 = vst.msk [vmem:[#allocation5] sm:$0xff] %vm3332, %v3285
    %3334 = vst.msk [vmem:[#allocation5 + $0x8] sm:$0xff] %vm3332, %v3287
    %3335 = vst.msk [vmem:[#allocation5 + $0x10] sm:$0xff] %vm3332, %v3289
    %3336 = vst.msk [vmem:[#allocation5 + $0x18] sm:$0xff] %vm3332, %v3291
    %3337 = vst.msk [vmem:[#allocation5 + $0x20] sm:$0xff] %vm3332, %v3293
    %3338 = vst.msk [vmem:[#allocation5 + $0x28] sm:$0xff] %vm3332, %v3295
    %3339 = vst.msk [vmem:[#allocation5 + $0x30] sm:$0xff] %vm3332, %v3297
    %3340 = vst.msk [vmem:[#allocation5 + $0x38] sm:$0xff] %vm3332, %v3299
    %3341 = vst.msk [vmem:[#allocation5 + $0x40] sm:$0xff] %vm3332, %v3301
    %3342 = vst.msk [vmem:[#allocation5 + $0x48] sm:$0xff] %vm3332, %v3303
    %3343 = vst.msk [vmem:[#allocation5 + $0x50] sm:$0xff] %vm3332, %v3305
    %3344 = vst.msk [vmem:[#allocation5 + $0x58] sm:$0xff] %vm3332, %v3307
    %3345 = vst.msk [vmem:[#allocation5 + $0x60] sm:$0xff] %vm3332, %v3309
    %3346 = vst.msk [vmem:[#allocation5 + $0x68] sm:$0xff] %vm3332, %v3311
    %3347 = vst.msk [vmem:[#allocation5 + $0x70] sm:$0xff] %vm3332, %v3313
    %3348 = vst.msk [vmem:[#allocation5 + $0x78] sm:$0xff] %vm3332, %v3315
    %v3349 = vld [vmem:[%s2978 + $0x1] sm:$0xff]
    %v3350 = vld [vmem:[%s2978 + $0x11] sm:$0xff]
    %v3351 = vld [vmem:[%s2978 + $0x21] sm:$0xff]
    %v3352 = vld [vmem:[%s2978 + $0x31] sm:$0xff]
    %v3353 = vld [vmem:[%s2978 + $0x41] sm:$0xff]
    %v3354 = vld [vmem:[%s2978 + $0x51] sm:$0xff]
    %v3355 = vld [vmem:[%s2978 + $0x61] sm:$0xff]
    %v3356 = vld [vmem:[%s2978 + $0x71] sm:$0xff]
    %v3357 = vld [vmem:[%s2978 + $0xa1] sm:$0xff]
    %v3358 = vld [vmem:[%s2978 + $0xb1] sm:$0xff]
    %v3359 = vld [vmem:[%s2978 + $0xc1] sm:$0xff]
    %v3360 = vld [vmem:[%s2978 + $0xd1] sm:$0xff]
    %v3361 = vld [vmem:[%s2978 + $0xe1] sm:$0xff]
    %v3362 = vld [vmem:[%s2978 + $0xf1] sm:$0xff]
    %v3363 = vld [vmem:[%s2978 + $0x101] sm:$0xff]
    %v3364 = vld [vmem:[%s2978 + $0x111] sm:$0xff]
    %3381 = vrot.lane.b32.xlu0 %v3349, 32
    %v3382 = vpop.permute.xlu0 %3381
    %3383 = vrot.lane.b32.xlu0 %v3350, 32
    %v3384 = vpop.permute.xlu0 %3383
    %3385 = vrot.lane.b32.xlu0 %v3351, 32
    %v3386 = vpop.permute.xlu0 %3385
    %3387 = vrot.lane.b32.xlu0 %v3352, 32
    %v3388 = vpop.permute.xlu0 %3387
    %3389 = vrot.lane.b32.xlu0 %v3353, 32
    %v3390 = vpop.permute.xlu0 %3389
    %3391 = vrot.lane.b32.xlu0 %v3354, 32
    %v3392 = vpop.permute.xlu0 %3391
    %3393 = vrot.lane.b32.xlu0 %v3355, 32
    %v3394 = vpop.permute.xlu0 %3393
    %3395 = vrot.lane.b32.xlu0 %v3356, 32
    %v3396 = vpop.permute.xlu0 %3395
    %3397 = vrot.lane.b32.xlu0 %v3357, 32
    %v3398 = vpop.permute.xlu0 %3397
    %3399 = vrot.lane.b32.xlu0 %v3358, 32
    %v3400 = vpop.permute.xlu0 %3399
    %3401 = vrot.lane.b32.xlu0 %v3359, 32
    %v3402 = vpop.permute.xlu0 %3401
    %3403 = vrot.lane.b32.xlu0 %v3360, 32
    %v3404 = vpop.permute.xlu0 %3403
    %3405 = vrot.lane.b32.xlu0 %v3361, 32
    %v3406 = vpop.permute.xlu0 %3405
    %3407 = vrot.lane.b32.xlu0 %v3362, 32
    %v3408 = vpop.permute.xlu0 %3407
    %3409 = vrot.lane.b32.xlu0 %v3363, 32
    %v3410 = vpop.permute.xlu0 %3409
    %3411 = vrot.lane.b32.xlu0 %v3364, 32
    %v3412 = vpop.permute.xlu0 %3411
    %vm3429 = vcmask 326912
    %3430 = vst.msk [vmem:[#allocation5] sm:$0xff] %vm3429, %v3382
    %3431 = vst.msk [vmem:[#allocation5 + $0x8] sm:$0xff] %vm3429, %v3384
    %3432 = vst.msk [vmem:[#allocation5 + $0x10] sm:$0xff] %vm3429, %v3386
    %3433 = vst.msk [vmem:[#allocation5 + $0x18] sm:$0xff] %vm3429, %v3388
    %3434 = vst.msk [vmem:[#allocation5 + $0x20] sm:$0xff] %vm3429, %v3390
    %3435 = vst.msk [vmem:[#allocation5 + $0x28] sm:$0xff] %vm3429, %v3392
    %3436 = vst.msk [vmem:[#allocation5 + $0x30] sm:$0xff] %vm3429, %v3394
    %3437 = vst.msk [vmem:[#allocation5 + $0x38] sm:$0xff] %vm3429, %v3396
    %3438 = vst.msk [vmem:[#allocation5 + $0x40] sm:$0xff] %vm3429, %v3398
    %3439 = vst.msk [vmem:[#allocation5 + $0x48] sm:$0xff] %vm3429, %v3400
    %3440 = vst.msk [vmem:[#allocation5 + $0x50] sm:$0xff] %vm3429, %v3402
    %3441 = vst.msk [vmem:[#allocation5 + $0x58] sm:$0xff] %vm3429, %v3404
    %3442 = vst.msk [vmem:[#allocation5 + $0x60] sm:$0xff] %vm3429, %v3406
    %3443 = vst.msk [vmem:[#allocation5 + $0x68] sm:$0xff] %vm3429, %v3408
    %3444 = vst.msk [vmem:[#allocation5 + $0x70] sm:$0xff] %vm3429, %v3410
    %3445 = vst.msk [vmem:[#allocation5 + $0x78] sm:$0xff] %vm3429, %v3412
    %v3446 = vld [vmem:[%s2978 + $0x2] sm:$0xff]
    %v3447 = vld [vmem:[%s2978 + $0x12] sm:$0xff]
    %v3448 = vld [vmem:[%s2978 + $0x22] sm:$0xff]
    %v3449 = vld [vmem:[%s2978 + $0x32] sm:$0xff]
    %v3450 = vld [vmem:[%s2978 + $0x42] sm:$0xff]
    %v3451 = vld [vmem:[%s2978 + $0x52] sm:$0xff]
    %v3452 = vld [vmem:[%s2978 + $0x62] sm:$0xff]
    %v3453 = vld [vmem:[%s2978 + $0x72] sm:$0xff]
    %v3454 = vld [vmem:[%s2978 + $0xa2] sm:$0xff]
    %v3455 = vld [vmem:[%s2978 + $0xb2] sm:$0xff]
    %v3456 = vld [vmem:[%s2978 + $0xc2] sm:$0xff]
    %v3457 = vld [vmem:[%s2978 + $0xd2] sm:$0xff]
    %v3458 = vld [vmem:[%s2978 + $0xe2] sm:$0xff]
    %v3459 = vld [vmem:[%s2978 + $0xf2] sm:$0xff]
    %v3460 = vld [vmem:[%s2978 + $0x102] sm:$0xff]
    %v3461 = vld [vmem:[%s2978 + $0x112] sm:$0xff]
    %3478 = vrot.lane.b32.xlu0 %v3446, 40
    %v3479 = vpop.permute.xlu0 %3478
    %3480 = vrot.lane.b32.xlu0 %v3447, 40
    %v3481 = vpop.permute.xlu0 %3480
    %3482 = vrot.lane.b32.xlu0 %v3448, 40
    %v3483 = vpop.permute.xlu0 %3482
    %3484 = vrot.lane.b32.xlu0 %v3449, 40
    %v3485 = vpop.permute.xlu0 %3484
    %3486 = vrot.lane.b32.xlu0 %v3450, 40
    %v3487 = vpop.permute.xlu0 %3486
    %3488 = vrot.lane.b32.xlu0 %v3451, 40
    %v3489 = vpop.permute.xlu0 %3488
    %3490 = vrot.lane.b32.xlu0 %v3452, 40
    %v3491 = vpop.permute.xlu0 %3490
    %3492 = vrot.lane.b32.xlu0 %v3453, 40
    %v3493 = vpop.permute.xlu0 %3492
    %3494 = vrot.lane.b32.xlu0 %v3454, 40
    %v3495 = vpop.permute.xlu0 %3494
    %3496 = vrot.lane.b32.xlu0 %v3455, 40
    %v3497 = vpop.permute.xlu0 %3496
    %3498 = vrot.lane.b32.xlu0 %v3456, 40
    %v3499 = vpop.permute.xlu0 %3498
    %3500 = vrot.lane.b32.xlu0 %v3457, 40
    %v3501 = vpop.permute.xlu0 %3500
    %3502 = vrot.lane.b32.xlu0 %v3458, 40
    %v3503 = vpop.permute.xlu0 %3502
    %3504 = vrot.lane.b32.xlu0 %v3459, 40
    %v3505 = vpop.permute.xlu0 %3504
    %3506 = vrot.lane.b32.xlu0 %v3460, 40
    %v3507 = vpop.permute.xlu0 %3506
    %3508 = vrot.lane.b32.xlu0 %v3461, 40
    %v3509 = vpop.permute.xlu0 %3508
    %vm3526 = vcmask 392512
    %3527 = vst.msk [vmem:[#allocation5] sm:$0xff] %vm3526, %v3479
    %3528 = vst.msk [vmem:[#allocation5 + $0x8] sm:$0xff] %vm3526, %v3481
    %3529 = vst.msk [vmem:[#allocation5 + $0x10] sm:$0xff] %vm3526, %v3483
    %3530 = vst.msk [vmem:[#allocation5 + $0x18] sm:$0xff] %vm3526, %v3485
    %3531 = vst.msk [vmem:[#allocation5 + $0x20] sm:$0xff] %vm3526, %v3487
    %3532 = vst.msk [vmem:[#allocation5 + $0x28] sm:$0xff] %vm3526, %v3489
    %3533 = vst.msk [vmem:[#allocation5 + $0x30] sm:$0xff] %vm3526, %v3491
    %3534 = vst.msk [vmem:[#allocation5 + $0x38] sm:$0xff] %vm3526, %v3493
    %3535 = vst.msk [vmem:[#allocation5 + $0x40] sm:$0xff] %vm3526, %v3495
    %3536 = vst.msk [vmem:[#allocation5 + $0x48] sm:$0xff] %vm3526, %v3497
    %3537 = vst.msk [vmem:[#allocation5 + $0x50] sm:$0xff] %vm3526, %v3499
    %3538 = vst.msk [vmem:[#allocation5 + $0x58] sm:$0xff] %vm3526, %v3501
    %3539 = vst.msk [vmem:[#allocation5 + $0x60] sm:$0xff] %vm3526, %v3503
    %3540 = vst.msk [vmem:[#allocation5 + $0x68] sm:$0xff] %vm3526, %v3505
    %3541 = vst.msk [vmem:[#allocation5 + $0x70] sm:$0xff] %vm3526, %v3507
    %3542 = vst.msk [vmem:[#allocation5 + $0x78] sm:$0xff] %vm3526, %v3509
    %v3543 = vld [vmem:[%s2980] sm:$0xff]
    %v3544 = vld [vmem:[%s2980 + $0x10] sm:$0xff]
    %v3545 = vld [vmem:[%s2980 + $0x20] sm:$0xff]
    %v3546 = vld [vmem:[%s2980 + $0x30] sm:$0xff]
    %v3547 = vld [vmem:[%s2980 + $0x40] sm:$0xff]
    %v3548 = vld [vmem:[%s2980 + $0x50] sm:$0xff]
    %v3549 = vld [vmem:[%s2980 + $0x60] sm:$0xff]
    %v3550 = vld [vmem:[%s2980 + $0x70] sm:$0xff]
    %v3551 = vld [vmem:[%s2980 + $0xa0] sm:$0xff]
    %v3552 = vld [vmem:[%s2980 + $0xb0] sm:$0xff]
    %v3553 = vld [vmem:[%s2980 + $0xc0] sm:$0xff]
    %v3554 = vld [vmem:[%s2980 + $0xd0] sm:$0xff]
    %v3555 = vld [vmem:[%s2980 + $0xe0] sm:$0xff]
    %v3556 = vld [vmem:[%s2980 + $0xf0] sm:$0xff]
    %v3557 = vld [vmem:[%s2980 + $0x100] sm:$0xff]
    %v3558 = vld [vmem:[%s2980 + $0x110] sm:$0xff]
    %3575 = vrot.lane.b32.xlu0 %v3543, 48
    %v3576 = vpop.permute.xlu0 %3575
    %3577 = vrot.lane.b32.xlu0 %v3544, 48
    %v3578 = vpop.permute.xlu0 %3577
    %3579 = vrot.lane.b32.xlu0 %v3545, 48
    %v3580 = vpop.permute.xlu0 %3579
    %3581 = vrot.lane.b32.xlu0 %v3546, 48
    %v3582 = vpop.permute.xlu0 %3581
    %3583 = vrot.lane.b32.xlu0 %v3547, 48
    %v3584 = vpop.permute.xlu0 %3583
    %3585 = vrot.lane.b32.xlu0 %v3548, 48
    %v3586 = vpop.permute.xlu0 %3585
    %3587 = vrot.lane.b32.xlu0 %v3549, 48
    %v3588 = vpop.permute.xlu0 %3587
    %3589 = vrot.lane.b32.xlu0 %v3550, 48
    %v3590 = vpop.permute.xlu0 %3589
    %3591 = vrot.lane.b32.xlu0 %v3551, 48
    %v3592 = vpop.permute.xlu0 %3591
    %3593 = vrot.lane.b32.xlu0 %v3552, 48
    %v3594 = vpop.permute.xlu0 %3593
    %3595 = vrot.lane.b32.xlu0 %v3553, 48
    %v3596 = vpop.permute.xlu0 %3595
    %3597 = vrot.lane.b32.xlu0 %v3554, 48
    %v3598 = vpop.permute.xlu0 %3597
    %3599 = vrot.lane.b32.xlu0 %v3555, 48
    %v3600 = vpop.permute.xlu0 %3599
    %3601 = vrot.lane.b32.xlu0 %v3556, 48
    %v3602 = vpop.permute.xlu0 %3601
    %3603 = vrot.lane.b32.xlu0 %v3557, 48
    %v3604 = vpop.permute.xlu0 %3603
    %3605 = vrot.lane.b32.xlu0 %v3558, 48
    %v3606 = vpop.permute.xlu0 %3605
    %vm3623 = vcmask 458112
    %3624 = vst.msk [vmem:[#allocation5] sm:$0xff] %vm3623, %v3576
    %3625 = vst.msk [vmem:[#allocation5 + $0x8] sm:$0xff] %vm3623, %v3578
    %3626 = vst.msk [vmem:[#allocation5 + $0x10] sm:$0xff] %vm3623, %v3580
    %3627 = vst.msk [vmem:[#allocation5 + $0x18] sm:$0xff] %vm3623, %v3582
    %3628 = vst.msk [vmem:[#allocation5 + $0x20] sm:$0xff] %vm3623, %v3584
    %3629 = vst.msk [vmem:[#allocation5 + $0x28] sm:$0xff] %vm3623, %v3586
    %3630 = vst.msk [vmem:[#allocation5 + $0x30] sm:$0xff] %vm3623, %v3588
    %3631 = vst.msk [vmem:[#allocation5 + $0x38] sm:$0xff] %vm3623, %v3590
    %3632 = vst.msk [vmem:[#allocation5 + $0x40] sm:$0xff] %vm3623, %v3592
    %3633 = vst.msk [vmem:[#allocation5 + $0x48] sm:$0xff] %vm3623, %v3594
    %3634 = vst.msk [vmem:[#allocation5 + $0x50] sm:$0xff] %vm3623, %v3596
    %3635 = vst.msk [vmem:[#allocation5 + $0x58] sm:$0xff] %vm3623, %v3598
    %3636 = vst.msk [vmem:[#allocation5 + $0x60] sm:$0xff] %vm3623, %v3600
    %3637 = vst.msk [vmem:[#allocation5 + $0x68] sm:$0xff] %vm3623, %v3602
    %3638 = vst.msk [vmem:[#allocation5 + $0x70] sm:$0xff] %vm3623, %v3604
    %3639 = vst.msk [vmem:[#allocation5 + $0x78] sm:$0xff] %vm3623, %v3606
    %v3640 = vld [vmem:[%s2980 + $0x1] sm:$0xff]
    %v3641 = vld [vmem:[%s2980 + $0x11] sm:$0xff]
    %v3642 = vld [vmem:[%s2980 + $0x21] sm:$0xff]
    %v3643 = vld [vmem:[%s2980 + $0x31] sm:$0xff]
    %v3644 = vld [vmem:[%s2980 + $0x41] sm:$0xff]
    %v3645 = vld [vmem:[%s2980 + $0x51] sm:$0xff]
    %v3646 = vld [vmem:[%s2980 + $0x61] sm:$0xff]
    %v3647 = vld [vmem:[%s2980 + $0x71] sm:$0xff]
    %v3648 = vld [vmem:[%s2980 + $0xa1] sm:$0xff]
    %v3649 = vld [vmem:[%s2980 + $0xb1] sm:$0xff]
    %v3650 = vld [vmem:[%s2980 + $0xc1] sm:$0xff]
    %v3651 = vld [vmem:[%s2980 + $0xd1] sm:$0xff]
    %v3652 = vld [vmem:[%s2980 + $0xe1] sm:$0xff]
    %v3653 = vld [vmem:[%s2980 + $0xf1] sm:$0xff]
    %v3654 = vld [vmem:[%s2980 + $0x101] sm:$0xff]
    %v3655 = vld [vmem:[%s2980 + $0x111] sm:$0xff]
    %3672 = vrot.lane.b32.xlu0 %v3640, 56
    %v3673 = vpop.permute.xlu0 %3672
    %3674 = vrot.lane.b32.xlu0 %v3641, 56
    %v3675 = vpop.permute.xlu0 %3674
    %3676 = vrot.lane.b32.xlu0 %v3642, 56
    %v3677 = vpop.permute.xlu0 %3676
    %3678 = vrot.lane.b32.xlu0 %v3643, 56
    %v3679 = vpop.permute.xlu0 %3678
    %3680 = vrot.lane.b32.xlu0 %v3644, 56
    %v3681 = vpop.permute.xlu0 %3680
    %3682 = vrot.lane.b32.xlu0 %v3645, 56
    %v3683 = vpop.permute.xlu0 %3682
    %3684 = vrot.lane.b32.xlu0 %v3646, 56
    %v3685 = vpop.permute.xlu0 %3684
    %3686 = vrot.lane.b32.xlu0 %v3647, 56
    %v3687 = vpop.permute.xlu0 %3686
    %3688 = vrot.lane.b32.xlu0 %v3648, 56
    %v3689 = vpop.permute.xlu0 %3688
    %3690 = vrot.lane.b32.xlu0 %v3649, 56
    %v3691 = vpop.permute.xlu0 %3690
    %3692 = vrot.lane.b32.xlu0 %v3650, 56
    %v3693 = vpop.permute.xlu0 %3692
    %3694 = vrot.lane.b32.xlu0 %v3651, 56
    %v3695 = vpop.permute.xlu0 %3694
    %3696 = vrot.lane.b32.xlu0 %v3652, 56
    %v3697 = vpop.permute.xlu0 %3696
    %3698 = vrot.lane.b32.xlu0 %v3653, 56
    %v3699 = vpop.permute.xlu0 %3698
    %3700 = vrot.lane.b32.xlu0 %v3654, 56
    %v3701 = vpop.permute.xlu0 %3700
    %3702 = vrot.lane.b32.xlu0 %v3655, 56
    %v3703 = vpop.permute.xlu0 %3702
    %vm3720 = vcmask 523712
    %3721 = vst.msk [vmem:[#allocation5] sm:$0xff] %vm3720, %v3673
    %3722 = vst.msk [vmem:[#allocation5 + $0x8] sm:$0xff] %vm3720, %v3675
    %3723 = vst.msk [vmem:[#allocation5 + $0x10] sm:$0xff] %vm3720, %v3677
    %3724 = vst.msk [vmem:[#allocation5 + $0x18] sm:$0xff] %vm3720, %v3679
    %3725 = vst.msk [vmem:[#allocation5 + $0x20] sm:$0xff] %vm3720, %v3681
    %3726 = vst.msk [vmem:[#allocation5 + $0x28] sm:$0xff] %vm3720, %v3683
    %3727 = vst.msk [vmem:[#allocation5 + $0x30] sm:$0xff] %vm3720, %v3685
    %3728 = vst.msk [vmem:[#allocation5 + $0x38] sm:$0xff] %vm3720, %v3687
    %3729 = vst.msk [vmem:[#allocation5 + $0x40] sm:$0xff] %vm3720, %v3689
    %3730 = vst.msk [vmem:[#allocation5 + $0x48] sm:$0xff] %vm3720, %v3691
    %3731 = vst.msk [vmem:[#allocation5 + $0x50] sm:$0xff] %vm3720, %v3693
    %3732 = vst.msk [vmem:[#allocation5 + $0x58] sm:$0xff] %vm3720, %v3695
    %3733 = vst.msk [vmem:[#allocation5 + $0x60] sm:$0xff] %vm3720, %v3697
    %3734 = vst.msk [vmem:[#allocation5 + $0x68] sm:$0xff] %vm3720, %v3699
    %3735 = vst.msk [vmem:[#allocation5 + $0x70] sm:$0xff] %vm3720, %v3701
    %3736 = vst.msk [vmem:[#allocation5 + $0x78] sm:$0xff] %vm3720, %v3703
    %v3737 = vld [vmem:[%s2980 + $0x2] sm:$0xff]
    %v3738 = vld [vmem:[%s2980 + $0x12] sm:$0xff]
    %v3739 = vld [vmem:[%s2980 + $0x22] sm:$0xff]
    %v3740 = vld [vmem:[%s2980 + $0x32] sm:$0xff]
    %v3741 = vld [vmem:[%s2980 + $0x42] sm:$0xff]
    %v3742 = vld [vmem:[%s2980 + $0x52] sm:$0xff]
    %v3743 = vld [vmem:[%s2980 + $0x62] sm:$0xff]
    %v3744 = vld [vmem:[%s2980 + $0x72] sm:$0xff]
    %v3745 = vld [vmem:[%s2980 + $0xa2] sm:$0xff]
    %v3746 = vld [vmem:[%s2980 + $0xb2] sm:$0xff]
    %v3747 = vld [vmem:[%s2980 + $0xc2] sm:$0xff]
    %v3748 = vld [vmem:[%s2980 + $0xd2] sm:$0xff]
    %v3749 = vld [vmem:[%s2980 + $0xe2] sm:$0xff]
    %v3750 = vld [vmem:[%s2980 + $0xf2] sm:$0xff]
    %v3751 = vld [vmem:[%s2980 + $0x102] sm:$0xff]
    %v3752 = vld [vmem:[%s2980 + $0x112] sm:$0xff]
    %3769 = vrot.lane.b32.xlu0 %v3737, 64
    %v3770 = vpop.permute.xlu0 %3769
    %3771 = vrot.lane.b32.xlu0 %v3738, 64
    %v3772 = vpop.permute.xlu0 %3771
    %3773 = vrot.lane.b32.xlu0 %v3739, 64
    %v3774 = vpop.permute.xlu0 %3773
    %3775 = vrot.lane.b32.xlu0 %v3740, 64
    %v3776 = vpop.permute.xlu0 %3775
    %3777 = vrot.lane.b32.xlu0 %v3741, 64
    %v3778 = vpop.permute.xlu0 %3777
    %3779 = vrot.lane.b32.xlu0 %v3742, 64
    %v3780 = vpop.permute.xlu0 %3779
    %3781 = vrot.lane.b32.xlu0 %v3743, 64
    %v3782 = vpop.permute.xlu0 %3781
    %3783 = vrot.lane.b32.xlu0 %v3744, 64
    %v3784 = vpop.permute.xlu0 %3783
    %3785 = vrot.lane.b32.xlu0 %v3745, 64
    %v3786 = vpop.permute.xlu0 %3785
    %3787 = vrot.lane.b32.xlu0 %v3746, 64
    %v3788 = vpop.permute.xlu0 %3787
    %3789 = vrot.lane.b32.xlu0 %v3747, 64
    %v3790 = vpop.permute.xlu0 %3789
    %3791 = vrot.lane.b32.xlu0 %v3748, 64
    %v3792 = vpop.permute.xlu0 %3791
    %3793 = vrot.lane.b32.xlu0 %v3749, 64
    %v3794 = vpop.permute.xlu0 %3793
    %3795 = vrot.lane.b32.xlu0 %v3750, 64
    %v3796 = vpop.permute.xlu0 %3795
    %3797 = vrot.lane.b32.xlu0 %v3751, 64
    %v3798 = vpop.permute.xlu0 %3797
    %3799 = vrot.lane.b32.xlu0 %v3752, 64
    %v3800 = vpop.permute.xlu0 %3799
    %vm3817 = vcmask 589312
    %3818 = vst.msk [vmem:[#allocation5] sm:$0xff] %vm3817, %v3770
    %3819 = vst.msk [vmem:[#allocation5 + $0x8] sm:$0xff] %vm3817, %v3772
    %3820 = vst.msk [vmem:[#allocation5 + $0x10] sm:$0xff] %vm3817, %v3774
    %3821 = vst.msk [vmem:[#allocation5 + $0x18] sm:$0xff] %vm3817, %v3776
    %3822 = vst.msk [vmem:[#allocation5 + $0x20] sm:$0xff] %vm3817, %v3778
    %3823 = vst.msk [vmem:[#allocation5 + $0x28] sm:$0xff] %vm3817, %v3780
    %3824 = vst.msk [vmem:[#allocation5 + $0x30] sm:$0xff] %vm3817, %v3782
    %3825 = vst.msk [vmem:[#allocation5 + $0x38] sm:$0xff] %vm3817, %v3784
    %3826 = vst.msk [vmem:[#allocation5 + $0x40] sm:$0xff] %vm3817, %v3786
    %3827 = vst.msk [vmem:[#allocation5 + $0x48] sm:$0xff] %vm3817, %v3788
    %3828 = vst.msk [vmem:[#allocation5 + $0x50] sm:$0xff] %vm3817, %v3790
    %3829 = vst.msk [vmem:[#allocation5 + $0x58] sm:$0xff] %vm3817, %v3792
    %3830 = vst.msk [vmem:[#allocation5 + $0x60] sm:$0xff] %vm3817, %v3794
    %3831 = vst.msk [vmem:[#allocation5 + $0x68] sm:$0xff] %vm3817, %v3796
    %3832 = vst.msk [vmem:[#allocation5 + $0x70] sm:$0xff] %vm3817, %v3798
    %3833 = vst.msk [vmem:[#allocation5 + $0x78] sm:$0xff] %vm3817, %v3800
    %v3834 = vld [vmem:[#allocation5] sm:$0xff]
    %v3835 = vld [vmem:[#allocation5 + $0x8] sm:$0xff]
    %v3836 = vld [vmem:[#allocation5 + $0x10] sm:$0xff]
    %v3837 = vld [vmem:[#allocation5 + $0x18] sm:$0xff]
    %v3838 = vld [vmem:[#allocation5 + $0x20] sm:$0xff]
    %v3839 = vld [vmem:[#allocation5 + $0x28] sm:$0xff]
    %v3840 = vld [vmem:[#allocation5 + $0x30] sm:$0xff]
    %v3841 = vld [vmem:[#allocation5 + $0x38] sm:$0xff]
    %v3842 = vld [vmem:[#allocation5 + $0x40] sm:$0xff]
    %v3843 = vld [vmem:[#allocation5 + $0x48] sm:$0xff]
    %v3844 = vld [vmem:[#allocation5 + $0x50] sm:$0xff]
    %v3845 = vld [vmem:[#allocation5 + $0x58] sm:$0xff]
    %v3846 = vld [vmem:[#allocation5 + $0x60] sm:$0xff]
    %v3847 = vld [vmem:[#allocation5 + $0x68] sm:$0xff]
    %v3848 = vld [vmem:[#allocation5 + $0x70] sm:$0xff]
    %v3849 = vld [vmem:[#allocation5 + $0x78] sm:$0xff]
    %v3850 = vpack.c.bf16 %v3835, %v3834
    %v3851 = vpack.c.bf16 %v3837, %v3836
    %v3852 = vpack.c.bf16 %v3839, %v3838
    %v3853 = vpack.c.bf16 %v3841, %v3840
    %v3854 = vpack.c.bf16 %v3843, %v3842
    %v3855 = vpack.c.bf16 %v3845, %v3844
    %v3856 = vpack.c.bf16 %v3847, %v3846
    %v3857 = vpack.c.bf16 %v3849, %v3848
    %v3858 = vld [vmem:[%s9] sm:$0xf]
    %v3859 = vld [vmem:[%s9 + $0x4] sm:$0xf]
    %v3860 = vld [vmem:[%s9 + $0x8] sm:$0xf]
    %v3861 = vld [vmem:[%s9 + $0xc] sm:$0xf]
    %v3866 = vunpack.c.l.b16 %v3858
    %v3867 = vunpack.c.l.b16 %v3859
    %v3868 = vunpack.c.l.b16 %v3860
    %v3869 = vunpack.c.l.b16 %v3861
    %v3870 = vpack.c.b16 %v3867, %v3866
    %v3871 = vpack.c.b16 %v3869, %v3868
    %3874 = vmatprep.subr.bf16.mxu0 0
    %3875 = vmatpush1.bf16.msra.mxu0 %v3850
    %3876 = vmatprep.subr.bf16.mxu0 0
    %3877 = vmatpush1.bf16.msra.mxu0 %v3851
    %3878 = vmatprep.subr.bf16.mxu0 0
    %3879 = vmatpush1.bf16.msra.mxu0 %v3852
    %3880 = vmatprep.subr.bf16.mxu0 0
    %3881 = vmatpush1.bf16.msra.mxu0 %v3853
    %3882 = vmatprep.subr.bf16.mxu0 0
    %3883 = vmatpush1.bf16.msra.mxu0 %v3854
    %3884 = vmatprep.subr.bf16.mxu0 0
    %3885 = vmatpush1.bf16.msra.mxu0 %v3855
    %3886 = vmatprep.subr.bf16.mxu0 0
    %3887 = vmatpush1.bf16.msra.mxu0 %v3856
    %3888 = vmatprep.subr.bf16.mxu0 0
    %3889 = vmatpush1.bf16.msra.mxu0 %v3857
    %3890 = vmatprep.subr.bf16.mxu0 0
    %3891 = vmatpush1.bf16.msra.mxu0 0
    %3892 = vmatprep.subr.bf16.mxu0 0
    %3893 = vmatpush1.bf16.msra.mxu0 0
    %3894 = vmatprep.subr.bf16.mxu0 0
    %3895 = vmatpush1.bf16.msra.mxu0 0
    %3896 = vmatprep.subr.bf16.mxu0 0
    %3897 = vmatpush1.bf16.msra.mxu0 0
    %3898 = vmatprep.subr.bf16.mxu0 0
    %3899 = vmatpush1.bf16.msra.mxu0 0
    %3900 = vmatprep.subr.bf16.mxu0 0
    %3901 = vmatpush1.bf16.msra.mxu0 0
    %3902 = vmatprep.subr.bf16.mxu0 0
    %3903 = vmatpush1.bf16.msra.mxu0 0
    %3904 = vmatprep.subr.bf16.mxu0 0
    %3905 = vmatpush1.bf16.msra.mxu0 0
    %3906 = vmatprep.mubr.bf16.mxu0 0
    %3907 = vmatmul.mubr.bf16.gmra.mrb[0].mxu0 %v3870
    %v3908 = vpop.f32.mrb[0].mxu0
    %v3909 = vadd.f32 0.0, %v3908
    %v3910 = vpop.f32.mrb[0].mxu0
    %v3911 = vpop.f32.mrb[0].mxu0
    %v3912 = vadd.f32 0.0, %v3911
    %v3913 = vpop.f32.mrb[0].mxu0
    %3914 = vmatprep.mubr.bf16.mxu0 0
    %3915 = vmatmul.mubr.bf16.gmra.mrb[0].mxu0 %v3871
    %v3916 = vpop.f32.mrb[0].mxu0
    %v3917 = vadd.f32 0.0, %v3916
    %v3918 = vpop.f32.mrb[0].mxu0
    %v3919 = vpop.f32.mrb[0].mxu0
    %v3920 = vadd.f32 0.0, %v3919
    %v3921 = vpop.f32.mrb[0].mxu0
    %3922 = vdwg.mxu0
    %v3923 = vpack.c.bf16 %v3912, %v3909
    %v3924 = vpack.c.bf16 %v3920, %v3917
    %v3925 = vld [vmem:[%s5] sm:$0xf]
    %v3926 = vld [vmem:[%s5 + $0x4] sm:$0xf]
    %v3927 = vld [vmem:[%s5 + $0x8] sm:$0xf]
    %v3928 = vld [vmem:[%s5 + $0xc] sm:$0xf]
    %v3929 = vld [vmem:[%s5 + $0x10] sm:$0xf]
    %v3930 = vld [vmem:[%s5 + $0x14] sm:$0xf]
    %v3931 = vld [vmem:[%s5 + $0x18] sm:$0xf]
    %v3932 = vld [vmem:[%s5 + $0x1c] sm:$0xf]
    %v3933 = vld [vmem:[%s5 + $0x20] sm:$0xf]
    %v3934 = vld [vmem:[%s5 + $0x24] sm:$0xf]
    %v3935 = vld [vmem:[%s5 + $0x28] sm:$0xf]
    %v3936 = vld [vmem:[%s5 + $0x2c] sm:$0xf]
    %v3937 = vld [vmem:[%s5 + $0x30] sm:$0xf]
    %v3938 = vld [vmem:[%s5 + $0x34] sm:$0xf]
    %v3939 = vld [vmem:[%s5 + $0x38] sm:$0xf]
    %v3940 = vld [vmem:[%s5 + $0x3c] sm:$0xf]
    %v3941 = vld [vmem:[%s6] sm:$0x1]
    %v3943 = vlaneseq
    %v3944 = vshrl.u32 %v3943, 7
    %v3945 = vsub.s32 0, %v3944
    %v3946 = vrot.slane %v3941, %v3945
    %v3964 = vunpack.c.l.b16 %v3925
    %v3965 = vunpack.c.l.b16 %v3926
    %v3966 = vunpack.c.l.b16 %v3927
    %v3967 = vunpack.c.l.b16 %v3928
    %v3968 = vunpack.c.l.b16 %v3929
    %v3969 = vunpack.c.l.b16 %v3930
    %v3970 = vunpack.c.l.b16 %v3931
    %v3971 = vunpack.c.l.b16 %v3932
    %v3972 = vunpack.c.l.b16 %v3933
    %v3973 = vunpack.c.l.b16 %v3934
    %v3974 = vunpack.c.l.b16 %v3935
    %v3975 = vunpack.c.l.b16 %v3936
    %v3976 = vunpack.c.l.b16 %v3937
    %v3977 = vunpack.c.l.b16 %v3938
    %v3978 = vunpack.c.l.b16 %v3939
    %v3979 = vunpack.c.l.b16 %v3940
    %v3980 = vpack.c.b16 %v3965, %v3964
    %v3981 = vpack.c.b16 %v3967, %v3966
    %v3982 = vpack.c.b16 %v3969, %v3968
    %v3983 = vpack.c.b16 %v3971, %v3970
    %v3984 = vpack.c.b16 %v3973, %v3972
    %v3985 = vpack.c.b16 %v3975, %v3974
    %v3986 = vpack.c.b16 %v3977, %v3976
    %v3987 = vpack.c.b16 %v3979, %v3978
    %3996 = vmatprep.subr.bf16.mxu0 0
    %3997 = vmatpush1.bf16.msra.mxu0 %v3980
    %3998 = vmatprep.subr.bf16.mxu0 0
    %3999 = vmatpush1.bf16.msra.mxu0 %v3981
    %4000 = vmatprep.subr.bf16.mxu0 0
    %4001 = vmatpush1.bf16.msra.mxu0 %v3982
    %4002 = vmatprep.subr.bf16.mxu0 0
    %4003 = vmatpush1.bf16.msra.mxu0 %v3983
    %4004 = vmatprep.subr.bf16.mxu0 0
    %4005 = vmatpush1.bf16.msra.mxu0 %v3984
    %4006 = vmatprep.subr.bf16.mxu0 0
    %4007 = vmatpush1.bf16.msra.mxu0 %v3985
    %4008 = vmatprep.subr.bf16.mxu0 0
    %4009 = vmatpush1.bf16.msra.mxu0 %v3986
    %4010 = vmatprep.subr.bf16.mxu0 0
    %4011 = vmatpush1.bf16.msra.mxu0 %v3987
    %4012 = vmatprep.subr.bf16.mxu0 0
    %4013 = vmatpush1.bf16.msra.mxu0 0
    %4014 = vmatprep.subr.bf16.mxu0 0
    %4015 = vmatpush1.bf16.msra.mxu0 0
    %4016 = vmatprep.subr.bf16.mxu0 0
    %4017 = vmatpush1.bf16.msra.mxu0 0
    %4018 = vmatprep.subr.bf16.mxu0 0
    %4019 = vmatpush1.bf16.msra.mxu0 0
    %4020 = vmatprep.subr.bf16.mxu0 0
    %4021 = vmatpush1.bf16.msra.mxu0 0
    %4022 = vmatprep.subr.bf16.mxu0 0
    %4023 = vmatpush1.bf16.msra.mxu0 0
    %4024 = vmatprep.subr.bf16.mxu0 0
    %4025 = vmatpush1.bf16.msra.mxu0 0
    %4026 = vmatprep.subr.bf16.mxu0 0
    %4027 = vmatpush1.bf16.msra.mxu0 0
    %4028 = vmatprep.mubr.bf16.mxu0 0
    %4029 = vmatmul.mubr.bf16.gmra.mrb[0].mxu0 %v3923
    %v4030 = vpop.f32.mrb[0].mxu0
    %v4031 = vadd.f32 %v3946, %v4030
    %v4032 = vpop.f32.mrb[0].mxu0
    %v4033 = vpop.f32.mrb[0].mxu0
    %v4034 = vadd.f32 %v3946, %v4033
    %v4035 = vpop.f32.mrb[0].mxu0
    %4036 = vmatprep.mubr.bf16.mxu0 0
    %4037 = vmatmul.mubr.bf16.gmra.mrb[0].mxu0 %v3924
    %v4038 = vpop.f32.mrb[0].mxu0
    %v4039 = vadd.f32 %v3946, %v4038
    %v4040 = vpop.f32.mrb[0].mxu0
    %v4041 = vpop.f32.mrb[0].mxu0
    %v4042 = vadd.f32 %v3946, %v4041
    %v4043 = vpop.f32.mrb[0].mxu0
    %4044 = vdwg.mxu0
    %v4045 = vld [vmem:[%s7] sm:$0x1]
    %v4046 = vld [vmem:[%s8] sm:$0x1]
    %v4047 = vadd.f32 %v4031, %v4034
    %v4048 = vadd.f32 %v4047, %v4039
    %v4049 = vadd.f32 %v4048, %v4042
    %v4050 = vrot.slane %v4049, 4
    %v4051 = vadd.f32 %v4049, %v4050
    %v4052 = vrot.slane %v4051, 2
    %v4053 = vadd.f32 %v4051, %v4052
    %v4054 = vrot.slane %v4053, 1
    %v4055 = vadd.f32 %v4053, %v4054
    %v4056 = vrcp.pop 32.0
    %v4057 = vmul.f32 %v4055, %v4056
    %v4058 = vsub.f32 %v4031, %v4057
    %v4059 = vsub.f32 %v4034, %v4057
    %v4060 = vsub.f32 %v4039, %v4057
    %v4061 = vsub.f32 %v4042, %v4057
    %v4062 = vmul.f32 %v4058, %v4058
    %v4063 = vmul.f32 %v4059, %v4059
    %v4064 = vmul.f32 %v4060, %v4060
    %v4065 = vmul.f32 %v4061, %v4061
    %v4066 = vadd.f32 %v4062, %v4063
    %v4067 = vadd.f32 %v4066, %v4064
    %v4068 = vadd.f32 %v4067, %v4065
    %v4069 = vrot.slane %v4068, 4
    %v4070 = vadd.f32 %v4068, %v4069
    %v4071 = vrot.slane %v4070, 2
    %v4072 = vadd.f32 %v4070, %v4071
    %v4073 = vrot.slane %v4072, 1
    %v4074 = vadd.f32 %v4072, %v4073
    %v4075 = vmul.f32 %v4074, %v4056
    %v4076 = vadd.f32 %v4075, 1e-05
    %v4077 = vrsqrt.pop %v4076
    %v4078 = vmul.f32 %v4058, %v4077
    %v4079 = vmul.f32 %v4059, %v4077
    %v4080 = vmul.f32 %v4060, %v4077
    %v4081 = vmul.f32 %v4061, %v4077
    %v4083 = vlaneseq
    %v4084 = vshrl.u32 %v4083, 7
    %v4085 = vsub.s32 0, %v4084
    %v4086 = vrot.slane %v4045, %v4085
    %v4088 = vmul.f32 %v4086, %v4078
    %v4089 = vmul.f32 %v4086, %v4079
    %v4090 = vmul.f32 %v4086, %v4080
    %v4091 = vmul.f32 %v4086, %v4081
    %v4093 = vlaneseq
    %v4094 = vshrl.u32 %v4093, 7
    %v4095 = vsub.s32 0, %v4094
    %v4096 = vrot.slane %v4046, %v4095
    %v4098 = vadd.f32 %v4088, %v4096
    %v4099 = vadd.f32 %v4089, %v4096
    %v4100 = vadd.f32 %v4090, %v4096
    %v4101 = vadd.f32 %v4091, %v4096
    %vm4102 = vcmp.gt.f32.partialorder %v4098, 0.0
    %vm4103 = vcmp.gt.f32.partialorder %v4099, 0.0
    %vm4104 = vcmp.gt.f32.partialorder %v4100, 0.0
    %vm4105 = vcmp.gt.f32.partialorder %v4101, 0.0
    %v4106 = vmin.f32 %v4098, 0.0
    %v4107 = vmin.f32 %v4099, 0.0
    %v4108 = vmin.f32 %v4100, 0.0
    %v4109 = vmin.f32 %v4101, 0.0
    %v4110 = vmul.f32 %v4106, 1.442695
    %v4111 = vpow.pop %v4110
    %v4112 = vmul.f32 %v4107, 1.442695
    %v4113 = vpow.pop %v4112
    %v4114 = vmul.f32 %v4108, 1.442695
    %v4115 = vpow.pop %v4114
    %v4116 = vmul.f32 %v4109, 1.442695
    %v4117 = vpow.pop %v4116
    %v4118 = vsub.f32 %v4111, 1.0
    %v4119 = vsub.f32 %v4113, 1.0
    %v4120 = vsub.f32 %v4115, 1.0
    %v4121 = vsub.f32 %v4117, 1.0
    %v4122 = vsel %vm4102, %v4098, %v4118
    %v4123 = vsel %vm4103, %v4099, %v4119
    %v4124 = vsel %vm4104, %v4100, %v4120
    %v4125 = vsel %vm4105, %v4101, %v4121
    %v4126 = vld [vmem:[%s10] sm:$0xff]
    %v4127 = vld [vmem:[%s10 + $0x8] sm:$0xff]
    %v4128 = vld [vmem:[%s10 + $0x10] sm:$0xff]
    %v4129 = vld [vmem:[%s10 + $0x18] sm:$0xff]
    %v4130 = vmul.f32 %v4122, %v4126
    %v4131 = vmul.f32 %v4123, %v4127
    %v4132 = vmul.f32 %v4124, %v4128
    %v4133 = vmul.f32 %v4125, %v4129
    %4134 = vadd.xlane.f32.xlu0 %v4130
    %v4135 = vpop.xlane.xlu0 %4134
    %4136 = vadd.xlane.f32.xlu0 %v4131
    %v4137 = vpop.xlane.xlu0 %4136
    %4138 = vadd.xlane.f32.xlu0 %v4132
    %v4139 = vpop.xlane.xlu0 %4138
    %4140 = vadd.xlane.f32.xlu0 %v4133
    %v4141 = vpop.xlane.xlu0 %4140
    %v4142 = vadd.f32 %v4135, %v4137
    %v4143 = vrot.slane %v4142, 4
    %v4144 = vadd.f32 %v4142, %v4143
    %v4145 = vrot.slane %v4144, 2
    %v4146 = vadd.f32 %v4144, %v4145
    %v4147 = vrot.slane %v4146, 1
    %v4148 = vadd.f32 %v4146, %v4147
    %v4149 = vld [vmem:[#allocation6] sm:$0x1]
    %v4150 = vadd.f32 %v4148, %v4149
    %v4151 = vsub.f32 0.0, %v4150
    %v4152 = vmul.f32 %v4151, 1.442695
    %v4153 = vpow.pop %v4152
    %v4154 = vadd.f32 %v4153, 1.0
    %v4155 = vrcp.pop %v4154
    %v4156 = vmul.f32 1.0, %v4155
    %v4157 = vadd.f32 %v4156, 0.0
    %v4158 = vadd.f32 %v4139, %v4141
    %v4159 = vrot.slane %v4158, 4
    %v4160 = vadd.f32 %v4158, %v4159
    %v4161 = vrot.slane %v4160, 2
    %v4162 = vadd.f32 %v4160, %v4161
    %v4163 = vrot.slane %v4162, 1
    %v4164 = vadd.f32 %v4162, %v4163
    %v4165 = vadd.f32 %v4164, %v4149
    %v4166 = vsub.f32 0.0, %v4165
    %v4167 = vmul.f32 %v4166, 1.442695
    %v4168 = vpow.pop %v4167
    %v4169 = vadd.f32 %v4168, 1.0
    %v4170 = vrcp.pop %v4169
    %v4171 = vmul.f32 1.0, %v4170
    %v4172 = vadd.f32 %v4157, %v4171
    %v4173 = vmul.f32 %v4172, 0.5
    %vm4174 = vcmask 0
    %4175 = vst.msk [vmem:[#allocation7] sm:$0x1] %vm4174, %v4173
    // Predicated region
    $region50: #{forward.1} parent=1 // pred_check
      _
    $region51: #{forward.1} parent=1 // pred_check_branch
      %4177 = sbr.rel (0) target = $region53
    $region52: #{forward.1} parent=1 // pred_region
      %s4179 = ssub.s32 16, 16
      %4180 = vsyncadd [#allocation8], %s4179
      %s4182 = sshll.u32 [#allocation7], 4
      %s4183 = int_to_ptr.vmem [resolvable:$true] %s4182
      %4185 = dma.vmem_to_hbm [thread:$0]  %s4183, 16, %s12, [#allocation8]
    $region53: #{forward.1} parent=1 // pred_fallthru
      _
    // Predicated region
    $region54: #{forward.1} parent=1 // pred_check
      _
    $region55: #{forward.1} parent=1 // pred_check_branch
      %4187 = sbr.rel (0) target = $region57
    $region56: #{forward.1} parent=1 // pred_region
      %4188 = dma.done [#allocation8], 16
    $region57: #{forward.1} parent=1 // pred_fallthru
      _
    %4189 = vsyncpa [#allocation8], 1

</llo_original>
